<compile_context>
chip_gen: v6e
topology: v6e:2x2x1
jax: 0.10.0
libtpu: 0.0.40
codegen_flags: <defaults>
</compile_context>

<pallas_src>
import math

import jax
import jax.numpy as jnp
from jax.experimental import pallas as pl
from jax.experimental.pallas import tpu as pltpu  # noqa: F401  (kept for scaling path)

# ----------------------------- config (small, synthetic) ---------------------
N = 8            # number of tokens (rows of hidden_states)
H = 32           # config.hidden_size
NH = 4           # config.transformer['num_heads']
HD = H // NH     # attention_head_size
MLP = 64         # config.transformer['mlp_dim']
NL = 2           # config.transformer['num_layers']
LATENT = 16      # config.latent_size  (fc: H -> 2*LATENT)
EPS = 1e-6

# 128-aligned lane offsets inside the packed per-layer weight slab
QKV_OFF = 0        # (H, 3H)  = (32, 96)
OW_OFF = 128       # (H, H)   = (32, 32)
F1W_OFF = 256      # (H, MLP) = (32, 64)
W_IN_W = 384       # total lane width of the packed input-side weight slab

OUT_W = H + 2 * LATENT   # concatenated (encoded | latent) output width


# ----------------------------- in-kernel helpers -----------------------------
def _layernorm(x, gamma, beta):
    # PyTorch LayerNorm: biased variance, eps inside sqrt.
    mu = jnp.mean(x, axis=-1, keepdims=True)
    var = jnp.mean(jnp.square(x - mu), axis=-1, keepdims=True)
    return (x - mu) * jax.lax.rsqrt(var + EPS) * gamma + beta


def _gelu_exact(x):
    # torch.nn.functional.gelu default = exact (erf-based) gelu
    return 0.5 * x * (1.0 + jax.lax.erf(x * (1.0 / math.sqrt(2.0))))


# ----------------------------- fused encoder kernel --------------------------
def encoder_kernel(x_ref, win_ref, f2w_ref, bvec_ref, hw_ref, hv_ref, out_ref):
    """Single invocation (no grid): everything resident in VMEM.

    win_ref : (NL, H, 384)  packed [qkv_w | pad | out_w | pad | fc1_w | pad]
    f2w_ref : (NL, MLP, H)  fc2 weight
    bvec_ref: (NL, 8, 128)  rows = [an_g, an_b, qkv_b, out_b, fn_g, fn_b, f1b, f2b]
    hw_ref  : (H, 2*LATENT) fc weight
    hv_ref  : (8, 128)      rows = [enc_g, enc_b, fc_b, ...]
    """
    x = x_ref[...].astype(jnp.float32)

    # Statically unrolled layer loop (NL=2).  For larger NL, switch to
    # lax.fori_loop(0, NL, body, x, unroll=True) or the grid form.
    for l in range(NL):
        win = win_ref[l]          # (H, 384)
        bv = bvec_ref[l]          # (8, 128)

        an_g = bv[0:1, 0:H]
        an_b = bv[1:2, 0:H]
        qkv_b = bv[2:3, 0:3 * H]
        ob = bv[3:4, 0:H]
        fn_g = bv[4:5, 0:H]
        fn_b = bv[5:6, 0:H]
        f1b = bv[6:7, 0:MLP]
        f2b = bv[7:8, 0:H]

        # ---------------- attention branch ----------------
        h = x
        xn = _layernorm(x, an_g, an_b)

        # Fused QKV: one MXU pass over the (H, 3H) weight slice (lane offset 0).
        qkv = jnp.dot(xn, win[:, QKV_OFF:QKV_OFF + 3 * H],
                      preferred_element_type=jnp.float32) + qkv_b
        q = qkv[:, 0 * H:1 * H]
        k = qkv[:, 1 * H:2 * H]
        v = qkv[:, 2 * H:3 * H]

        # transpose_for_scores: view(N, NH, HD) then permute(0,2,1) -> [N, HD, NH]
        q3 = q.reshape(N, NH, HD)
        k3 = k.reshape(N, NH, HD)
        v3 = v.reshape(N, NH, HD)

        # scores[n, d1, d2] = sum_h q3[n, h, d1] * k3[n, h, d2]
        # (1/sqrt(HD) already folded into the Q weights/bias at init)
        scores = jnp.einsum('nhd,nhe->nde', q3, k3,
                            preferred_element_type=jnp.float32)

        # numerically-stable softmax over the last axis (exact divide)
        m = jnp.max(scores, axis=-1, keepdims=True)
        e = jnp.exp(scores - m)
        probs = e / jnp.sum(e, axis=-1, keepdims=True)

        # context_layer.permute(0,2,1).view(N, H)
        ctx = jnp.einsum('nde,nhe->nhd', probs, v3,
                         preferred_element_type=jnp.float32)
        ctx = ctx.reshape(N, H)

        attn_out = jnp.dot(ctx, win[:, OW_OFF:OW_OFF + H],
                           preferred_element_type=jnp.float32) + ob
        x = attn_out + h      # residual (attn_dropout / proj_dropout identity)

        # ---------------- MLP branch ----------------
        h = x
        xn = _layernorm(x, fn_g, fn_b)
        y = jnp.dot(xn, win[:, F1W_OFF:F1W_OFF + MLP],
                    preferred_element_type=jnp.float32) + f1b
        y = _gelu_exact(y)
        y = jnp.dot(y, f2w_ref[l], preferred_element_type=jnp.float32) + f2b
        x = y + h             # residual (dropout identity)

    # ---------------- head epilogue: encoder_norm + fc ----------------
    eg = hv_ref[0:1, 0:H]
    eb = hv_ref[1:2, 0:H]
    fb = hv_ref[2:3, 0:2 * LATENT]
    enc = _layernorm(x, eg, eb)
    lat = jnp.dot(enc, hw_ref[...], preferred_element_type=jnp.float32) + fb
    # single lane-denser (N, H + 2*LATENT) store; split in the wrapper
    out_ref[...] = jnp.concatenate([enc, lat], axis=-1).astype(out_ref.dtype)


# ----------------------------- wrapper ---------------------------------------
def encoder_forward(hidden_states, params):
    w_in, f2w, bvec, head_w, head_vec = params
    out = pl.pallas_call(
        encoder_kernel,
        out_shape=jax.ShapeDtypeStruct((N, OUT_W), jnp.float32),
        # No grid: single invocation, whole-array VMEM blocks (defaults).
    )(hidden_states, w_in, f2w, bvec, head_w, head_vec)
    return out[:, :H], out[:, H:]


@jax.jit
def transformer_encoder(hidden_states, params):
    return encoder_forward(hidden_states, params)


# ----------------------------- deterministic parameter init ------------------
def _xavier_uniform(key, shape):
    fan_in, fan_out = shape
    limit = math.sqrt(6.0 / (fan_in + fan_out))
    return jax.random.uniform(key, shape, jnp.float32, -limit, limit)


def init_params(key):
    keys = jax.random.split(key, NL + 1)
    scale = 1.0 / math.sqrt(HD)   # folded into Q weights/bias

    w_in_l, f2w_l, bv_l = [], [], []
    for i in range(NL):
        ks = jax.random.split(keys[i], 12)
        # Linear weights stored as [in, out] (torch stores [out, in]; fwd is x @ W.T + b)
        qw = _xavier_uniform(ks[0], (H, H)) * scale
        qb = 0.01 * jax.random.normal(ks[1], (H,), jnp.float32) * scale
        kw = _xavier_uniform(ks[2], (H, H))
        kb = 0.01 * jax.random.normal(ks[3], (H,), jnp.float32)
        vw = _xavier_uniform(ks[4], (H, H))
        vb = 0.01 * jax.random.normal(ks[5], (H,), jnp.float32)
        ow = _xavier_uniform(ks[6], (H, H))
        ob = 0.01 * jax.random.normal(ks[7], (H,), jnp.float32)
        f1w = _xavier_uniform(ks[8], (H, MLP))
        f1b = 1e-6 * jax.random.normal(ks[9], (MLP,), jnp.float32)
        f2w = _xavier_uniform(ks[10], (MLP, H))
        f2b = 1e-6 * jax.random.normal(ks[11], (H,), jnp.float32)

        # Packed input-side weight slab (H, 384), 128-aligned lane offsets.
        w_in = jnp.zeros((H, W_IN_W), jnp.float32)
        w_in = w_in.at[:, QKV_OFF:QKV_OFF + 3 * H].set(
            jnp.concatenate([qw, kw, vw], axis=1))
        w_in = w_in.at[:, OW_OFF:OW_OFF + H].set(ow)
        w_in = w_in.at[:, F1W_OFF:F1W_OFF + MLP].set(f1w)

        # Packed bias/norm slab (8, 128): one vector per row.
        bv = jnp.zeros((8, 128), jnp.float32)
        bv = bv.at[0, 0:H].set(jnp.ones((H,), jnp.float32))        # attention_norm gamma
        # row 1: attention_norm beta = 0
        bv = bv.at[2, 0:3 * H].set(jnp.concatenate([qb, kb, vb]))  # fused qkv bias
        bv = bv.at[3, 0:H].set(ob)
        bv = bv.at[4, 0:H].set(jnp.ones((H,), jnp.float32))        # ffn_norm gamma
        # row 5: ffn_norm beta = 0
        bv = bv.at[6, 0:MLP].set(f1b)
        bv = bv.at[7, 0:H].set(f2b)

        w_in_l.append(w_in)
        f2w_l.append(f2w)
        bv_l.append(bv)

    k0, k1 = jax.random.split(keys[NL])
    head_w = _xavier_uniform(k0, (H, 2 * LATENT))                  # fc weight
    fc_b = 0.01 * jax.random.normal(k1, (2 * LATENT,), jnp.float32)
    head_vec = jnp.zeros((8, 128), jnp.float32)
    head_vec = head_vec.at[0, 0:H].set(jnp.ones((H,), jnp.float32))  # encoder_norm gamma
    # row 1: encoder_norm beta = 0
    head_vec = head_vec.at[2, 0:2 * LATENT].set(fc_b)                # fc bias

    return (jnp.stack(w_in_l, axis=0),    # (NL, H, 384)
            jnp.stack(f2w_l, axis=0),     # (NL, MLP, H)
            jnp.stack(bv_l, axis=0),      # (NL, 8, 128)
            head_w,                       # (H, 2*LATENT)
            head_vec)                     # (8, 128)


# ----------------------------- main -------------------------------------------
if __name__ == "__main__":
    key = jax.random.PRNGKey(0)
    kx, kp = jax.random.split(key)
    hidden_states = jax.random.normal(kx, (N, H), jnp.float32)

    params = init_params(kp)

    encoded, latent = transformer_encoder(hidden_states, params)
    jax.block_until_ready((encoded, latent))

    assert encoded.shape == (N, H)
    assert latent.shape == (N, 2 * LATENT)
    assert bool(jnp.all(jnp.isfinite(encoded))) and bool(jnp.all(jnp.isfinite(latent)))
    print("KERNEL_OK")
</pallas_src>

<mosaic_0001>
module attributes {stable_mosaic.version = 11 : i64} {
  func.func @encoder_kernel(%arg0: memref<8x32xf32, #tpu.memory_space<vmem>>, %arg1: memref<2x32x384xf32, #tpu.memory_space<vmem>>, %arg2: memref<2x64x32xf32, #tpu.memory_space<vmem>>, %arg3: memref<2x8x128xf32, #tpu.memory_space<vmem>>, %arg4: memref<32x32xf32, #tpu.memory_space<vmem>>, %arg5: memref<8x128xf32, #tpu.memory_space<vmem>>, %arg6: memref<8x64xf32, #tpu.memory_space<vmem>>) attributes {dimension_semantics = [], scalar_prefetch = 0 : i64, scratch_operands = 0 : i64, tpu.core_type = #tpu.core_type<tc>} {
    %c0 = arith.constant 0 : index
    %c0_0 = arith.constant 0 : index
    %0 = vector.load %arg0[%c0, %c0_0] : memref<8x32xf32, #tpu.memory_space<vmem>>, vector<8x32xf32>
    %c0_1 = arith.constant 0 : index
    %c0_2 = arith.constant 0 : index
    %c0_3 = arith.constant 0 : index
    %1 = vector.load %arg1[%c0_1, %c0_2, %c0_3] : memref<2x32x384xf32, #tpu.memory_space<vmem>>, vector<1x32x384xf32>
    %2 = vector.shape_cast %1 : vector<1x32x384xf32> to vector<32x384xf32>
    %c0_4 = arith.constant 0 : index
    %c0_5 = arith.constant 0 : index
    %c0_6 = arith.constant 0 : index
    %3 = vector.load %arg3[%c0_4, %c0_5, %c0_6] : memref<2x8x128xf32, #tpu.memory_space<vmem>>, vector<1x8x128xf32>
    %4 = vector.shape_cast %3 : vector<1x8x128xf32> to vector<8x128xf32>
    %5 = vector.extract_strided_slice %4 {offsets = [0, 0], sizes = [1, 32], strides = [1, 1]} : vector<8x128xf32> to vector<1x32xf32>
    %6 = vector.extract_strided_slice %4 {offsets = [1, 0], sizes = [1, 32], strides = [1, 1]} : vector<8x128xf32> to vector<1x32xf32>
    %7 = vector.extract_strided_slice %4 {offsets = [2, 0], sizes = [1, 96], strides = [1, 1]} : vector<8x128xf32> to vector<1x96xf32>
    %8 = vector.extract_strided_slice %4 {offsets = [3, 0], sizes = [1, 32], strides = [1, 1]} : vector<8x128xf32> to vector<1x32xf32>
    %9 = vector.extract_strided_slice %4 {offsets = [4, 0], sizes = [1, 32], strides = [1, 1]} : vector<8x128xf32> to vector<1x32xf32>
    %10 = vector.extract_strided_slice %4 {offsets = [5, 0], sizes = [1, 32], strides = [1, 1]} : vector<8x128xf32> to vector<1x32xf32>
    %11 = vector.extract_strided_slice %4 {offsets = [6, 0], sizes = [1, 64], strides = [1, 1]} : vector<8x128xf32> to vector<1x64xf32>
    %12 = vector.extract_strided_slice %4 {offsets = [7, 0], sizes = [1, 32], strides = [1, 1]} : vector<8x128xf32> to vector<1x32xf32>
    %cst = arith.constant dense<0.000000e+00> : vector<8xf32>
    %13 = vector.multi_reduction <add>, %0, %cst [1] : vector<8x32xf32> to vector<8xf32>
    %14 = vector.shape_cast %13 : vector<8xf32> to vector<8x1xf32>
    %cst_7 = arith.constant 3.200000e+01 : f32
    %15 = vector.broadcast %cst_7 : f32 to vector<8x1xf32>
    %16 = arith.divf %14, %15 : vector<8x1xf32>
    %17 = vector.broadcast %16 : vector<8x1xf32> to vector<8x32xf32>
    %18 = arith.subf %0, %17 : vector<8x32xf32>
    %19 = arith.mulf %18, %18 : vector<8x32xf32>
    %cst_8 = arith.constant dense<0.000000e+00> : vector<8xf32>
    %20 = vector.multi_reduction <add>, %19, %cst_8 [1] : vector<8x32xf32> to vector<8xf32>
    %21 = vector.shape_cast %20 : vector<8xf32> to vector<8x1xf32>
    %cst_9 = arith.constant 3.200000e+01 : f32
    %22 = vector.broadcast %cst_9 : f32 to vector<8x1xf32>
    %23 = arith.divf %21, %22 : vector<8x1xf32>
    %24 = vector.broadcast %16 : vector<8x1xf32> to vector<8x32xf32>
    %25 = arith.subf %0, %24 : vector<8x32xf32>
    %cst_10 = arith.constant 9.99999997E-7 : f32
    %26 = vector.broadcast %cst_10 : f32 to vector<8x1xf32>
    %27 = arith.addf %23, %26 : vector<8x1xf32>
    %28 = math.rsqrt %27 : vector<8x1xf32>
    %29 = vector.broadcast %28 : vector<8x1xf32> to vector<8x32xf32>
    %30 = arith.mulf %25, %29 : vector<8x32xf32>
    %31 = vector.broadcast %5 : vector<1x32xf32> to vector<8x32xf32>
    %32 = arith.mulf %30, %31 : vector<8x32xf32>
    %33 = vector.broadcast %6 : vector<1x32xf32> to vector<8x32xf32>
    %34 = arith.addf %32, %33 : vector<8x32xf32>
    %35 = vector.extract_strided_slice %2 {offsets = [0, 0], sizes = [32, 96], strides = [1, 1]} : vector<32x384xf32> to vector<32x96xf32>
    %cst_11 = arith.constant dense<0.000000e+00> : vector<8x96xf32>
    %36 = tpu.matmul %34, %35, %cst_11 {dimension_numbers = #tpu.dot_dimension_numbers<[1], [0], [0], [1], [0, 0, 1, 1], [], []>} : vector<8x32xf32>, vector<32x96xf32>, vector<8x96xf32> -> vector<8x96xf32>
    %37 = vector.broadcast %7 : vector<1x96xf32> to vector<8x96xf32>
    %38 = arith.addf %36, %37 : vector<8x96xf32>
    %39 = vector.extract_strided_slice %38 {offsets = [0, 0], sizes = [8, 32], strides = [1, 1]} : vector<8x96xf32> to vector<8x32xf32>
    %40 = vector.extract_strided_slice %38 {offsets = [0, 32], sizes = [8, 32], strides = [1, 1]} : vector<8x96xf32> to vector<8x32xf32>
    %41 = vector.extract_strided_slice %38 {offsets = [0, 64], sizes = [8, 32], strides = [1, 1]} : vector<8x96xf32> to vector<8x32xf32>
    %42 = vector.shape_cast %39 : vector<8x32xf32> to vector<8x4x8xf32>
    %43 = vector.shape_cast %40 : vector<8x32xf32> to vector<8x4x8xf32>
    %44 = vector.shape_cast %41 : vector<8x32xf32> to vector<8x4x8xf32>
    "tpu.trace_start"() <{level = 10 : i32, message = "nhd,nhe->nde"}> : () -> ()
    %cst_12 = arith.constant dense<0.000000e+00> : vector<8x8x8xf32>
    %45 = tpu.matmul %42, %43, %cst_12 {dimension_numbers = #tpu.dot_dimension_numbers<[1], [1], [2], [2], [0, 0, 0, 2, 1, 2], [0], [0]>} : vector<8x4x8xf32>, vector<8x4x8xf32>, vector<8x8x8xf32> -> vector<8x8x8xf32>
    "tpu.trace_stop"() : () -> ()
    %cst_13 = arith.constant dense<0xFF800000> : vector<8x8xf32>
    %46 = vector.multi_reduction <maximumf>, %45, %cst_13 [2] : vector<8x8x8xf32> to vector<8x8xf32>
    %47 = vector.shape_cast %46 : vector<8x8xf32> to vector<8x8x1xf32>
    %48 = vector.broadcast %47 : vector<8x8x1xf32> to vector<8x8x8xf32>
    %49 = arith.subf %45, %48 : vector<8x8x8xf32>
    %50 = math.exp %49 : vector<8x8x8xf32>
    %cst_14 = arith.constant dense<0.000000e+00> : vector<8x8xf32>
    %51 = vector.multi_reduction <add>, %50, %cst_14 [2] : vector<8x8x8xf32> to vector<8x8xf32>
    %52 = vector.shape_cast %51 : vector<8x8xf32> to vector<8x8x1xf32>
    %53 = vector.broadcast %52 : vector<8x8x1xf32> to vector<8x8x8xf32>
    %54 = arith.divf %50, %53 : vector<8x8x8xf32>
    "tpu.trace_start"() <{level = 10 : i32, message = "nde,nhe->nhd"}> : () -> ()
    %cst_15 = arith.constant dense<0.000000e+00> : vector<8x4x8xf32>
    %55 = tpu.matmul %44, %54, %cst_15 {dimension_numbers = #tpu.dot_dimension_numbers<[2], [2], [1], [1], [0, 0, 0, 1, 1, 1], [0], [0]>} : vector<8x4x8xf32>, vector<8x8x8xf32>, vector<8x4x8xf32> -> vector<8x4x8xf32>
    "tpu.trace_stop"() : () -> ()
    %56 = vector.shape_cast %55 : vector<8x4x8xf32> to vector<8x32xf32>
    %57 = vector.extract_strided_slice %2 {offsets = [0, 128], sizes = [32, 32], strides = [1, 1]} : vector<32x384xf32> to vector<32x32xf32>
    %cst_16 = arith.constant dense<0.000000e+00> : vector<8x32xf32>
    %58 = tpu.matmul %56, %57, %cst_16 {dimension_numbers = #tpu.dot_dimension_numbers<[1], [0], [0], [1], [0, 0, 1, 1], [], []>} : vector<8x32xf32>, vector<32x32xf32>, vector<8x32xf32> -> vector<8x32xf32>
    %59 = vector.broadcast %8 : vector<1x32xf32> to vector<8x32xf32>
    %60 = arith.addf %58, %59 : vector<8x32xf32>
    %61 = arith.addf %60, %0 : vector<8x32xf32>
    %cst_17 = arith.constant dense<0.000000e+00> : vector<8xf32>
    %62 = vector.multi_reduction <add>, %61, %cst_17 [1] : vector<8x32xf32> to vector<8xf32>
    %63 = vector.shape_cast %62 : vector<8xf32> to vector<8x1xf32>
    %cst_18 = arith.constant 3.200000e+01 : f32
    %64 = vector.broadcast %cst_18 : f32 to vector<8x1xf32>
    %65 = arith.divf %63, %64 : vector<8x1xf32>
    %66 = vector.broadcast %65 : vector<8x1xf32> to vector<8x32xf32>
    %67 = arith.subf %61, %66 : vector<8x32xf32>
    %68 = arith.mulf %67, %67 : vector<8x32xf32>
    %cst_19 = arith.constant dense<0.000000e+00> : vector<8xf32>
    %69 = vector.multi_reduction <add>, %68, %cst_19 [1] : vector<8x32xf32> to vector<8xf32>
    %70 = vector.shape_cast %69 : vector<8xf32> to vector<8x1xf32>
    %cst_20 = arith.constant 3.200000e+01 : f32
    %71 = vector.broadcast %cst_20 : f32 to vector<8x1xf32>
    %72 = arith.divf %70, %71 : vector<8x1xf32>
    %73 = vector.broadcast %65 : vector<8x1xf32> to vector<8x32xf32>
    %74 = arith.subf %61, %73 : vector<8x32xf32>
    %cst_21 = arith.constant 9.99999997E-7 : f32
    %75 = vector.broadcast %cst_21 : f32 to vector<8x1xf32>
    %76 = arith.addf %72, %75 : vector<8x1xf32>
    %77 = math.rsqrt %76 : vector<8x1xf32>
    %78 = vector.broadcast %77 : vector<8x1xf32> to vector<8x32xf32>
    %79 = arith.mulf %74, %78 : vector<8x32xf32>
    %80 = vector.broadcast %9 : vector<1x32xf32> to vector<8x32xf32>
    %81 = arith.mulf %79, %80 : vector<8x32xf32>
    %82 = vector.broadcast %10 : vector<1x32xf32> to vector<8x32xf32>
    %83 = arith.addf %81, %82 : vector<8x32xf32>
    %84 = vector.extract_strided_slice %2 {offsets = [0, 256], sizes = [32, 64], strides = [1, 1]} : vector<32x384xf32> to vector<32x64xf32>
    %cst_22 = arith.constant dense<0.000000e+00> : vector<8x64xf32>
    %85 = tpu.matmul %83, %84, %cst_22 {dimension_numbers = #tpu.dot_dimension_numbers<[1], [0], [0], [1], [0, 0, 1, 1], [], []>} : vector<8x32xf32>, vector<32x64xf32>, vector<8x64xf32> -> vector<8x64xf32>
    %86 = vector.broadcast %11 : vector<1x64xf32> to vector<8x64xf32>
    %87 = arith.addf %85, %86 : vector<8x64xf32>
    %cst_23 = arith.constant 5.000000e-01 : f32
    %88 = vector.broadcast %cst_23 : f32 to vector<8x64xf32>
    %89 = arith.mulf %88, %87 : vector<8x64xf32>
    %cst_24 = arith.constant 0.707106769 : f32
    %90 = vector.broadcast %cst_24 : f32 to vector<8x64xf32>
    %91 = arith.mulf %87, %90 : vector<8x64xf32>
    %92 = math.erf %91 : vector<8x64xf32>
    %cst_25 = arith.constant 1.000000e+00 : f32
    %93 = vector.broadcast %cst_25 : f32 to vector<8x64xf32>
    %94 = arith.addf %93, %92 : vector<8x64xf32>
    %95 = arith.mulf %89, %94 : vector<8x64xf32>
    %c0_26 = arith.constant 0 : index
    %c0_27 = arith.constant 0 : index
    %c0_28 = arith.constant 0 : index
    %96 = vector.load %arg2[%c0_26, %c0_27, %c0_28] : memref<2x64x32xf32, #tpu.memory_space<vmem>>, vector<1x64x32xf32>
    %97 = vector.shape_cast %96 : vector<1x64x32xf32> to vector<64x32xf32>
    %cst_29 = arith.constant dense<0.000000e+00> : vector<8x32xf32>
    %98 = tpu.matmul %95, %97, %cst_29 {dimension_numbers = #tpu.dot_dimension_numbers<[1], [0], [0], [1], [0, 0, 1, 1], [], []>} : vector<8x64xf32>, vector<64x32xf32>, vector<8x32xf32> -> vector<8x32xf32>
    %99 = vector.broadcast %12 : vector<1x32xf32> to vector<8x32xf32>
    %100 = arith.addf %98, %99 : vector<8x32xf32>
    %101 = arith.addf %100, %61 : vector<8x32xf32>
    %c1 = arith.constant 1 : index
    %c0_30 = arith.constant 0 : index
    %c0_31 = arith.constant 0 : index
    %102 = vector.load %arg1[%c1, %c0_30, %c0_31] : memref<2x32x384xf32, #tpu.memory_space<vmem>>, vector<1x32x384xf32>
    %103 = vector.shape_cast %102 : vector<1x32x384xf32> to vector<32x384xf32>
    %c1_32 = arith.constant 1 : index
    %c0_33 = arith.constant 0 : index
    %c0_34 = arith.constant 0 : index
    %104 = vector.load %arg3[%c1_32, %c0_33, %c0_34] : memref<2x8x128xf32, #tpu.memory_space<vmem>>, vector<1x8x128xf32>
    %105 = vector.shape_cast %104 : vector<1x8x128xf32> to vector<8x128xf32>
    %106 = vector.extract_strided_slice %105 {offsets = [0, 0], sizes = [1, 32], strides = [1, 1]} : vector<8x128xf32> to vector<1x32xf32>
    %107 = vector.extract_strided_slice %105 {offsets = [1, 0], sizes = [1, 32], strides = [1, 1]} : vector<8x128xf32> to vector<1x32xf32>
    %108 = vector.extract_strided_slice %105 {offsets = [2, 0], sizes = [1, 96], strides = [1, 1]} : vector<8x128xf32> to vector<1x96xf32>
    %109 = vector.extract_strided_slice %105 {offsets = [3, 0], sizes = [1, 32], strides = [1, 1]} : vector<8x128xf32> to vector<1x32xf32>
    %110 = vector.extract_strided_slice %105 {offsets = [4, 0], sizes = [1, 32], strides = [1, 1]} : vector<8x128xf32> to vector<1x32xf32>
    %111 = vector.extract_strided_slice %105 {offsets = [5, 0], sizes = [1, 32], strides = [1, 1]} : vector<8x128xf32> to vector<1x32xf32>
    %112 = vector.extract_strided_slice %105 {offsets = [6, 0], sizes = [1, 64], strides = [1, 1]} : vector<8x128xf32> to vector<1x64xf32>
    %113 = vector.extract_strided_slice %105 {offsets = [7, 0], sizes = [1, 32], strides = [1, 1]} : vector<8x128xf32> to vector<1x32xf32>
    %cst_35 = arith.constant dense<0.000000e+00> : vector<8xf32>
    %114 = vector.multi_reduction <add>, %101, %cst_35 [1] : vector<8x32xf32> to vector<8xf32>
    %115 = vector.shape_cast %114 : vector<8xf32> to vector<8x1xf32>
    %cst_36 = arith.constant 3.200000e+01 : f32
    %116 = vector.broadcast %cst_36 : f32 to vector<8x1xf32>
    %117 = arith.divf %115, %116 : vector<8x1xf32>
    %118 = vector.broadcast %117 : vector<8x1xf32> to vector<8x32xf32>
    %119 = arith.subf %101, %118 : vector<8x32xf32>
    %120 = arith.mulf %119, %119 : vector<8x32xf32>
    %cst_37 = arith.constant dense<0.000000e+00> : vector<8xf32>
    %121 = vector.multi_reduction <add>, %120, %cst_37 [1] : vector<8x32xf32> to vector<8xf32>
    %122 = vector.shape_cast %121 : vector<8xf32> to vector<8x1xf32>
    %cst_38 = arith.constant 3.200000e+01 : f32
    %123 = vector.broadcast %cst_38 : f32 to vector<8x1xf32>
    %124 = arith.divf %122, %123 : vector<8x1xf32>
    %125 = vector.broadcast %117 : vector<8x1xf32> to vector<8x32xf32>
    %126 = arith.subf %101, %125 : vector<8x32xf32>
    %cst_39 = arith.constant 9.99999997E-7 : f32
    %127 = vector.broadcast %cst_39 : f32 to vector<8x1xf32>
    %128 = arith.addf %124, %127 : vector<8x1xf32>
    %129 = math.rsqrt %128 : vector<8x1xf32>
    %130 = vector.broadcast %129 : vector<8x1xf32> to vector<8x32xf32>
    %131 = arith.mulf %126, %130 : vector<8x32xf32>
    %132 = vector.broadcast %106 : vector<1x32xf32> to vector<8x32xf32>
    %133 = arith.mulf %131, %132 : vector<8x32xf32>
    %134 = vector.broadcast %107 : vector<1x32xf32> to vector<8x32xf32>
    %135 = arith.addf %133, %134 : vector<8x32xf32>
    %136 = vector.extract_strided_slice %103 {offsets = [0, 0], sizes = [32, 96], strides = [1, 1]} : vector<32x384xf32> to vector<32x96xf32>
    %cst_40 = arith.constant dense<0.000000e+00> : vector<8x96xf32>
    %137 = tpu.matmul %135, %136, %cst_40 {dimension_numbers = #tpu.dot_dimension_numbers<[1], [0], [0], [1], [0, 0, 1, 1], [], []>} : vector<8x32xf32>, vector<32x96xf32>, vector<8x96xf32> -> vector<8x96xf32>
    %138 = vector.broadcast %108 : vector<1x96xf32> to vector<8x96xf32>
    %139 = arith.addf %137, %138 : vector<8x96xf32>
    %140 = vector.extract_strided_slice %139 {offsets = [0, 0], sizes = [8, 32], strides = [1, 1]} : vector<8x96xf32> to vector<8x32xf32>
    %141 = vector.extract_strided_slice %139 {offsets = [0, 32], sizes = [8, 32], strides = [1, 1]} : vector<8x96xf32> to vector<8x32xf32>
    %142 = vector.extract_strided_slice %139 {offsets = [0, 64], sizes = [8, 32], strides = [1, 1]} : vector<8x96xf32> to vector<8x32xf32>
    %143 = vector.shape_cast %140 : vector<8x32xf32> to vector<8x4x8xf32>
    %144 = vector.shape_cast %141 : vector<8x32xf32> to vector<8x4x8xf32>
    %145 = vector.shape_cast %142 : vector<8x32xf32> to vector<8x4x8xf32>
    "tpu.trace_start"() <{level = 10 : i32, message = "nhd,nhe->nde"}> : () -> ()
    %cst_41 = arith.constant dense<0.000000e+00> : vector<8x8x8xf32>
    %146 = tpu.matmul %143, %144, %cst_41 {dimension_numbers = #tpu.dot_dimension_numbers<[1], [1], [2], [2], [0, 0, 0, 2, 1, 2], [0], [0]>} : vector<8x4x8xf32>, vector<8x4x8xf32>, vector<8x8x8xf32> -> vector<8x8x8xf32>
    "tpu.trace_stop"() : () -> ()
    %cst_42 = arith.constant dense<0xFF800000> : vector<8x8xf32>
    %147 = vector.multi_reduction <maximumf>, %146, %cst_42 [2] : vector<8x8x8xf32> to vector<8x8xf32>
    %148 = vector.shape_cast %147 : vector<8x8xf32> to vector<8x8x1xf32>
    %149 = vector.broadcast %148 : vector<8x8x1xf32> to vector<8x8x8xf32>
    %150 = arith.subf %146, %149 : vector<8x8x8xf32>
    %151 = math.exp %150 : vector<8x8x8xf32>
    %cst_43 = arith.constant dense<0.000000e+00> : vector<8x8xf32>
    %152 = vector.multi_reduction <add>, %151, %cst_43 [2] : vector<8x8x8xf32> to vector<8x8xf32>
    %153 = vector.shape_cast %152 : vector<8x8xf32> to vector<8x8x1xf32>
    %154 = vector.broadcast %153 : vector<8x8x1xf32> to vector<8x8x8xf32>
    %155 = arith.divf %151, %154 : vector<8x8x8xf32>
    "tpu.trace_start"() <{level = 10 : i32, message = "nde,nhe->nhd"}> : () -> ()
    %cst_44 = arith.constant dense<0.000000e+00> : vector<8x4x8xf32>
    %156 = tpu.matmul %145, %155, %cst_44 {dimension_numbers = #tpu.dot_dimension_numbers<[2], [2], [1], [1], [0, 0, 0, 1, 1, 1], [0], [0]>} : vector<8x4x8xf32>, vector<8x8x8xf32>, vector<8x4x8xf32> -> vector<8x4x8xf32>
    "tpu.trace_stop"() : () -> ()
    %157 = vector.shape_cast %156 : vector<8x4x8xf32> to vector<8x32xf32>
    %158 = vector.extract_strided_slice %103 {offsets = [0, 128], sizes = [32, 32], strides = [1, 1]} : vector<32x384xf32> to vector<32x32xf32>
    %cst_45 = arith.constant dense<0.000000e+00> : vector<8x32xf32>
    %159 = tpu.matmul %157, %158, %cst_45 {dimension_numbers = #tpu.dot_dimension_numbers<[1], [0], [0], [1], [0, 0, 1, 1], [], []>} : vector<8x32xf32>, vector<32x32xf32>, vector<8x32xf32> -> vector<8x32xf32>
    %160 = vector.broadcast %109 : vector<1x32xf32> to vector<8x32xf32>
    %161 = arith.addf %159, %160 : vector<8x32xf32>
    %162 = arith.addf %161, %101 : vector<8x32xf32>
    %cst_46 = arith.constant dense<0.000000e+00> : vector<8xf32>
    %163 = vector.multi_reduction <add>, %162, %cst_46 [1] : vector<8x32xf32> to vector<8xf32>
    %164 = vector.shape_cast %163 : vector<8xf32> to vector<8x1xf32>
    %cst_47 = arith.constant 3.200000e+01 : f32
    %165 = vector.broadcast %cst_47 : f32 to vector<8x1xf32>
    %166 = arith.divf %164, %165 : vector<8x1xf32>
    %167 = vector.broadcast %166 : vector<8x1xf32> to vector<8x32xf32>
    %168 = arith.subf %162, %167 : vector<8x32xf32>
    %169 = arith.mulf %168, %168 : vector<8x32xf32>
    %cst_48 = arith.constant dense<0.000000e+00> : vector<8xf32>
    %170 = vector.multi_reduction <add>, %169, %cst_48 [1] : vector<8x32xf32> to vector<8xf32>
    %171 = vector.shape_cast %170 : vector<8xf32> to vector<8x1xf32>
    %cst_49 = arith.constant 3.200000e+01 : f32
    %172 = vector.broadcast %cst_49 : f32 to vector<8x1xf32>
    %173 = arith.divf %171, %172 : vector<8x1xf32>
    %174 = vector.broadcast %166 : vector<8x1xf32> to vector<8x32xf32>
    %175 = arith.subf %162, %174 : vector<8x32xf32>
    %cst_50 = arith.constant 9.99999997E-7 : f32
    %176 = vector.broadcast %cst_50 : f32 to vector<8x1xf32>
    %177 = arith.addf %173, %176 : vector<8x1xf32>
    %178 = math.rsqrt %177 : vector<8x1xf32>
    %179 = vector.broadcast %178 : vector<8x1xf32> to vector<8x32xf32>
    %180 = arith.mulf %175, %179 : vector<8x32xf32>
    %181 = vector.broadcast %110 : vector<1x32xf32> to vector<8x32xf32>
    %182 = arith.mulf %180, %181 : vector<8x32xf32>
    %183 = vector.broadcast %111 : vector<1x32xf32> to vector<8x32xf32>
    %184 = arith.addf %182, %183 : vector<8x32xf32>
    %185 = vector.extract_strided_slice %103 {offsets = [0, 256], sizes = [32, 64], strides = [1, 1]} : vector<32x384xf32> to vector<32x64xf32>
    %cst_51 = arith.constant dense<0.000000e+00> : vector<8x64xf32>
    %186 = tpu.matmul %184, %185, %cst_51 {dimension_numbers = #tpu.dot_dimension_numbers<[1], [0], [0], [1], [0, 0, 1, 1], [], []>} : vector<8x32xf32>, vector<32x64xf32>, vector<8x64xf32> -> vector<8x64xf32>
    %187 = vector.broadcast %112 : vector<1x64xf32> to vector<8x64xf32>
    %188 = arith.addf %186, %187 : vector<8x64xf32>
    %cst_52 = arith.constant 5.000000e-01 : f32
    %189 = vector.broadcast %cst_52 : f32 to vector<8x64xf32>
    %190 = arith.mulf %189, %188 : vector<8x64xf32>
    %cst_53 = arith.constant 0.707106769 : f32
    %191 = vector.broadcast %cst_53 : f32 to vector<8x64xf32>
    %192 = arith.mulf %188, %191 : vector<8x64xf32>
    %193 = math.erf %192 : vector<8x64xf32>
    %cst_54 = arith.constant 1.000000e+00 : f32
    %194 = vector.broadcast %cst_54 : f32 to vector<8x64xf32>
    %195 = arith.addf %194, %193 : vector<8x64xf32>
    %196 = arith.mulf %190, %195 : vector<8x64xf32>
    %c1_55 = arith.constant 1 : index
    %c0_56 = arith.constant 0 : index
    %c0_57 = arith.constant 0 : index
    %197 = vector.load %arg2[%c1_55, %c0_56, %c0_57] : memref<2x64x32xf32, #tpu.memory_space<vmem>>, vector<1x64x32xf32>
    %198 = vector.shape_cast %197 : vector<1x64x32xf32> to vector<64x32xf32>
    %cst_58 = arith.constant dense<0.000000e+00> : vector<8x32xf32>
    %199 = tpu.matmul %196, %198, %cst_58 {dimension_numbers = #tpu.dot_dimension_numbers<[1], [0], [0], [1], [0, 0, 1, 1], [], []>} : vector<8x64xf32>, vector<64x32xf32>, vector<8x32xf32> -> vector<8x32xf32>
    %200 = vector.broadcast %113 : vector<1x32xf32> to vector<8x32xf32>
    %201 = arith.addf %199, %200 : vector<8x32xf32>
    %202 = arith.addf %201, %162 : vector<8x32xf32>
    %c0_59 = arith.constant 0 : index
    %c0_60 = arith.constant 0 : index
    %203 = vector.load %arg5[%c0_59, %c0_60] : memref<8x128xf32, #tpu.memory_space<vmem>>, vector<1x32xf32>
    %c1_61 = arith.constant 1 : index
    %c0_62 = arith.constant 0 : index
    %204 = vector.load %arg5[%c1_61, %c0_62] : memref<8x128xf32, #tpu.memory_space<vmem>>, vector<1x32xf32>
    %c2 = arith.constant 2 : index
    %c0_63 = arith.constant 0 : index
    %205 = vector.load %arg5[%c2, %c0_63] : memref<8x128xf32, #tpu.memory_space<vmem>>, vector<1x32xf32>
    %cst_64 = arith.constant dense<0.000000e+00> : vector<8xf32>
    %206 = vector.multi_reduction <add>, %202, %cst_64 [1] : vector<8x32xf32> to vector<8xf32>
    %207 = vector.shape_cast %206 : vector<8xf32> to vector<8x1xf32>
    %cst_65 = arith.constant 3.200000e+01 : f32
    %208 = vector.broadcast %cst_65 : f32 to vector<8x1xf32>
    %209 = arith.divf %207, %208 : vector<8x1xf32>
    %210 = vector.broadcast %209 : vector<8x1xf32> to vector<8x32xf32>
    %211 = arith.subf %202, %210 : vector<8x32xf32>
    %212 = arith.mulf %211, %211 : vector<8x32xf32>
    %cst_66 = arith.constant dense<0.000000e+00> : vector<8xf32>
    %213 = vector.multi_reduction <add>, %212, %cst_66 [1] : vector<8x32xf32> to vector<8xf32>
    %214 = vector.shape_cast %213 : vector<8xf32> to vector<8x1xf32>
    %cst_67 = arith.constant 3.200000e+01 : f32
    %215 = vector.broadcast %cst_67 : f32 to vector<8x1xf32>
    %216 = arith.divf %214, %215 : vector<8x1xf32>
    %217 = vector.broadcast %209 : vector<8x1xf32> to vector<8x32xf32>
    %218 = arith.subf %202, %217 : vector<8x32xf32>
    %cst_68 = arith.constant 9.99999997E-7 : f32
    %219 = vector.broadcast %cst_68 : f32 to vector<8x1xf32>
    %220 = arith.addf %216, %219 : vector<8x1xf32>
    %221 = math.rsqrt %220 : vector<8x1xf32>
    %222 = vector.broadcast %221 : vector<8x1xf32> to vector<8x32xf32>
    %223 = arith.mulf %218, %222 : vector<8x32xf32>
    %224 = vector.broadcast %203 : vector<1x32xf32> to vector<8x32xf32>
    %225 = arith.mulf %223, %224 : vector<8x32xf32>
    %226 = vector.broadcast %204 : vector<1x32xf32> to vector<8x32xf32>
    %227 = arith.addf %225, %226 : vector<8x32xf32>
    %c0_69 = arith.constant 0 : index
    %c0_70 = arith.constant 0 : index
    %228 = vector.load %arg4[%c0_69, %c0_70] : memref<32x32xf32, #tpu.memory_space<vmem>>, vector<32x32xf32>
    %cst_71 = arith.constant dense<0.000000e+00> : vector<8x32xf32>
    %229 = tpu.matmul %227, %228, %cst_71 {dimension_numbers = #tpu.dot_dimension_numbers<[1], [0], [0], [1], [0, 0, 1, 1], [], []>} : vector<8x32xf32>, vector<32x32xf32>, vector<8x32xf32> -> vector<8x32xf32>
    %230 = vector.broadcast %205 : vector<1x32xf32> to vector<8x32xf32>
    %231 = arith.addf %229, %230 : vector<8x32xf32>
    %232 = tpu.concatenate %227, %231 in 1 : vector<8x32xf32>, vector<8x32xf32> -> vector<8x64xf32>
    %c0_72 = arith.constant 0 : index
    %c0_73 = arith.constant 0 : index
    %233 = vector.load %arg6[%c0_72, %c0_73] : memref<8x64xf32, #tpu.memory_space<vmem>>, vector<8x64xf32>
    tpu.vector_store %arg6[%c0_72, %c0_73], %232 {strides = array<i32>} : memref<8x64xf32, #tpu.memory_space<vmem>>, vector<8x64xf32>,
    return
  }
}

</mosaic_0001>

<llo_original>
// kernel: transformer_encoder.1
$region0: #{transformer_encoder.1}
  #allocation0 [shape = 'u32[]', space=smem, size = 0x4, offset = 0x4, fixed_abs, tag = 'smem constant byte address 0x4 - core index']
  #allocation1 [shape = 'u32[144,128]{1,0:T(1,128)}', space=vmem, size = 0x12000, scoped, tag = 'internal scratch']
  %s0 = inlined_call_operand.hbm [shape: f32[8,32], index: 0, kind: input, shape index: {}]
  %s1 = inlined_call_operand.vmem [shape: f32[2,32,384], index: 1, kind: input, shape index: {}]
  %s2 = inlined_call_operand.vmem [shape: f32[2,64,32], index: 2, kind: input, shape index: {}]
  %s3 = inlined_call_operand.hbm [shape: f32[2,8,128], index: 3, kind: input, shape index: {}]
  %s4 = inlined_call_operand.hbm [shape: f32[32,32], index: 4, kind: input, shape index: {}]
  %s5 = inlined_call_operand.hbm [shape: f32[8,128], index: 5, kind: input, shape index: {}]
  %s6 = inlined_call_operand.vmem [shape: f32[8,64], index: 6, kind: output, shape index: {}]
  %s7 = sld [smem:[#allocation0]]
  $region50: #{transformer_encoder.1} parent=0
    _
  %s9 = ssub.s32 1, %s7
  %s10 = scalar_select 0, %s9, %s7
  $region1: #{transformer_encoder.1} parent=0
    #allocation2 [shape = 'u8[4096]{0}', space=vmem, size = 0x1000, scoped, tag = 'input window, operand 0, single buffered']
    #allocation3 [shape = 's32[1]{0}', space=sflag, size = 0x4, scoped, tag = 'scoped memory for transformer_encoder.1']
    #allocation4 [shape = 'u8[8192]{0}', space=vmem, size = 0x2000, scoped, tag = 'input window, operand 3, single buffered']
    #allocation5 [shape = 's32[1]{0}', space=sflag, size = 0x4, scoped, tag = 'scoped memory for transformer_encoder.1']
    #allocation6 [shape = 'u8[16384]{0}', space=vmem, size = 0x4000, scoped, tag = 'input window, operand 4, single buffered']
    #allocation7 [shape = 'u8[4096]{0}', space=vmem, size = 0x1000, scoped, tag = 'input window, operand 5, single buffered']
    #allocation8 [shape = 's32[1]{0}', space=sflag, size = 0x4, scoped, tag = 'scoped memory for transformer_encoder.1']
    %11 = vsyncpa [#allocation3], 0
    %12 = vsyncpa [#allocation5], 0
    %13 = vsyncpa [#allocation8], 0
    // Predicated region
    $region2: #{transformer_encoder.1} parent=1 // pred_check
      _
    $region3: #{transformer_encoder.1} parent=1 // pred_check_branch
      %15 = sbr.rel (0) target = $region5
    $region4: #{transformer_encoder.1} parent=1 // pred_region
      %s17 = ssub.s32 128, 128
      %18 = vsyncadd [#allocation3], %s17
      %s20 = sshll.u32 [#allocation2], 4
      %s21 = int_to_ptr.vmem [resolvable:$true] %s20
      %23 = dma.hbm_to_vmem [thread:$0]  %s0, 128, %s21, [#allocation3]
    $region5: #{transformer_encoder.1} parent=1 // pred_fallthru
      _
    // Predicated region
    $region6: #{transformer_encoder.1} parent=1 // pred_check
      _
    $region7: #{transformer_encoder.1} parent=1 // pred_check_branch
      %25 = sbr.rel (0) target = $region9
    $region8: #{transformer_encoder.1} parent=1 // pred_region
      _
    $region9: #{transformer_encoder.1} parent=1 // pred_fallthru
      _
    // Predicated region
    $region10: #{transformer_encoder.1} parent=1 // pred_check
      _
    $region11: #{transformer_encoder.1} parent=1 // pred_check_branch
      %27 = sbr.rel (0) target = $region13
    $region12: #{transformer_encoder.1} parent=1 // pred_region
      _
    $region13: #{transformer_encoder.1} parent=1 // pred_fallthru
      _
    // Predicated region
    $region14: #{transformer_encoder.1} parent=1 // pred_check
      _
    $region15: #{transformer_encoder.1} parent=1 // pred_check_branch
      %29 = sbr.rel (0) target = $region17
    $region16: #{transformer_encoder.1} parent=1 // pred_region
      %s31 = ssub.s32 256, 256
      %32 = vsyncadd [#allocation5], %s31
      %s33 = sshll.u32 [#allocation4], 4
      %s34 = int_to_ptr.vmem [resolvable:$true] %s33
      %39 = dma.hbm_to_vmem [thread:$0]  %s3, 256, %s34, [#allocation5], 128, 128, 8
    $region17: #{transformer_encoder.1} parent=1 // pred_fallthru
      _
    // Predicated region
    $region18: #{transformer_encoder.1} parent=1 // pred_check
      _
    $region19: #{transformer_encoder.1} parent=1 // pred_check_branch
      %41 = sbr.rel (0) target = $region21
    $region20: #{transformer_encoder.1} parent=1 // pred_region
      %s43 = ssub.s32 512, 512
      %44 = vsyncadd [#allocation5], %s43
      %s45 = sshll.u32 [#allocation6], 4
      %s46 = int_to_ptr.vmem [resolvable:$true] %s45
      %51 = dma.hbm_to_vmem [thread:$0]  %s4, 512, %s46, [#allocation5], 128, 128, 8
    $region21: #{transformer_encoder.1} parent=1 // pred_fallthru
      _
    // Predicated region
    $region22: #{transformer_encoder.1} parent=1 // pred_check
      _
    $region23: #{transformer_encoder.1} parent=1 // pred_check_branch
      %53 = sbr.rel (0) target = $region25
    $region24: #{transformer_encoder.1} parent=1 // pred_region
      %s55 = ssub.s32 128, 128
      %56 = vsyncadd [#allocation8], %s55
      %s58 = sshll.u32 [#allocation7], 4
      %s59 = int_to_ptr.vmem [resolvable:$true] %s58
      %61 = dma.hbm_to_vmem [thread:$0]  %s5, 128, %s59, [#allocation8]
    $region25: #{transformer_encoder.1} parent=1 // pred_fallthru
      _
    // Predicated region
    $region26: #{transformer_encoder.1} parent=1 // pred_check
      _
    $region27: #{transformer_encoder.1} parent=1 // pred_check_branch
      %63 = sbr.rel (0) target = $region29
    $region28: #{transformer_encoder.1} parent=1 // pred_region
      %64 = dma.done [#allocation3], 128
    $region29: #{transformer_encoder.1} parent=1 // pred_fallthru
      _
    // Predicated region
    $region30: #{transformer_encoder.1} parent=1 // pred_check
      _
    $region31: #{transformer_encoder.1} parent=1 // pred_check_branch
      %66 = sbr.rel (0) target = $region33
    $region32: #{transformer_encoder.1} parent=1 // pred_region
      %67 = dma.done [#allocation5], 256
    $region33: #{transformer_encoder.1} parent=1 // pred_fallthru
      _
    // Predicated region
    $region34: #{transformer_encoder.1} parent=1 // pred_check
      _
    $region35: #{transformer_encoder.1} parent=1 // pred_check_branch
      %69 = sbr.rel (0) target = $region37
    $region36: #{transformer_encoder.1} parent=1 // pred_region
      %70 = dma.done [#allocation5], 512
    $region37: #{transformer_encoder.1} parent=1 // pred_fallthru
      _
    // Predicated region
    $region38: #{transformer_encoder.1} parent=1 // pred_check
      _
    $region39: #{transformer_encoder.1} parent=1 // pred_check_branch
      %72 = sbr.rel (0) target = $region41
    $region40: #{transformer_encoder.1} parent=1 // pred_region
      %73 = dma.done [#allocation8], 128
    $region41: #{transformer_encoder.1} parent=1 // pred_fallthru
      _
    %v74 = vld [vmem:[#allocation2] sm:$0xff]
    %v75 = vld [vmem:[%s1] sm:$0xff]
    %v76 = vld [vmem:[%s1 + $0x8] sm:$0xff]
    %v77 = vld [vmem:[%s1 + $0x10] sm:$0xff]
    %v78 = vld [vmem:[%s1 + $0x18] sm:$0xff]
    %v79 = vld [vmem:[%s1 + $0x20] sm:$0xff]
    %v80 = vld [vmem:[%s1 + $0x28] sm:$0xff]
    %v81 = vld [vmem:[%s1 + $0x30] sm:$0xff]
    %v82 = vld [vmem:[%s1 + $0x38] sm:$0xff]
    %v83 = vld [vmem:[%s1 + $0x40] sm:$0xff]
    %v84 = vld [vmem:[%s1 + $0x48] sm:$0xff]
    %v85 = vld [vmem:[%s1 + $0x50] sm:$0xff]
    %v86 = vld [vmem:[%s1 + $0x58] sm:$0xff]
    %v87 = vld [vmem:[#allocation4] sm:$0xff]
    %vm88 = vcmask 261120
    %v89 = vsel %vm88, %v74, 0.0
    %90 = vadd.xlane.f32.xlu0 %v89
    %v91 = vpop.xlane.xlu0 %90
    %v92 = vrcp.pop 32.0
    %v93 = vmul.f32 %v91, %v92
    %v94 = vsub.f32 %v74, %v93
    %v95 = vmul.f32 %v94, %v94
    %v96 = vsel %vm88, %v95, 0.0
    %97 = vadd.xlane.f32.xlu0 %v96
    %v98 = vpop.xlane.xlu0 %97
    %v99 = vmul.f32 %v98, %v92
    %v100 = vadd.f32 %v99, 1e-06
    %v101 = vrsqrt.pop %v100
    %v102 = vmul.f32 %v94, %v101
    %v103 = vlaneseq
    %v104 = vshrl.u32 %v103, 7
    %v105 = vsub.s32 0, %v104
    %v106 = vrot.slane %v87, %v105
    %v107 = vmul.f32 %v102, %v106
    %v108 = vlaneseq
    %v109 = vshrl.u32 %v108, 7
    %v110 = vsub.s32 1, %v109
    %v111 = vrot.slane %v87, %v110
    %v112 = vadd.f32 %v107, %v111
    %v113 = vlaneseq
    %v114 = vshrl.u32 %v113, 7
    %v115 = vsub.s32 2, %v114
    %v116 = vrot.slane %v87, %v115
    %v118 = vsel %vm88, %v112, 0
    %120 = vmatprep.subr.mxu0 0.0
    %121 = vmatpush1.msra.mxu0 0.0
    %122 = vmatprep.subr.mxu0 0.0
    %123 = vmatpush1.msra.mxu0 0.0
    %124 = vmatprep.subr.mxu0 0.0
    %125 = vmatpush1.msra.mxu0 0.0
    %126 = vmatprep.subr.mxu0 0.0
    %127 = vmatpush1.msra.mxu0 0.0
    %128 = vmatprep.subr.mxu0 0.0
    %129 = vmatpush1.msra.mxu0 0.0
    %130 = vmatprep.subr.mxu0 0.0
    %131 = vmatpush1.msra.mxu0 0.0
    %132 = vmatprep.subr.mxu0 0.0
    %133 = vmatpush1.msra.mxu0 0.0
    %134 = vmatprep.subr.mxu0 0.0
    %135 = vmatpush1.msra.mxu0 0.0
    %136 = vmatprep.subr.mxu0 0.0
    %137 = vmatpush1.msra.mxu0 0.0
    %138 = vmatprep.subr.mxu0 0.0
    %139 = vmatpush1.msra.mxu0 0.0
    %140 = vmatprep.subr.mxu0 0.0
    %141 = vmatpush1.msra.mxu0 0.0
    %142 = vmatprep.subr.mxu0 0.0
    %143 = vmatpush1.msra.mxu0 0.0
    %144 = vmatprep.subr.mxu0 0.0
    %145 = vmatpush1.msra.mxu0 %v84
    %146 = vmatprep.subr.mxu0 0.0
    %147 = vmatpush1.msra.mxu0 %v81
    %148 = vmatprep.subr.mxu0 0.0
    %149 = vmatpush1.msra.mxu0 %v78
    %150 = vmatprep.subr.mxu0 0.0
    %151 = vmatpush1.msra.mxu0 %v75
    %152 = vmatprep.subr.mxu0 0.0
    %153 = vmatpush2.msra.mxu0 0.0
    %154 = vmatprep.subr.mxu0 0.0
    %155 = vmatpush2.msra.mxu0 0.0
    %156 = vmatprep.subr.mxu0 0.0
    %157 = vmatpush2.msra.mxu0 0.0
    %158 = vmatprep.subr.mxu0 0.0
    %159 = vmatpush2.msra.mxu0 0.0
    %160 = vmatprep.subr.mxu0 0.0
    %161 = vmatpush2.msra.mxu0 0.0
    %162 = vmatprep.subr.mxu0 0.0
    %163 = vmatpush2.msra.mxu0 0.0
    %164 = vmatprep.subr.mxu0 0.0
    %165 = vmatpush2.msra.mxu0 0.0
    %166 = vmatprep.subr.mxu0 0.0
    %167 = vmatpush2.msra.mxu0 0.0
    %168 = vmatprep.subr.mxu0 0.0
    %169 = vmatpush2.msra.mxu0 0.0
    %170 = vmatprep.subr.mxu0 0.0
    %171 = vmatpush2.msra.mxu0 0.0
    %172 = vmatprep.subr.mxu0 0.0
    %173 = vmatpush2.msra.mxu0 0.0
    %174 = vmatprep.subr.mxu0 0.0
    %175 = vmatpush2.msra.mxu0 0.0
    %176 = vmatprep.subr.mxu0 0.0
    %177 = vmatpush2.msra.mxu0 0.0
    %178 = vmatprep.subr.mxu0 0.0
    %179 = vmatpush2.msra.mxu0 0.0
    %180 = vmatprep.subr.mxu0 0.0
    %181 = vmatpush2.msra.mxu0 0.0
    %182 = vmatprep.subr.mxu0 0.0
    %183 = vmatpush2.msra.mxu0 0.0
    %184 = vmatprep.mubr.f32.mxu0 0.0
    %185 = vmatmul.mubr.f32.gmra.mxu0 %v118
    %v186 = vpop.f32.mrf.mxu0
    %v187 = vadd.f32 %v116, %v186
    %v188 = vpop.f32.mrf.mxu0
    %189 = vdwg.mxu0
    %191 = vrot.lane.b32.xlu0 %v187, 120
    %v192 = vpop.permute.xlu0 %191
    %194 = vrot.lane.b32.xlu0 %v187, 112
    %v195 = vpop.permute.xlu0 %194
    %197 = vrot.lane.b32.xlu0 %v187, 104
    %v198 = vpop.permute.xlu0 %197
    %v200 = vcombine.low %v187, %v195
    %v201 = vcombine.high %v187, %v195
    %v203 = vunpack.c.l.s4 1983009808
    %v204 = vunpack.c.0.s8 %v203
    %v205 = vlaneseq
    %v206 = vshrl.u32 %v205, 7
    %v207 = vsub.s32 %v204, %v206
    %v208 = vrot.slane %v200, %v207
    %v210 = vunpack.c.l.s4 1983009808
    %v211 = vunpack.c.0.s8 %v210
    %v212 = vlaneseq
    %v213 = vshrl.u32 %v212, 7
    %v214 = vsub.s32 %v211, %v213
    %v215 = vrot.slane %v201, %v214
    %v216 = vcombine.low %v192, %v198
    %v217 = vcombine.high %v192, %v198
    %v219 = vunpack.c.l.s4 1983009808
    %v220 = vunpack.c.0.s8 %v219
    %v221 = vlaneseq
    %v222 = vshrl.u32 %v221, 7
    %v223 = vsub.s32 %v220, %v222
    %v224 = vrot.slane %v216, %v223
    %v226 = vunpack.c.l.s4 1983009808
    %v227 = vunpack.c.0.s8 %v226
    %v228 = vlaneseq
    %v229 = vshrl.u32 %v228, 7
    %v230 = vsub.s32 %v227, %v229
    %v231 = vrot.slane %v217, %v230
    %v232 = vcombine.low %v208, %v224
    %v233 = vcombine.high %v208, %v224
    %v235 = vunpack.c.l.s4 1934713408
    %v236 = vunpack.c.0.s8 %v235
    %v237 = vlaneseq
    %v238 = vshrl.u32 %v237, 7
    %v239 = vsub.s32 %v236, %v238
    %v240 = vrot.slane %v232, %v239
    %v242 = vunpack.c.l.s4 1934713408
    %v243 = vunpack.c.0.s8 %v242
    %v244 = vlaneseq
    %v245 = vshrl.u32 %v244, 7
    %v246 = vsub.s32 %v243, %v245
    %v247 = vrot.slane %v233, %v246
    %v248 = vcombine.low %v215, %v231
    %v249 = vcombine.high %v215, %v231
    %v251 = vunpack.c.l.s4 1934713408
    %v252 = vunpack.c.0.s8 %v251
    %v253 = vlaneseq
    %v254 = vshrl.u32 %v253, 7
    %v255 = vsub.s32 %v252, %v254
    %v256 = vrot.slane %v248, %v255
    %v258 = vunpack.c.l.s4 1934713408
    %v259 = vunpack.c.0.s8 %v258
    %v260 = vlaneseq
    %v261 = vshrl.u32 %v260, 7
    %v262 = vsub.s32 %v259, %v261
    %v263 = vrot.slane %v249, %v262
    %v264 = vcombine.high %v240, 0.0
    %v265 = vcombine.high %v247, 0.0
    %v266 = vcombine.high %v256, 0.0
    %v267 = vcombine.high %v263, 0.0
    %268 = vrot.lane.b32.xlu0 %v187, 96
    %v269 = vpop.permute.xlu0 %268
    %270 = vrot.lane.b32.xlu0 %v192, 96
    %v271 = vpop.permute.xlu0 %270
    %272 = vrot.lane.b32.xlu0 %v195, 96
    %v273 = vpop.permute.xlu0 %272
    %274 = vrot.lane.b32.xlu0 %v198, 96
    %v275 = vpop.permute.xlu0 %274
    %v280 = vcombine.low %v269, %v273
    %v281 = vcombine.high %v269, %v273
    %v283 = vunpack.c.l.s4 1983009808
    %v284 = vunpack.c.0.s8 %v283
    %v285 = vlaneseq
    %v286 = vshrl.u32 %v285, 7
    %v287 = vsub.s32 %v284, %v286
    %v288 = vrot.slane %v280, %v287
    %v290 = vunpack.c.l.s4 1983009808
    %v291 = vunpack.c.0.s8 %v290
    %v292 = vlaneseq
    %v293 = vshrl.u32 %v292, 7
    %v294 = vsub.s32 %v291, %v293
    %v295 = vrot.slane %v281, %v294
    %v296 = vcombine.low %v271, %v275
    %v297 = vcombine.high %v271, %v275
    %v299 = vunpack.c.l.s4 1983009808
    %v300 = vunpack.c.0.s8 %v299
    %v301 = vlaneseq
    %v302 = vshrl.u32 %v301, 7
    %v303 = vsub.s32 %v300, %v302
    %v304 = vrot.slane %v296, %v303
    %v306 = vunpack.c.l.s4 1983009808
    %v307 = vunpack.c.0.s8 %v306
    %v308 = vlaneseq
    %v309 = vshrl.u32 %v308, 7
    %v310 = vsub.s32 %v307, %v309
    %v311 = vrot.slane %v297, %v310
    %v312 = vcombine.low %v288, %v304
    %v313 = vcombine.high %v288, %v304
    %v315 = vunpack.c.l.s4 1934713408
    %v316 = vunpack.c.0.s8 %v315
    %v317 = vlaneseq
    %v318 = vshrl.u32 %v317, 7
    %v319 = vsub.s32 %v316, %v318
    %v320 = vrot.slane %v312, %v319
    %v322 = vunpack.c.l.s4 1934713408
    %v323 = vunpack.c.0.s8 %v322
    %v324 = vlaneseq
    %v325 = vshrl.u32 %v324, 7
    %v326 = vsub.s32 %v323, %v325
    %v327 = vrot.slane %v313, %v326
    %v328 = vcombine.low %v295, %v311
    %v329 = vcombine.high %v295, %v311
    %v331 = vunpack.c.l.s4 1934713408
    %v332 = vunpack.c.0.s8 %v331
    %v333 = vlaneseq
    %v334 = vshrl.u32 %v333, 7
    %v335 = vsub.s32 %v332, %v334
    %v336 = vrot.slane %v328, %v335
    %v338 = vunpack.c.l.s4 1934713408
    %v339 = vunpack.c.0.s8 %v338
    %v340 = vlaneseq
    %v341 = vshrl.u32 %v340, 7
    %v342 = vsub.s32 %v339, %v341
    %v343 = vrot.slane %v329, %v342
    %v344 = vcombine.high %v320, 0.0
    %v345 = vcombine.high %v327, 0.0
    %v346 = vcombine.high %v336, 0.0
    %v347 = vcombine.high %v343, 0.0
    %348 = vrot.lane.b32.xlu0 %v187, 64
    %v349 = vpop.permute.xlu0 %348
    %350 = vrot.lane.b32.xlu0 %v192, 64
    %v351 = vpop.permute.xlu0 %350
    %352 = vrot.lane.b32.xlu0 %v195, 64
    %v353 = vpop.permute.xlu0 %352
    %354 = vrot.lane.b32.xlu0 %v198, 64
    %v355 = vpop.permute.xlu0 %354
    %v360 = vcombine.low %v349, %v353
    %v361 = vcombine.high %v349, %v353
    %v363 = vunpack.c.l.s4 1983009808
    %v364 = vunpack.c.0.s8 %v363
    %v365 = vlaneseq
    %v366 = vshrl.u32 %v365, 7
    %v367 = vsub.s32 %v364, %v366
    %v368 = vrot.slane %v360, %v367
    %v370 = vunpack.c.l.s4 1983009808
    %v371 = vunpack.c.0.s8 %v370
    %v372 = vlaneseq
    %v373 = vshrl.u32 %v372, 7
    %v374 = vsub.s32 %v371, %v373
    %v375 = vrot.slane %v361, %v374
    %v376 = vcombine.low %v351, %v355
    %v377 = vcombine.high %v351, %v355
    %v379 = vunpack.c.l.s4 1983009808
    %v380 = vunpack.c.0.s8 %v379
    %v381 = vlaneseq
    %v382 = vshrl.u32 %v381, 7
    %v383 = vsub.s32 %v380, %v382
    %v384 = vrot.slane %v376, %v383
    %v386 = vunpack.c.l.s4 1983009808
    %v387 = vunpack.c.0.s8 %v386
    %v388 = vlaneseq
    %v389 = vshrl.u32 %v388, 7
    %v390 = vsub.s32 %v387, %v389
    %v391 = vrot.slane %v377, %v390
    %v392 = vcombine.low %v368, %v384
    %v393 = vcombine.high %v368, %v384
    %v395 = vunpack.c.l.s4 1934713408
    %v396 = vunpack.c.0.s8 %v395
    %v397 = vlaneseq
    %v398 = vshrl.u32 %v397, 7
    %v399 = vsub.s32 %v396, %v398
    %v400 = vrot.slane %v392, %v399
    %v402 = vunpack.c.l.s4 1934713408
    %v403 = vunpack.c.0.s8 %v402
    %v404 = vlaneseq
    %v405 = vshrl.u32 %v404, 7
    %v406 = vsub.s32 %v403, %v405
    %v407 = vrot.slane %v393, %v406
    %v408 = vcombine.low %v375, %v391
    %v409 = vcombine.high %v375, %v391
    %v411 = vunpack.c.l.s4 1934713408
    %v412 = vunpack.c.0.s8 %v411
    %v413 = vlaneseq
    %v414 = vshrl.u32 %v413, 7
    %v415 = vsub.s32 %v412, %v414
    %v416 = vrot.slane %v408, %v415
    %v418 = vunpack.c.l.s4 1934713408
    %v419 = vunpack.c.0.s8 %v418
    %v420 = vlaneseq
    %v421 = vshrl.u32 %v420, 7
    %v422 = vsub.s32 %v419, %v421
    %v423 = vrot.slane %v409, %v422
    %v424 = vcombine.high %v400, 0.0
    %v425 = vcombine.high %v407, 0.0
    %v426 = vcombine.high %v416, 0.0
    %v427 = vcombine.high %v423, 0.0
    %428 = vxpose.xlu0.b32.start [1/16] %v240, 128
    %429 = vxpose.xlu0.b32.cont [2/16] 0.0, 128
    %430 = vxpose.xlu0.b32.cont [3/16] 0.0, 128
    %431 = vxpose.xlu0.b32.cont [4/16] 0.0, 128
    %432 = vxpose.xlu0.b32.cont [5/16] 0.0, 128
    %433 = vxpose.xlu0.b32.cont [6/16] 0.0, 128
    %434 = vxpose.xlu0.b32.cont [7/16] 0.0, 128
    %435 = vxpose.xlu0.b32.cont [8/16] 0.0, 128
    %436 = vxpose.xlu0.b32.cont [9/16] 0.0, 128
    %437 = vxpose.xlu0.b32.cont [10/16] 0.0, 128
    %438 = vxpose.xlu0.b32.cont [11/16] 0.0, 128
    %439 = vxpose.xlu0.b32.cont [12/16] 0.0, 128
    %440 = vxpose.xlu0.b32.cont [13/16] 0.0, 128
    %441 = vxpose.xlu0.b32.cont [14/16] 0.0, 128
    %442 = vxpose.xlu0.b32.cont [15/16] 0.0, 128
    %443 = vxpose.xlu0.b32.end [16/16] 0.0, 128
    %v444 = vpop.trf.xlu0
    %v445 = vpop.trf.xlu0
    %v446 = vpop.trf.xlu0
    %v447 = vpop.trf.xlu0
    %v448 = vpop.trf.xlu0
    %v449 = vpop.trf.xlu0
    %v450 = vpop.trf.xlu0
    %v451 = vpop.trf.xlu0
    %v452 = vpop.trf.xlu0
    %v453 = vpop.trf.xlu0
    %v454 = vpop.trf.xlu0
    %v455 = vpop.trf.xlu0
    %v456 = vpop.trf.xlu0
    %v457 = vpop.trf.xlu0
    %v458 = vpop.trf.xlu0
    %v459 = vpop.trf.xlu0
    %vm460 = vcmask 31744
    %v462 = vsel %vm460, %v444, 0
    %vm464 = vcmask 1043456
    %v466 = vsel %vm464, %v320, 0
    %468 = vmatprep.subr.mxu0 0.0
    %469 = vmatpush1.msra.mxu0 0.0
    %470 = vmatprep.subr.mxu0 0.0
    %471 = vmatpush1.msra.mxu0 0.0
    %472 = vmatprep.subr.mxu0 0.0
    %473 = vmatpush1.msra.mxu0 0.0
    %474 = vmatprep.subr.mxu0 0.0
    %475 = vmatpush1.msra.mxu0 0.0
    %476 = vmatprep.subr.mxu0 0.0
    %477 = vmatpush1.msra.mxu0 0.0
    %478 = vmatprep.subr.mxu0 0.0
    %479 = vmatpush1.msra.mxu0 0.0
    %480 = vmatprep.subr.mxu0 0.0
    %481 = vmatpush1.msra.mxu0 0.0
    %482 = vmatprep.subr.mxu0 0.0
    %483 = vmatpush1.msra.mxu0 0.0
    %484 = vmatprep.subr.mxu0 0.0
    %485 = vmatpush1.msra.mxu0 0.0
    %486 = vmatprep.subr.mxu0 0.0
    %487 = vmatpush1.msra.mxu0 0.0
    %488 = vmatprep.subr.mxu0 0.0
    %489 = vmatpush1.msra.mxu0 0.0
    %490 = vmatprep.subr.mxu0 0.0
    %491 = vmatpush1.msra.mxu0 0.0
    %492 = vmatprep.subr.mxu0 0.0
    %493 = vmatpush1.msra.mxu0 0.0
    %494 = vmatprep.subr.mxu0 0.0
    %495 = vmatpush1.msra.mxu0 0.0
    %496 = vmatprep.subr.mxu0 0.0
    %497 = vmatpush1.msra.mxu0 0.0
    %498 = vmatprep.subr.mxu0 0.0
    %499 = vmatpush1.msra.mxu0 %v466
    %500 = vmatprep.subr.mxu0 0.0
    %501 = vmatpush2.msra.mxu0 0.0
    %502 = vmatprep.subr.mxu0 0.0
    %503 = vmatpush2.msra.mxu0 0.0
    %504 = vmatprep.subr.mxu0 0.0
    %505 = vmatpush2.msra.mxu0 0.0
    %506 = vmatprep.subr.mxu0 0.0
    %507 = vmatpush2.msra.mxu0 0.0
    %508 = vmatprep.subr.mxu0 0.0
    %509 = vmatpush2.msra.mxu0 0.0
    %510 = vmatprep.subr.mxu0 0.0
    %511 = vmatpush2.msra.mxu0 0.0
    %512 = vmatprep.subr.mxu0 0.0
    %513 = vmatpush2.msra.mxu0 0.0
    %514 = vmatprep.subr.mxu0 0.0
    %515 = vmatpush2.msra.mxu0 0.0
    %516 = vmatprep.subr.mxu0 0.0
    %517 = vmatpush2.msra.mxu0 0.0
    %518 = vmatprep.subr.mxu0 0.0
    %519 = vmatpush2.msra.mxu0 0.0
    %520 = vmatprep.subr.mxu0 0.0
    %521 = vmatpush2.msra.mxu0 0.0
    %522 = vmatprep.subr.mxu0 0.0
    %523 = vmatpush2.msra.mxu0 0.0
    %524 = vmatprep.subr.mxu0 0.0
    %525 = vmatpush2.msra.mxu0 0.0
    %526 = vmatprep.subr.mxu0 0.0
    %527 = vmatpush2.msra.mxu0 0.0
    %528 = vmatprep.subr.mxu0 0.0
    %529 = vmatpush2.msra.mxu0 0.0
    %530 = vmatprep.subr.mxu0 0.0
    %531 = vmatpush2.msra.mxu0 0.0
    %532 = vmatprep.mubr.f32.mxu0 0.0
    %533 = vmatmul.mubr.f32.gmra.mxu0 %v462
    %v534 = vpop.f32.mrf.mxu0
    %v535 = vadd.f32 0.0, %v534
    %v536 = vpop.f32.mrf.mxu0
    %537 = vdwg.mxu0
    %538 = vxpose.xlu0.b32.start [1/16] %v264, 128
    %539 = vxpose.xlu0.b32.cont [2/16] 0.0, 128
    %540 = vxpose.xlu0.b32.cont [3/16] 0.0, 128
    %541 = vxpose.xlu0.b32.cont [4/16] 0.0, 128
    %542 = vxpose.xlu0.b32.cont [5/16] 0.0, 128
    %543 = vxpose.xlu0.b32.cont [6/16] 0.0, 128
    %544 = vxpose.xlu0.b32.cont [7/16] 0.0, 128
    %545 = vxpose.xlu0.b32.cont [8/16] 0.0, 128
    %546 = vxpose.xlu0.b32.cont [9/16] 0.0, 128
    %547 = vxpose.xlu0.b32.cont [10/16] 0.0, 128
    %548 = vxpose.xlu0.b32.cont [11/16] 0.0, 128
    %549 = vxpose.xlu0.b32.cont [12/16] 0.0, 128
    %550 = vxpose.xlu0.b32.cont [13/16] 0.0, 128
    %551 = vxpose.xlu0.b32.cont [14/16] 0.0, 128
    %552 = vxpose.xlu0.b32.cont [15/16] 0.0, 128
    %553 = vxpose.xlu0.b32.end [16/16] 0.0, 128
    %v554 = vpop.trf.xlu0
    %v555 = vpop.trf.xlu0
    %v556 = vpop.trf.xlu0
    %v557 = vpop.trf.xlu0
    %v558 = vpop.trf.xlu0
    %v559 = vpop.trf.xlu0
    %v560 = vpop.trf.xlu0
    %v561 = vpop.trf.xlu0
    %v562 = vpop.trf.xlu0
    %v563 = vpop.trf.xlu0
    %v564 = vpop.trf.xlu0
    %v565 = vpop.trf.xlu0
    %v566 = vpop.trf.xlu0
    %v567 = vpop.trf.xlu0
    %v568 = vpop.trf.xlu0
    %v569 = vpop.trf.xlu0
    %v571 = vsel %vm460, %v554, 0
    %v574 = vsel %vm464, %v344, 0
    %576 = vmatprep.subr.mxu0 0.0
    %577 = vmatpush1.msra.mxu0 0.0
    %578 = vmatprep.subr.mxu0 0.0
    %579 = vmatpush1.msra.mxu0 0.0
    %580 = vmatprep.subr.mxu0 0.0
    %581 = vmatpush1.msra.mxu0 0.0
    %582 = vmatprep.subr.mxu0 0.0
    %583 = vmatpush1.msra.mxu0 0.0
    %584 = vmatprep.subr.mxu0 0.0
    %585 = vmatpush1.msra.mxu0 0.0
    %586 = vmatprep.subr.mxu0 0.0
    %587 = vmatpush1.msra.mxu0 0.0
    %588 = vmatprep.subr.mxu0 0.0
    %589 = vmatpush1.msra.mxu0 0.0
    %590 = vmatprep.subr.mxu0 0.0
    %591 = vmatpush1.msra.mxu0 0.0
    %592 = vmatprep.subr.mxu0 0.0
    %593 = vmatpush1.msra.mxu0 0.0
    %594 = vmatprep.subr.mxu0 0.0
    %595 = vmatpush1.msra.mxu0 0.0
    %596 = vmatprep.subr.mxu0 0.0
    %597 = vmatpush1.msra.mxu0 0.0
    %598 = vmatprep.subr.mxu0 0.0
    %599 = vmatpush1.msra.mxu0 0.0
    %600 = vmatprep.subr.mxu0 0.0
    %601 = vmatpush1.msra.mxu0 0.0
    %602 = vmatprep.subr.mxu0 0.0
    %603 = vmatpush1.msra.mxu0 0.0
    %604 = vmatprep.subr.mxu0 0.0
    %605 = vmatpush1.msra.mxu0 0.0
    %606 = vmatprep.subr.mxu0 0.0
    %607 = vmatpush1.msra.mxu0 %v574
    %608 = vmatprep.subr.mxu0 0.0
    %609 = vmatpush2.msra.mxu0 0.0
    %610 = vmatprep.subr.mxu0 0.0
    %611 = vmatpush2.msra.mxu0 0.0
    %612 = vmatprep.subr.mxu0 0.0
    %613 = vmatpush2.msra.mxu0 0.0
    %614 = vmatprep.subr.mxu0 0.0
    %615 = vmatpush2.msra.mxu0 0.0
    %616 = vmatprep.subr.mxu0 0.0
    %617 = vmatpush2.msra.mxu0 0.0
    %618 = vmatprep.subr.mxu0 0.0
    %619 = vmatpush2.msra.mxu0 0.0
    %620 = vmatprep.subr.mxu0 0.0
    %621 = vmatpush2.msra.mxu0 0.0
    %622 = vmatprep.subr.mxu0 0.0
    %623 = vmatpush2.msra.mxu0 0.0
    %624 = vmatprep.subr.mxu0 0.0
    %625 = vmatpush2.msra.mxu0 0.0
    %626 = vmatprep.subr.mxu0 0.0
    %627 = vmatpush2.msra.mxu0 0.0
    %628 = vmatprep.subr.mxu0 0.0
    %629 = vmatpush2.msra.mxu0 0.0
    %630 = vmatprep.subr.mxu0 0.0
    %631 = vmatpush2.msra.mxu0 0.0
    %632 = vmatprep.subr.mxu0 0.0
    %633 = vmatpush2.msra.mxu0 0.0
    %634 = vmatprep.subr.mxu0 0.0
    %635 = vmatpush2.msra.mxu0 0.0
    %636 = vmatprep.subr.mxu0 0.0
    %637 = vmatpush2.msra.mxu0 0.0
    %638 = vmatprep.subr.mxu0 0.0
    %639 = vmatpush2.msra.mxu0 0.0
    %640 = vmatprep.mubr.f32.mxu0 0.0
    %641 = vmatmul.mubr.f32.gmra.mxu0 %v571
    %v642 = vpop.f32.mrf.mxu0
    %v643 = vadd.f32 0.0, %v642
    %v644 = vpop.f32.mrf.mxu0
    %645 = vdwg.mxu0
    %646 = vxpose.xlu0.b32.start [1/16] %v247, 128
    %647 = vxpose.xlu0.b32.cont [2/16] 0.0, 128
    %648 = vxpose.xlu0.b32.cont [3/16] 0.0, 128
    %649 = vxpose.xlu0.b32.cont [4/16] 0.0, 128
    %650 = vxpose.xlu0.b32.cont [5/16] 0.0, 128
    %651 = vxpose.xlu0.b32.cont [6/16] 0.0, 128
    %652 = vxpose.xlu0.b32.cont [7/16] 0.0, 128
    %653 = vxpose.xlu0.b32.cont [8/16] 0.0, 128
    %654 = vxpose.xlu0.b32.cont [9/16] 0.0, 128
    %655 = vxpose.xlu0.b32.cont [10/16] 0.0, 128
    %656 = vxpose.xlu0.b32.cont [11/16] 0.0, 128
    %657 = vxpose.xlu0.b32.cont [12/16] 0.0, 128
    %658 = vxpose.xlu0.b32.cont [13/16] 0.0, 128
    %659 = vxpose.xlu0.b32.cont [14/16] 0.0, 128
    %660 = vxpose.xlu0.b32.cont [15/16] 0.0, 128
    %661 = vxpose.xlu0.b32.end [16/16] 0.0, 128
    %v662 = vpop.trf.xlu0
    %v663 = vpop.trf.xlu0
    %v664 = vpop.trf.xlu0
    %v665 = vpop.trf.xlu0
    %v666 = vpop.trf.xlu0
    %v667 = vpop.trf.xlu0
    %v668 = vpop.trf.xlu0
    %v669 = vpop.trf.xlu0
    %v670 = vpop.trf.xlu0
    %v671 = vpop.trf.xlu0
    %v672 = vpop.trf.xlu0
    %v673 = vpop.trf.xlu0
    %v674 = vpop.trf.xlu0
    %v675 = vpop.trf.xlu0
    %v676 = vpop.trf.xlu0
    %v677 = vpop.trf.xlu0
    %v679 = vsel %vm460, %v662, 0
    %v682 = vsel %vm464, %v327, 0
    %684 = vmatprep.subr.mxu0 0.0
    %685 = vmatpush1.msra.mxu0 0.0
    %686 = vmatprep.subr.mxu0 0.0
    %687 = vmatpush1.msra.mxu0 0.0
    %688 = vmatprep.subr.mxu0 0.0
    %689 = vmatpush1.msra.mxu0 0.0
    %690 = vmatprep.subr.mxu0 0.0
    %691 = vmatpush1.msra.mxu0 0.0
    %692 = vmatprep.subr.mxu0 0.0
    %693 = vmatpush1.msra.mxu0 0.0
    %694 = vmatprep.subr.mxu0 0.0
    %695 = vmatpush1.msra.mxu0 0.0
    %696 = vmatprep.subr.mxu0 0.0
    %697 = vmatpush1.msra.mxu0 0.0
    %698 = vmatprep.subr.mxu0 0.0
    %699 = vmatpush1.msra.mxu0 0.0
    %700 = vmatprep.subr.mxu0 0.0
    %701 = vmatpush1.msra.mxu0 0.0
    %702 = vmatprep.subr.mxu0 0.0
    %703 = vmatpush1.msra.mxu0 0.0
    %704 = vmatprep.subr.mxu0 0.0
    %705 = vmatpush1.msra.mxu0 0.0
    %706 = vmatprep.subr.mxu0 0.0
    %707 = vmatpush1.msra.mxu0 0.0
    %708 = vmatprep.subr.mxu0 0.0
    %709 = vmatpush1.msra.mxu0 0.0
    %710 = vmatprep.subr.mxu0 0.0
    %711 = vmatpush1.msra.mxu0 0.0
    %712 = vmatprep.subr.mxu0 0.0
    %713 = vmatpush1.msra.mxu0 0.0
    %714 = vmatprep.subr.mxu0 0.0
    %715 = vmatpush1.msra.mxu0 %v682
    %716 = vmatprep.subr.mxu0 0.0
    %717 = vmatpush2.msra.mxu0 0.0
    %718 = vmatprep.subr.mxu0 0.0
    %719 = vmatpush2.msra.mxu0 0.0
    %720 = vmatprep.subr.mxu0 0.0
    %721 = vmatpush2.msra.mxu0 0.0
    %722 = vmatprep.subr.mxu0 0.0
    %723 = vmatpush2.msra.mxu0 0.0
    %724 = vmatprep.subr.mxu0 0.0
    %725 = vmatpush2.msra.mxu0 0.0
    %726 = vmatprep.subr.mxu0 0.0
    %727 = vmatpush2.msra.mxu0 0.0
    %728 = vmatprep.subr.mxu0 0.0
    %729 = vmatpush2.msra.mxu0 0.0
    %730 = vmatprep.subr.mxu0 0.0
    %731 = vmatpush2.msra.mxu0 0.0
    %732 = vmatprep.subr.mxu0 0.0
    %733 = vmatpush2.msra.mxu0 0.0
    %734 = vmatprep.subr.mxu0 0.0
    %735 = vmatpush2.msra.mxu0 0.0
    %736 = vmatprep.subr.mxu0 0.0
    %737 = vmatpush2.msra.mxu0 0.0
    %738 = vmatprep.subr.mxu0 0.0
    %739 = vmatpush2.msra.mxu0 0.0
    %740 = vmatprep.subr.mxu0 0.0
    %741 = vmatpush2.msra.mxu0 0.0
    %742 = vmatprep.subr.mxu0 0.0
    %743 = vmatpush2.msra.mxu0 0.0
    %744 = vmatprep.subr.mxu0 0.0
    %745 = vmatpush2.msra.mxu0 0.0
    %746 = vmatprep.subr.mxu0 0.0
    %747 = vmatpush2.msra.mxu0 0.0
    %748 = vmatprep.mubr.f32.mxu0 0.0
    %749 = vmatmul.mubr.f32.gmra.mxu0 %v679
    %v750 = vpop.f32.mrf.mxu0
    %v751 = vadd.f32 0.0, %v750
    %v752 = vpop.f32.mrf.mxu0
    %753 = vdwg.mxu0
    %754 = vxpose.xlu0.b32.start [1/16] %v265, 128
    %755 = vxpose.xlu0.b32.cont [2/16] 0.0, 128
    %756 = vxpose.xlu0.b32.cont [3/16] 0.0, 128
    %757 = vxpose.xlu0.b32.cont [4/16] 0.0, 128
    %758 = vxpose.xlu0.b32.cont [5/16] 0.0, 128
    %759 = vxpose.xlu0.b32.cont [6/16] 0.0, 128
    %760 = vxpose.xlu0.b32.cont [7/16] 0.0, 128
    %761 = vxpose.xlu0.b32.cont [8/16] 0.0, 128
    %762 = vxpose.xlu0.b32.cont [9/16] 0.0, 128
    %763 = vxpose.xlu0.b32.cont [10/16] 0.0, 128
    %764 = vxpose.xlu0.b32.cont [11/16] 0.0, 128
    %765 = vxpose.xlu0.b32.cont [12/16] 0.0, 128
    %766 = vxpose.xlu0.b32.cont [13/16] 0.0, 128
    %767 = vxpose.xlu0.b32.cont [14/16] 0.0, 128
    %768 = vxpose.xlu0.b32.cont [15/16] 0.0, 128
    %769 = vxpose.xlu0.b32.end [16/16] 0.0, 128
    %v770 = vpop.trf.xlu0
    %v771 = vpop.trf.xlu0
    %v772 = vpop.trf.xlu0
    %v773 = vpop.trf.xlu0
    %v774 = vpop.trf.xlu0
    %v775 = vpop.trf.xlu0
    %v776 = vpop.trf.xlu0
    %v777 = vpop.trf.xlu0
    %v778 = vpop.trf.xlu0
    %v779 = vpop.trf.xlu0
    %v780 = vpop.trf.xlu0
    %v781 = vpop.trf.xlu0
    %v782 = vpop.trf.xlu0
    %v783 = vpop.trf.xlu0
    %v784 = vpop.trf.xlu0
    %v785 = vpop.trf.xlu0
    %v787 = vsel %vm460, %v770, 0
    %v790 = vsel %vm464, %v345, 0
    %792 = vmatprep.subr.mxu0 0.0
    %793 = vmatpush1.msra.mxu0 0.0
    %794 = vmatprep.subr.mxu0 0.0
    %795 = vmatpush1.msra.mxu0 0.0
    %796 = vmatprep.subr.mxu0 0.0
    %797 = vmatpush1.msra.mxu0 0.0
    %798 = vmatprep.subr.mxu0 0.0
    %799 = vmatpush1.msra.mxu0 0.0
    %800 = vmatprep.subr.mxu0 0.0
    %801 = vmatpush1.msra.mxu0 0.0
    %802 = vmatprep.subr.mxu0 0.0
    %803 = vmatpush1.msra.mxu0 0.0
    %804 = vmatprep.subr.mxu0 0.0
    %805 = vmatpush1.msra.mxu0 0.0
    %806 = vmatprep.subr.mxu0 0.0
    %807 = vmatpush1.msra.mxu0 0.0
    %808 = vmatprep.subr.mxu0 0.0
    %809 = vmatpush1.msra.mxu0 0.0
    %810 = vmatprep.subr.mxu0 0.0
    %811 = vmatpush1.msra.mxu0 0.0
    %812 = vmatprep.subr.mxu0 0.0
    %813 = vmatpush1.msra.mxu0 0.0
    %814 = vmatprep.subr.mxu0 0.0
    %815 = vmatpush1.msra.mxu0 0.0
    %816 = vmatprep.subr.mxu0 0.0
    %817 = vmatpush1.msra.mxu0 0.0
    %818 = vmatprep.subr.mxu0 0.0
    %819 = vmatpush1.msra.mxu0 0.0
    %820 = vmatprep.subr.mxu0 0.0
    %821 = vmatpush1.msra.mxu0 0.0
    %822 = vmatprep.subr.mxu0 0.0
    %823 = vmatpush1.msra.mxu0 %v790
    %824 = vmatprep.subr.mxu0 0.0
    %825 = vmatpush2.msra.mxu0 0.0
    %826 = vmatprep.subr.mxu0 0.0
    %827 = vmatpush2.msra.mxu0 0.0
    %828 = vmatprep.subr.mxu0 0.0
    %829 = vmatpush2.msra.mxu0 0.0
    %830 = vmatprep.subr.mxu0 0.0
    %831 = vmatpush2.msra.mxu0 0.0
    %832 = vmatprep.subr.mxu0 0.0
    %833 = vmatpush2.msra.mxu0 0.0
    %834 = vmatprep.subr.mxu0 0.0
    %835 = vmatpush2.msra.mxu0 0.0
    %836 = vmatprep.subr.mxu0 0.0
    %837 = vmatpush2.msra.mxu0 0.0
    %838 = vmatprep.subr.mxu0 0.0
    %839 = vmatpush2.msra.mxu0 0.0
    %840 = vmatprep.subr.mxu0 0.0
    %841 = vmatpush2.msra.mxu0 0.0
    %842 = vmatprep.subr.mxu0 0.0
    %843 = vmatpush2.msra.mxu0 0.0
    %844 = vmatprep.subr.mxu0 0.0
    %845 = vmatpush2.msra.mxu0 0.0
    %846 = vmatprep.subr.mxu0 0.0
    %847 = vmatpush2.msra.mxu0 0.0
    %848 = vmatprep.subr.mxu0 0.0
    %849 = vmatpush2.msra.mxu0 0.0
    %850 = vmatprep.subr.mxu0 0.0
    %851 = vmatpush2.msra.mxu0 0.0
    %852 = vmatprep.subr.mxu0 0.0
    %853 = vmatpush2.msra.mxu0 0.0
    %854 = vmatprep.subr.mxu0 0.0
    %855 = vmatpush2.msra.mxu0 0.0
    %856 = vmatprep.mubr.f32.mxu0 0.0
    %857 = vmatmul.mubr.f32.gmra.mxu0 %v787
    %v858 = vpop.f32.mrf.mxu0
    %v859 = vadd.f32 0.0, %v858
    %v860 = vpop.f32.mrf.mxu0
    %861 = vdwg.mxu0
    %862 = vxpose.xlu0.b32.start [1/16] %v256, 128
    %863 = vxpose.xlu0.b32.cont [2/16] 0.0, 128
    %864 = vxpose.xlu0.b32.cont [3/16] 0.0, 128
    %865 = vxpose.xlu0.b32.cont [4/16] 0.0, 128
    %866 = vxpose.xlu0.b32.cont [5/16] 0.0, 128
    %867 = vxpose.xlu0.b32.cont [6/16] 0.0, 128
    %868 = vxpose.xlu0.b32.cont [7/16] 0.0, 128
    %869 = vxpose.xlu0.b32.cont [8/16] 0.0, 128
    %870 = vxpose.xlu0.b32.cont [9/16] 0.0, 128
    %871 = vxpose.xlu0.b32.cont [10/16] 0.0, 128
    %872 = vxpose.xlu0.b32.cont [11/16] 0.0, 128
    %873 = vxpose.xlu0.b32.cont [12/16] 0.0, 128
    %874 = vxpose.xlu0.b32.cont [13/16] 0.0, 128
    %875 = vxpose.xlu0.b32.cont [14/16] 0.0, 128
    %876 = vxpose.xlu0.b32.cont [15/16] 0.0, 128
    %877 = vxpose.xlu0.b32.end [16/16] 0.0, 128
    %v878 = vpop.trf.xlu0
    %v879 = vpop.trf.xlu0
    %v880 = vpop.trf.xlu0
    %v881 = vpop.trf.xlu0
    %v882 = vpop.trf.xlu0
    %v883 = vpop.trf.xlu0
    %v884 = vpop.trf.xlu0
    %v885 = vpop.trf.xlu0
    %v886 = vpop.trf.xlu0
    %v887 = vpop.trf.xlu0
    %v888 = vpop.trf.xlu0
    %v889 = vpop.trf.xlu0
    %v890 = vpop.trf.xlu0
    %v891 = vpop.trf.xlu0
    %v892 = vpop.trf.xlu0
    %v893 = vpop.trf.xlu0
    %v895 = vsel %vm460, %v878, 0
    %v898 = vsel %vm464, %v336, 0
    %900 = vmatprep.subr.mxu0 0.0
    %901 = vmatpush1.msra.mxu0 0.0
    %902 = vmatprep.subr.mxu0 0.0
    %903 = vmatpush1.msra.mxu0 0.0
    %904 = vmatprep.subr.mxu0 0.0
    %905 = vmatpush1.msra.mxu0 0.0
    %906 = vmatprep.subr.mxu0 0.0
    %907 = vmatpush1.msra.mxu0 0.0
    %908 = vmatprep.subr.mxu0 0.0
    %909 = vmatpush1.msra.mxu0 0.0
    %910 = vmatprep.subr.mxu0 0.0
    %911 = vmatpush1.msra.mxu0 0.0
    %912 = vmatprep.subr.mxu0 0.0
    %913 = vmatpush1.msra.mxu0 0.0
    %914 = vmatprep.subr.mxu0 0.0
    %915 = vmatpush1.msra.mxu0 0.0
    %916 = vmatprep.subr.mxu0 0.0
    %917 = vmatpush1.msra.mxu0 0.0
    %918 = vmatprep.subr.mxu0 0.0
    %919 = vmatpush1.msra.mxu0 0.0
    %920 = vmatprep.subr.mxu0 0.0
    %921 = vmatpush1.msra.mxu0 0.0
    %922 = vmatprep.subr.mxu0 0.0
    %923 = vmatpush1.msra.mxu0 0.0
    %924 = vmatprep.subr.mxu0 0.0
    %925 = vmatpush1.msra.mxu0 0.0
    %926 = vmatprep.subr.mxu0 0.0
    %927 = vmatpush1.msra.mxu0 0.0
    %928 = vmatprep.subr.mxu0 0.0
    %929 = vmatpush1.msra.mxu0 0.0
    %930 = vmatprep.subr.mxu0 0.0
    %931 = vmatpush1.msra.mxu0 %v898
    %932 = vmatprep.subr.mxu0 0.0
    %933 = vmatpush2.msra.mxu0 0.0
    %934 = vmatprep.subr.mxu0 0.0
    %935 = vmatpush2.msra.mxu0 0.0
    %936 = vmatprep.subr.mxu0 0.0
    %937 = vmatpush2.msra.mxu0 0.0
    %938 = vmatprep.subr.mxu0 0.0
    %939 = vmatpush2.msra.mxu0 0.0
    %940 = vmatprep.subr.mxu0 0.0
    %941 = vmatpush2.msra.mxu0 0.0
    %942 = vmatprep.subr.mxu0 0.0
    %943 = vmatpush2.msra.mxu0 0.0
    %944 = vmatprep.subr.mxu0 0.0
    %945 = vmatpush2.msra.mxu0 0.0
    %946 = vmatprep.subr.mxu0 0.0
    %947 = vmatpush2.msra.mxu0 0.0
    %948 = vmatprep.subr.mxu0 0.0
    %949 = vmatpush2.msra.mxu0 0.0
    %950 = vmatprep.subr.mxu0 0.0
    %951 = vmatpush2.msra.mxu0 0.0
    %952 = vmatprep.subr.mxu0 0.0
    %953 = vmatpush2.msra.mxu0 0.0
    %954 = vmatprep.subr.mxu0 0.0
    %955 = vmatpush2.msra.mxu0 0.0
    %956 = vmatprep.subr.mxu0 0.0
    %957 = vmatpush2.msra.mxu0 0.0
    %958 = vmatprep.subr.mxu0 0.0
    %959 = vmatpush2.msra.mxu0 0.0
    %960 = vmatprep.subr.mxu0 0.0
    %961 = vmatpush2.msra.mxu0 0.0
    %962 = vmatprep.subr.mxu0 0.0
    %963 = vmatpush2.msra.mxu0 0.0
    %964 = vmatprep.mubr.f32.mxu0 0.0
    %965 = vmatmul.mubr.f32.gmra.mxu0 %v895
    %v966 = vpop.f32.mrf.mxu0
    %v967 = vadd.f32 0.0, %v966
    %v968 = vpop.f32.mrf.mxu0
    %969 = vdwg.mxu0
    %970 = vxpose.xlu0.b32.start [1/16] %v266, 128
    %971 = vxpose.xlu0.b32.cont [2/16] 0.0, 128
    %972 = vxpose.xlu0.b32.cont [3/16] 0.0, 128
    %973 = vxpose.xlu0.b32.cont [4/16] 0.0, 128
    %974 = vxpose.xlu0.b32.cont [5/16] 0.0, 128
    %975 = vxpose.xlu0.b32.cont [6/16] 0.0, 128
    %976 = vxpose.xlu0.b32.cont [7/16] 0.0, 128
    %977 = vxpose.xlu0.b32.cont [8/16] 0.0, 128
    %978 = vxpose.xlu0.b32.cont [9/16] 0.0, 128
    %979 = vxpose.xlu0.b32.cont [10/16] 0.0, 128
    %980 = vxpose.xlu0.b32.cont [11/16] 0.0, 128
    %981 = vxpose.xlu0.b32.cont [12/16] 0.0, 128
    %982 = vxpose.xlu0.b32.cont [13/16] 0.0, 128
    %983 = vxpose.xlu0.b32.cont [14/16] 0.0, 128
    %984 = vxpose.xlu0.b32.cont [15/16] 0.0, 128
    %985 = vxpose.xlu0.b32.end [16/16] 0.0, 128
    %v986 = vpop.trf.xlu0
    %v987 = vpop.trf.xlu0
    %v988 = vpop.trf.xlu0
    %v989 = vpop.trf.xlu0
    %v990 = vpop.trf.xlu0
    %v991 = vpop.trf.xlu0
    %v992 = vpop.trf.xlu0
    %v993 = vpop.trf.xlu0
    %v994 = vpop.trf.xlu0
    %v995 = vpop.trf.xlu0
    %v996 = vpop.trf.xlu0
    %v997 = vpop.trf.xlu0
    %v998 = vpop.trf.xlu0
    %v999 = vpop.trf.xlu0
    %v1000 = vpop.trf.xlu0
    %v1001 = vpop.trf.xlu0
    %v1003 = vsel %vm460, %v986, 0
    %v1006 = vsel %vm464, %v346, 0
    %1008 = vmatprep.subr.mxu0 0.0
    %1009 = vmatpush1.msra.mxu0 0.0
    %1010 = vmatprep.subr.mxu0 0.0
    %1011 = vmatpush1.msra.mxu0 0.0
    %1012 = vmatprep.subr.mxu0 0.0
    %1013 = vmatpush1.msra.mxu0 0.0
    %1014 = vmatprep.subr.mxu0 0.0
    %1015 = vmatpush1.msra.mxu0 0.0
    %1016 = vmatprep.subr.mxu0 0.0
    %1017 = vmatpush1.msra.mxu0 0.0
    %1018 = vmatprep.subr.mxu0 0.0
    %1019 = vmatpush1.msra.mxu0 0.0
    %1020 = vmatprep.subr.mxu0 0.0
    %1021 = vmatpush1.msra.mxu0 0.0
    %1022 = vmatprep.subr.mxu0 0.0
    %1023 = vmatpush1.msra.mxu0 0.0
    %1024 = vmatprep.subr.mxu0 0.0
    %1025 = vmatpush1.msra.mxu0 0.0
    %1026 = vmatprep.subr.mxu0 0.0
    %1027 = vmatpush1.msra.mxu0 0.0
    %1028 = vmatprep.subr.mxu0 0.0
    %1029 = vmatpush1.msra.mxu0 0.0
    %1030 = vmatprep.subr.mxu0 0.0
    %1031 = vmatpush1.msra.mxu0 0.0
    %1032 = vmatprep.subr.mxu0 0.0
    %1033 = vmatpush1.msra.mxu0 0.0
    %1034 = vmatprep.subr.mxu0 0.0
    %1035 = vmatpush1.msra.mxu0 0.0
    %1036 = vmatprep.subr.mxu0 0.0
    %1037 = vmatpush1.msra.mxu0 0.0
    %1038 = vmatprep.subr.mxu0 0.0
    %1039 = vmatpush1.msra.mxu0 %v1006
    %1040 = vmatprep.subr.mxu0 0.0
    %1041 = vmatpush2.msra.mxu0 0.0
    %1042 = vmatprep.subr.mxu0 0.0
    %1043 = vmatpush2.msra.mxu0 0.0
    %1044 = vmatprep.subr.mxu0 0.0
    %1045 = vmatpush2.msra.mxu0 0.0
    %1046 = vmatprep.subr.mxu0 0.0
    %1047 = vmatpush2.msra.mxu0 0.0
    %1048 = vmatprep.subr.mxu0 0.0
    %1049 = vmatpush2.msra.mxu0 0.0
    %1050 = vmatprep.subr.mxu0 0.0
    %1051 = vmatpush2.msra.mxu0 0.0
    %1052 = vmatprep.subr.mxu0 0.0
    %1053 = vmatpush2.msra.mxu0 0.0
    %1054 = vmatprep.subr.mxu0 0.0
    %1055 = vmatpush2.msra.mxu0 0.0
    %1056 = vmatprep.subr.mxu0 0.0
    %1057 = vmatpush2.msra.mxu0 0.0
    %1058 = vmatprep.subr.mxu0 0.0
    %1059 = vmatpush2.msra.mxu0 0.0
    %1060 = vmatprep.subr.mxu0 0.0
    %1061 = vmatpush2.msra.mxu0 0.0
    %1062 = vmatprep.subr.mxu0 0.0
    %1063 = vmatpush2.msra.mxu0 0.0
    %1064 = vmatprep.subr.mxu0 0.0
    %1065 = vmatpush2.msra.mxu0 0.0
    %1066 = vmatprep.subr.mxu0 0.0
    %1067 = vmatpush2.msra.mxu0 0.0
    %1068 = vmatprep.subr.mxu0 0.0
    %1069 = vmatpush2.msra.mxu0 0.0
    %1070 = vmatprep.subr.mxu0 0.0
    %1071 = vmatpush2.msra.mxu0 0.0
    %1072 = vmatprep.mubr.f32.mxu0 0.0
    %1073 = vmatmul.mubr.f32.gmra.mxu0 %v1003
    %v1074 = vpop.f32.mrf.mxu0
    %v1075 = vadd.f32 0.0, %v1074
    %v1076 = vpop.f32.mrf.mxu0
    %1077 = vdwg.mxu0
    %1078 = vxpose.xlu0.b32.start [1/16] %v263, 128
    %1079 = vxpose.xlu0.b32.cont [2/16] 0.0, 128
    %1080 = vxpose.xlu0.b32.cont [3/16] 0.0, 128
    %1081 = vxpose.xlu0.b32.cont [4/16] 0.0, 128
    %1082 = vxpose.xlu0.b32.cont [5/16] 0.0, 128
    %1083 = vxpose.xlu0.b32.cont [6/16] 0.0, 128
    %1084 = vxpose.xlu0.b32.cont [7/16] 0.0, 128
    %1085 = vxpose.xlu0.b32.cont [8/16] 0.0, 128
    %1086 = vxpose.xlu0.b32.cont [9/16] 0.0, 128
    %1087 = vxpose.xlu0.b32.cont [10/16] 0.0, 128
    %1088 = vxpose.xlu0.b32.cont [11/16] 0.0, 128
    %1089 = vxpose.xlu0.b32.cont [12/16] 0.0, 128
    %1090 = vxpose.xlu0.b32.cont [13/16] 0.0, 128
    %1091 = vxpose.xlu0.b32.cont [14/16] 0.0, 128
    %1092 = vxpose.xlu0.b32.cont [15/16] 0.0, 128
    %1093 = vxpose.xlu0.b32.end [16/16] 0.0, 128
    %v1094 = vpop.trf.xlu0
    %v1095 = vpop.trf.xlu0
    %v1096 = vpop.trf.xlu0
    %v1097 = vpop.trf.xlu0
    %v1098 = vpop.trf.xlu0
    %v1099 = vpop.trf.xlu0
    %v1100 = vpop.trf.xlu0
    %v1101 = vpop.trf.xlu0
    %v1102 = vpop.trf.xlu0
    %v1103 = vpop.trf.xlu0
    %v1104 = vpop.trf.xlu0
    %v1105 = vpop.trf.xlu0
    %v1106 = vpop.trf.xlu0
    %v1107 = vpop.trf.xlu0
    %v1108 = vpop.trf.xlu0
    %v1109 = vpop.trf.xlu0
    %v1111 = vsel %vm460, %v1094, 0
    %v1114 = vsel %vm464, %v343, 0
    %1116 = vmatprep.subr.mxu0 0.0
    %1117 = vmatpush1.msra.mxu0 0.0
    %1118 = vmatprep.subr.mxu0 0.0
    %1119 = vmatpush1.msra.mxu0 0.0
    %1120 = vmatprep.subr.mxu0 0.0
    %1121 = vmatpush1.msra.mxu0 0.0
    %1122 = vmatprep.subr.mxu0 0.0
    %1123 = vmatpush1.msra.mxu0 0.0
    %1124 = vmatprep.subr.mxu0 0.0
    %1125 = vmatpush1.msra.mxu0 0.0
    %1126 = vmatprep.subr.mxu0 0.0
    %1127 = vmatpush1.msra.mxu0 0.0
    %1128 = vmatprep.subr.mxu0 0.0
    %1129 = vmatpush1.msra.mxu0 0.0
    %1130 = vmatprep.subr.mxu0 0.0
    %1131 = vmatpush1.msra.mxu0 0.0
    %1132 = vmatprep.subr.mxu0 0.0
    %1133 = vmatpush1.msra.mxu0 0.0
    %1134 = vmatprep.subr.mxu0 0.0
    %1135 = vmatpush1.msra.mxu0 0.0
    %1136 = vmatprep.subr.mxu0 0.0
    %1137 = vmatpush1.msra.mxu0 0.0
    %1138 = vmatprep.subr.mxu0 0.0
    %1139 = vmatpush1.msra.mxu0 0.0
    %1140 = vmatprep.subr.mxu0 0.0
    %1141 = vmatpush1.msra.mxu0 0.0
    %1142 = vmatprep.subr.mxu0 0.0
    %1143 = vmatpush1.msra.mxu0 0.0
    %1144 = vmatprep.subr.mxu0 0.0
    %1145 = vmatpush1.msra.mxu0 0.0
    %1146 = vmatprep.subr.mxu0 0.0
    %1147 = vmatpush1.msra.mxu0 %v1114
    %1148 = vmatprep.subr.mxu0 0.0
    %1149 = vmatpush2.msra.mxu0 0.0
    %1150 = vmatprep.subr.mxu0 0.0
    %1151 = vmatpush2.msra.mxu0 0.0
    %1152 = vmatprep.subr.mxu0 0.0
    %1153 = vmatpush2.msra.mxu0 0.0
    %1154 = vmatprep.subr.mxu0 0.0
    %1155 = vmatpush2.msra.mxu0 0.0
    %1156 = vmatprep.subr.mxu0 0.0
    %1157 = vmatpush2.msra.mxu0 0.0
    %1158 = vmatprep.subr.mxu0 0.0
    %1159 = vmatpush2.msra.mxu0 0.0
    %1160 = vmatprep.subr.mxu0 0.0
    %1161 = vmatpush2.msra.mxu0 0.0
    %1162 = vmatprep.subr.mxu0 0.0
    %1163 = vmatpush2.msra.mxu0 0.0
    %1164 = vmatprep.subr.mxu0 0.0
    %1165 = vmatpush2.msra.mxu0 0.0
    %1166 = vmatprep.subr.mxu0 0.0
    %1167 = vmatpush2.msra.mxu0 0.0
    %1168 = vmatprep.subr.mxu0 0.0
    %1169 = vmatpush2.msra.mxu0 0.0
    %1170 = vmatprep.subr.mxu0 0.0
    %1171 = vmatpush2.msra.mxu0 0.0
    %1172 = vmatprep.subr.mxu0 0.0
    %1173 = vmatpush2.msra.mxu0 0.0
    %1174 = vmatprep.subr.mxu0 0.0
    %1175 = vmatpush2.msra.mxu0 0.0
    %1176 = vmatprep.subr.mxu0 0.0
    %1177 = vmatpush2.msra.mxu0 0.0
    %1178 = vmatprep.subr.mxu0 0.0
    %1179 = vmatpush2.msra.mxu0 0.0
    %1180 = vmatprep.mubr.f32.mxu0 0.0
    %1181 = vmatmul.mubr.f32.gmra.mxu0 %v1111
    %v1182 = vpop.f32.mrf.mxu0
    %v1183 = vadd.f32 0.0, %v1182
    %v1184 = vpop.f32.mrf.mxu0
    %1185 = vdwg.mxu0
    %1186 = vxpose.xlu0.b32.start [1/16] %v267, 128
    %1187 = vxpose.xlu0.b32.cont [2/16] 0.0, 128
    %1188 = vxpose.xlu0.b32.cont [3/16] 0.0, 128
    %1189 = vxpose.xlu0.b32.cont [4/16] 0.0, 128
    %1190 = vxpose.xlu0.b32.cont [5/16] 0.0, 128
    %1191 = vxpose.xlu0.b32.cont [6/16] 0.0, 128
    %1192 = vxpose.xlu0.b32.cont [7/16] 0.0, 128
    %1193 = vxpose.xlu0.b32.cont [8/16] 0.0, 128
    %1194 = vxpose.xlu0.b32.cont [9/16] 0.0, 128
    %1195 = vxpose.xlu0.b32.cont [10/16] 0.0, 128
    %1196 = vxpose.xlu0.b32.cont [11/16] 0.0, 128
    %1197 = vxpose.xlu0.b32.cont [12/16] 0.0, 128
    %1198 = vxpose.xlu0.b32.cont [13/16] 0.0, 128
    %1199 = vxpose.xlu0.b32.cont [14/16] 0.0, 128
    %1200 = vxpose.xlu0.b32.cont [15/16] 0.0, 128
    %1201 = vxpose.xlu0.b32.end [16/16] 0.0, 128
    %v1202 = vpop.trf.xlu0
    %v1203 = vpop.trf.xlu0
    %v1204 = vpop.trf.xlu0
    %v1205 = vpop.trf.xlu0
    %v1206 = vpop.trf.xlu0
    %v1207 = vpop.trf.xlu0
    %v1208 = vpop.trf.xlu0
    %v1209 = vpop.trf.xlu0
    %v1210 = vpop.trf.xlu0
    %v1211 = vpop.trf.xlu0
    %v1212 = vpop.trf.xlu0
    %v1213 = vpop.trf.xlu0
    %v1214 = vpop.trf.xlu0
    %v1215 = vpop.trf.xlu0
    %v1216 = vpop.trf.xlu0
    %v1217 = vpop.trf.xlu0
    %v1219 = vsel %vm460, %v1202, 0
    %v1222 = vsel %vm464, %v347, 0
    %1224 = vmatprep.subr.mxu0 0.0
    %1225 = vmatpush1.msra.mxu0 0.0
    %1226 = vmatprep.subr.mxu0 0.0
    %1227 = vmatpush1.msra.mxu0 0.0
    %1228 = vmatprep.subr.mxu0 0.0
    %1229 = vmatpush1.msra.mxu0 0.0
    %1230 = vmatprep.subr.mxu0 0.0
    %1231 = vmatpush1.msra.mxu0 0.0
    %1232 = vmatprep.subr.mxu0 0.0
    %1233 = vmatpush1.msra.mxu0 0.0
    %1234 = vmatprep.subr.mxu0 0.0
    %1235 = vmatpush1.msra.mxu0 0.0
    %1236 = vmatprep.subr.mxu0 0.0
    %1237 = vmatpush1.msra.mxu0 0.0
    %1238 = vmatprep.subr.mxu0 0.0
    %1239 = vmatpush1.msra.mxu0 0.0
    %1240 = vmatprep.subr.mxu0 0.0
    %1241 = vmatpush1.msra.mxu0 0.0
    %1242 = vmatprep.subr.mxu0 0.0
    %1243 = vmatpush1.msra.mxu0 0.0
    %1244 = vmatprep.subr.mxu0 0.0
    %1245 = vmatpush1.msra.mxu0 0.0
    %1246 = vmatprep.subr.mxu0 0.0
    %1247 = vmatpush1.msra.mxu0 0.0
    %1248 = vmatprep.subr.mxu0 0.0
    %1249 = vmatpush1.msra.mxu0 0.0
    %1250 = vmatprep.subr.mxu0 0.0
    %1251 = vmatpush1.msra.mxu0 0.0
    %1252 = vmatprep.subr.mxu0 0.0
    %1253 = vmatpush1.msra.mxu0 0.0
    %1254 = vmatprep.subr.mxu0 0.0
    %1255 = vmatpush1.msra.mxu0 %v1222
    %1256 = vmatprep.subr.mxu0 0.0
    %1257 = vmatpush2.msra.mxu0 0.0
    %1258 = vmatprep.subr.mxu0 0.0
    %1259 = vmatpush2.msra.mxu0 0.0
    %1260 = vmatprep.subr.mxu0 0.0
    %1261 = vmatpush2.msra.mxu0 0.0
    %1262 = vmatprep.subr.mxu0 0.0
    %1263 = vmatpush2.msra.mxu0 0.0
    %1264 = vmatprep.subr.mxu0 0.0
    %1265 = vmatpush2.msra.mxu0 0.0
    %1266 = vmatprep.subr.mxu0 0.0
    %1267 = vmatpush2.msra.mxu0 0.0
    %1268 = vmatprep.subr.mxu0 0.0
    %1269 = vmatpush2.msra.mxu0 0.0
    %1270 = vmatprep.subr.mxu0 0.0
    %1271 = vmatpush2.msra.mxu0 0.0
    %1272 = vmatprep.subr.mxu0 0.0
    %1273 = vmatpush2.msra.mxu0 0.0
    %1274 = vmatprep.subr.mxu0 0.0
    %1275 = vmatpush2.msra.mxu0 0.0
    %1276 = vmatprep.subr.mxu0 0.0
    %1277 = vmatpush2.msra.mxu0 0.0
    %1278 = vmatprep.subr.mxu0 0.0
    %1279 = vmatpush2.msra.mxu0 0.0
    %1280 = vmatprep.subr.mxu0 0.0
    %1281 = vmatpush2.msra.mxu0 0.0
    %1282 = vmatprep.subr.mxu0 0.0
    %1283 = vmatpush2.msra.mxu0 0.0
    %1284 = vmatprep.subr.mxu0 0.0
    %1285 = vmatpush2.msra.mxu0 0.0
    %1286 = vmatprep.subr.mxu0 0.0
    %1287 = vmatpush2.msra.mxu0 0.0
    %1288 = vmatprep.mubr.f32.mxu0 0.0
    %1289 = vmatmul.mubr.f32.gmra.mxu0 %v1219
    %v1290 = vpop.f32.mrf.mxu0
    %v1291 = vadd.f32 0.0, %v1290
    %v1292 = vpop.f32.mrf.mxu0
    %1293 = vdwg.mxu0
    %vm1294 = vcmask 64512
    %v1295 = vsel %vm1294, %v535, -inf
    %1296 = vmax.xlane.f32.xlu0 %v1295
    %v1297 = vpop.xlane.xlu0 %1296
    %v1298 = vsel %vm1294, %v643, -inf
    %1299 = vmax.xlane.f32.xlu0 %v1298
    %v1300 = vpop.xlane.xlu0 %1299
    %v1301 = vsel %vm1294, %v751, -inf
    %1302 = vmax.xlane.f32.xlu0 %v1301
    %v1303 = vpop.xlane.xlu0 %1302
    %v1304 = vsel %vm1294, %v859, -inf
    %1305 = vmax.xlane.f32.xlu0 %v1304
    %v1306 = vpop.xlane.xlu0 %1305
    %v1307 = vsel %vm1294, %v967, -inf
    %1308 = vmax.xlane.f32.xlu0 %v1307
    %v1309 = vpop.xlane.xlu0 %1308
    %v1310 = vsel %vm1294, %v1075, -inf
    %1311 = vmax.xlane.f32.xlu0 %v1310
    %v1312 = vpop.xlane.xlu0 %1311
    %v1313 = vsel %vm1294, %v1183, -inf
    %1314 = vmax.xlane.f32.xlu0 %v1313
    %v1315 = vpop.xlane.xlu0 %1314
    %v1316 = vsel %vm1294, %v1291, -inf
    %1317 = vmax.xlane.f32.xlu0 %v1316
    %v1318 = vpop.xlane.xlu0 %1317
    %v1319 = vsub.f32 %v535, %v1297
    %v1320 = vsub.f32 %v643, %v1300
    %v1321 = vsub.f32 %v751, %v1303
    %v1322 = vsub.f32 %v859, %v1306
    %v1323 = vsub.f32 %v967, %v1309
    %v1324 = vsub.f32 %v1075, %v1312
    %v1325 = vsub.f32 %v1183, %v1315
    %v1326 = vsub.f32 %v1291, %v1318
    %v1327 = vmul.f32 %v1319, 1.442695
    %v1328 = vpow.pop %v1327
    %v1329 = vmul.f32 %v1320, 1.442695
    %v1330 = vpow.pop %v1329
    %v1331 = vmul.f32 %v1321, 1.442695
    %v1332 = vpow.pop %v1331
    %v1333 = vmul.f32 %v1322, 1.442695
    %v1334 = vpow.pop %v1333
    %v1335 = vmul.f32 %v1323, 1.442695
    %v1336 = vpow.pop %v1335
    %v1337 = vmul.f32 %v1324, 1.442695
    %v1338 = vpow.pop %v1337
    %v1339 = vmul.f32 %v1325, 1.442695
    %v1340 = vpow.pop %v1339
    %v1341 = vmul.f32 %v1326, 1.442695
    %v1342 = vpow.pop %v1341
    %v1343 = vsel %vm1294, %v1328, 0.0
    %1344 = vadd.xlane.f32.xlu0 %v1343
    %v1345 = vpop.xlane.xlu0 %1344
    %v1346 = vsel %vm1294, %v1330, 0.0
    %1347 = vadd.xlane.f32.xlu0 %v1346
    %v1348 = vpop.xlane.xlu0 %1347
    %v1349 = vsel %vm1294, %v1332, 0.0
    %1350 = vadd.xlane.f32.xlu0 %v1349
    %v1351 = vpop.xlane.xlu0 %1350
    %v1352 = vsel %vm1294, %v1334, 0.0
    %1353 = vadd.xlane.f32.xlu0 %v1352
    %v1354 = vpop.xlane.xlu0 %1353
    %v1355 = vsel %vm1294, %v1336, 0.0
    %1356 = vadd.xlane.f32.xlu0 %v1355
    %v1357 = vpop.xlane.xlu0 %1356
    %v1358 = vsel %vm1294, %v1338, 0.0
    %1359 = vadd.xlane.f32.xlu0 %v1358
    %v1360 = vpop.xlane.xlu0 %1359
    %v1361 = vsel %vm1294, %v1340, 0.0
    %1362 = vadd.xlane.f32.xlu0 %v1361
    %v1363 = vpop.xlane.xlu0 %1362
    %v1364 = vsel %vm1294, %v1342, 0.0
    %1365 = vadd.xlane.f32.xlu0 %v1364
    %v1366 = vpop.xlane.xlu0 %1365
    %v1367 = vrcp.pop %v1345
    %v1368 = vmul.f32 %v1328, %v1367
    %v1369 = vrcp.pop %v1348
    %v1370 = vmul.f32 %v1330, %v1369
    %v1371 = vrcp.pop %v1351
    %v1372 = vmul.f32 %v1332, %v1371
    %v1373 = vrcp.pop %v1354
    %v1374 = vmul.f32 %v1334, %v1373
    %v1375 = vrcp.pop %v1357
    %v1376 = vmul.f32 %v1336, %v1375
    %v1377 = vrcp.pop %v1360
    %v1378 = vmul.f32 %v1338, %v1377
    %v1379 = vrcp.pop %v1363
    %v1380 = vmul.f32 %v1340, %v1379
    %v1381 = vrcp.pop %v1366
    %v1382 = vmul.f32 %v1342, %v1381
    %v1384 = vsel %vm1294, %v400, 0
    %v1387 = vsel %vm1294, %v1368, 0
    %1389 = vmatprep.subr.mxu0 0.0
    %1390 = vmatpush1.xpose.msra.mxu0 0.0
    %1391 = vmatprep.subr.mxu0 0.0
    %1392 = vmatpush1.xpose.msra.mxu0 0.0
    %1393 = vmatprep.subr.mxu0 0.0
    %1394 = vmatpush1.xpose.msra.mxu0 0.0
    %1395 = vmatprep.subr.mxu0 0.0
    %1396 = vmatpush1.xpose.msra.mxu0 0.0
    %1397 = vmatprep.subr.mxu0 0.0
    %1398 = vmatpush1.xpose.msra.mxu0 0.0
    %1399 = vmatprep.subr.mxu0 0.0
    %1400 = vmatpush1.xpose.msra.mxu0 0.0
    %1401 = vmatprep.subr.mxu0 0.0
    %1402 = vmatpush1.xpose.msra.mxu0 0.0
    %1403 = vmatprep.subr.mxu0 0.0
    %1404 = vmatpush1.xpose.msra.mxu0 0.0
    %1405 = vmatprep.subr.mxu0 0.0
    %1406 = vmatpush1.xpose.msra.mxu0 0.0
    %1407 = vmatprep.subr.mxu0 0.0
    %1408 = vmatpush1.xpose.msra.mxu0 0.0
    %1409 = vmatprep.subr.mxu0 0.0
    %1410 = vmatpush1.xpose.msra.mxu0 0.0
    %1411 = vmatprep.subr.mxu0 0.0
    %1412 = vmatpush1.xpose.msra.mxu0 0.0
    %1413 = vmatprep.subr.mxu0 0.0
    %1414 = vmatpush1.xpose.msra.mxu0 0.0
    %1415 = vmatprep.subr.mxu0 0.0
    %1416 = vmatpush1.xpose.msra.mxu0 0.0
    %1417 = vmatprep.subr.mxu0 0.0
    %1418 = vmatpush1.xpose.msra.mxu0 0.0
    %1419 = vmatprep.subr.mxu0 0.0
    %1420 = vmatpush1.xpose.msra.mxu0 %v1387
    %1421 = vmatprep.subr.mxu0 0.0
    %1422 = vmatpush2.xpose.msra.mxu0 0.0
    %1423 = vmatprep.subr.mxu0 0.0
    %1424 = vmatpush2.xpose.msra.mxu0 0.0
    %1425 = vmatprep.subr.mxu0 0.0
    %1426 = vmatpush2.xpose.msra.mxu0 0.0
    %1427 = vmatprep.subr.mxu0 0.0
    %1428 = vmatpush2.xpose.msra.mxu0 0.0
    %1429 = vmatprep.subr.mxu0 0.0
    %1430 = vmatpush2.xpose.msra.mxu0 0.0
    %1431 = vmatprep.subr.mxu0 0.0
    %1432 = vmatpush2.xpose.msra.mxu0 0.0
    %1433 = vmatprep.subr.mxu0 0.0
    %1434 = vmatpush2.xpose.msra.mxu0 0.0
    %1435 = vmatprep.subr.mxu0 0.0
    %1436 = vmatpush2.xpose.msra.mxu0 0.0
    %1437 = vmatprep.subr.mxu0 0.0
    %1438 = vmatpush2.xpose.msra.mxu0 0.0
    %1439 = vmatprep.subr.mxu0 0.0
    %1440 = vmatpush2.xpose.msra.mxu0 0.0
    %1441 = vmatprep.subr.mxu0 0.0
    %1442 = vmatpush2.xpose.msra.mxu0 0.0
    %1443 = vmatprep.subr.mxu0 0.0
    %1444 = vmatpush2.xpose.msra.mxu0 0.0
    %1445 = vmatprep.subr.mxu0 0.0
    %1446 = vmatpush2.xpose.msra.mxu0 0.0
    %1447 = vmatprep.subr.mxu0 0.0
    %1448 = vmatpush2.xpose.msra.mxu0 0.0
    %1449 = vmatprep.subr.mxu0 0.0
    %1450 = vmatpush2.xpose.msra.mxu0 0.0
    %1451 = vmatprep.subr.mxu0 0.0
    %1452 = vmatpush2.xpose.msra.mxu0 0.0
    %1453 = vmatprep.mubr.f32.mxu0 0.0
    %1454 = vmatmul.mubr.f32.gmra.mxu0 %v1384
    %v1455 = vpop.f32.mrf.mxu0
    %v1456 = vadd.f32 0.0, %v1455
    %v1457 = vpop.f32.mrf.mxu0
    %1458 = vdwg.mxu0
    %v1460 = vsel %vm1294, %v424, 0
    %v1463 = vsel %vm1294, %v1370, 0
    %1465 = vmatprep.subr.mxu0 0.0
    %1466 = vmatpush1.xpose.msra.mxu0 0.0
    %1467 = vmatprep.subr.mxu0 0.0
    %1468 = vmatpush1.xpose.msra.mxu0 0.0
    %1469 = vmatprep.subr.mxu0 0.0
    %1470 = vmatpush1.xpose.msra.mxu0 0.0
    %1471 = vmatprep.subr.mxu0 0.0
    %1472 = vmatpush1.xpose.msra.mxu0 0.0
    %1473 = vmatprep.subr.mxu0 0.0
    %1474 = vmatpush1.xpose.msra.mxu0 0.0
    %1475 = vmatprep.subr.mxu0 0.0
    %1476 = vmatpush1.xpose.msra.mxu0 0.0
    %1477 = vmatprep.subr.mxu0 0.0
    %1478 = vmatpush1.xpose.msra.mxu0 0.0
    %1479 = vmatprep.subr.mxu0 0.0
    %1480 = vmatpush1.xpose.msra.mxu0 0.0
    %1481 = vmatprep.subr.mxu0 0.0
    %1482 = vmatpush1.xpose.msra.mxu0 0.0
    %1483 = vmatprep.subr.mxu0 0.0
    %1484 = vmatpush1.xpose.msra.mxu0 0.0
    %1485 = vmatprep.subr.mxu0 0.0
    %1486 = vmatpush1.xpose.msra.mxu0 0.0
    %1487 = vmatprep.subr.mxu0 0.0
    %1488 = vmatpush1.xpose.msra.mxu0 0.0
    %1489 = vmatprep.subr.mxu0 0.0
    %1490 = vmatpush1.xpose.msra.mxu0 0.0
    %1491 = vmatprep.subr.mxu0 0.0
    %1492 = vmatpush1.xpose.msra.mxu0 0.0
    %1493 = vmatprep.subr.mxu0 0.0
    %1494 = vmatpush1.xpose.msra.mxu0 0.0
    %1495 = vmatprep.subr.mxu0 0.0
    %1496 = vmatpush1.xpose.msra.mxu0 %v1463
    %1497 = vmatprep.subr.mxu0 0.0
    %1498 = vmatpush2.xpose.msra.mxu0 0.0
    %1499 = vmatprep.subr.mxu0 0.0
    %1500 = vmatpush2.xpose.msra.mxu0 0.0
    %1501 = vmatprep.subr.mxu0 0.0
    %1502 = vmatpush2.xpose.msra.mxu0 0.0
    %1503 = vmatprep.subr.mxu0 0.0
    %1504 = vmatpush2.xpose.msra.mxu0 0.0
    %1505 = vmatprep.subr.mxu0 0.0
    %1506 = vmatpush2.xpose.msra.mxu0 0.0
    %1507 = vmatprep.subr.mxu0 0.0
    %1508 = vmatpush2.xpose.msra.mxu0 0.0
    %1509 = vmatprep.subr.mxu0 0.0
    %1510 = vmatpush2.xpose.msra.mxu0 0.0
    %1511 = vmatprep.subr.mxu0 0.0
    %1512 = vmatpush2.xpose.msra.mxu0 0.0
    %1513 = vmatprep.subr.mxu0 0.0
    %1514 = vmatpush2.xpose.msra.mxu0 0.0
    %1515 = vmatprep.subr.mxu0 0.0
    %1516 = vmatpush2.xpose.msra.mxu0 0.0
    %1517 = vmatprep.subr.mxu0 0.0
    %1518 = vmatpush2.xpose.msra.mxu0 0.0
    %1519 = vmatprep.subr.mxu0 0.0
    %1520 = vmatpush2.xpose.msra.mxu0 0.0
    %1521 = vmatprep.subr.mxu0 0.0
    %1522 = vmatpush2.xpose.msra.mxu0 0.0
    %1523 = vmatprep.subr.mxu0 0.0
    %1524 = vmatpush2.xpose.msra.mxu0 0.0
    %1525 = vmatprep.subr.mxu0 0.0
    %1526 = vmatpush2.xpose.msra.mxu0 0.0
    %1527 = vmatprep.subr.mxu0 0.0
    %1528 = vmatpush2.xpose.msra.mxu0 0.0
    %1529 = vmatprep.mubr.f32.mxu0 0.0
    %1530 = vmatmul.mubr.f32.gmra.mxu0 %v1460
    %v1531 = vpop.f32.mrf.mxu0
    %v1532 = vadd.f32 0.0, %v1531
    %v1533 = vpop.f32.mrf.mxu0
    %1534 = vdwg.mxu0
    %v1536 = vsel %vm1294, %v407, 0
    %v1539 = vsel %vm1294, %v1372, 0
    %1541 = vmatprep.subr.mxu0 0.0
    %1542 = vmatpush1.xpose.msra.mxu0 0.0
    %1543 = vmatprep.subr.mxu0 0.0
    %1544 = vmatpush1.xpose.msra.mxu0 0.0
    %1545 = vmatprep.subr.mxu0 0.0
    %1546 = vmatpush1.xpose.msra.mxu0 0.0
    %1547 = vmatprep.subr.mxu0 0.0
    %1548 = vmatpush1.xpose.msra.mxu0 0.0
    %1549 = vmatprep.subr.mxu0 0.0
    %1550 = vmatpush1.xpose.msra.mxu0 0.0
    %1551 = vmatprep.subr.mxu0 0.0
    %1552 = vmatpush1.xpose.msra.mxu0 0.0
    %1553 = vmatprep.subr.mxu0 0.0
    %1554 = vmatpush1.xpose.msra.mxu0 0.0
    %1555 = vmatprep.subr.mxu0 0.0
    %1556 = vmatpush1.xpose.msra.mxu0 0.0
    %1557 = vmatprep.subr.mxu0 0.0
    %1558 = vmatpush1.xpose.msra.mxu0 0.0
    %1559 = vmatprep.subr.mxu0 0.0
    %1560 = vmatpush1.xpose.msra.mxu0 0.0
    %1561 = vmatprep.subr.mxu0 0.0
    %1562 = vmatpush1.xpose.msra.mxu0 0.0
    %1563 = vmatprep.subr.mxu0 0.0
    %1564 = vmatpush1.xpose.msra.mxu0 0.0
    %1565 = vmatprep.subr.mxu0 0.0
    %1566 = vmatpush1.xpose.msra.mxu0 0.0
    %1567 = vmatprep.subr.mxu0 0.0
    %1568 = vmatpush1.xpose.msra.mxu0 0.0
    %1569 = vmatprep.subr.mxu0 0.0
    %1570 = vmatpush1.xpose.msra.mxu0 0.0
    %1571 = vmatprep.subr.mxu0 0.0
    %1572 = vmatpush1.xpose.msra.mxu0 %v1539
    %1573 = vmatprep.subr.mxu0 0.0
    %1574 = vmatpush2.xpose.msra.mxu0 0.0
    %1575 = vmatprep.subr.mxu0 0.0
    %1576 = vmatpush2.xpose.msra.mxu0 0.0
    %1577 = vmatprep.subr.mxu0 0.0
    %1578 = vmatpush2.xpose.msra.mxu0 0.0
    %1579 = vmatprep.subr.mxu0 0.0
    %1580 = vmatpush2.xpose.msra.mxu0 0.0
    %1581 = vmatprep.subr.mxu0 0.0
    %1582 = vmatpush2.xpose.msra.mxu0 0.0
    %1583 = vmatprep.subr.mxu0 0.0
    %1584 = vmatpush2.xpose.msra.mxu0 0.0
    %1585 = vmatprep.subr.mxu0 0.0
    %1586 = vmatpush2.xpose.msra.mxu0 0.0
    %1587 = vmatprep.subr.mxu0 0.0
    %1588 = vmatpush2.xpose.msra.mxu0 0.0
    %1589 = vmatprep.subr.mxu0 0.0
    %1590 = vmatpush2.xpose.msra.mxu0 0.0
    %1591 = vmatprep.subr.mxu0 0.0
    %1592 = vmatpush2.xpose.msra.mxu0 0.0
    %1593 = vmatprep.subr.mxu0 0.0
    %1594 = vmatpush2.xpose.msra.mxu0 0.0
    %1595 = vmatprep.subr.mxu0 0.0
    %1596 = vmatpush2.xpose.msra.mxu0 0.0
    %1597 = vmatprep.subr.mxu0 0.0
    %1598 = vmatpush2.xpose.msra.mxu0 0.0
    %1599 = vmatprep.subr.mxu0 0.0
    %1600 = vmatpush2.xpose.msra.mxu0 0.0
    %1601 = vmatprep.subr.mxu0 0.0
    %1602 = vmatpush2.xpose.msra.mxu0 0.0
    %1603 = vmatprep.subr.mxu0 0.0
    %1604 = vmatpush2.xpose.msra.mxu0 0.0
    %1605 = vmatprep.mubr.f32.mxu0 0.0
    %1606 = vmatmul.mubr.f32.gmra.mxu0 %v1536
    %v1607 = vpop.f32.mrf.mxu0
    %v1608 = vadd.f32 0.0, %v1607
    %v1609 = vpop.f32.mrf.mxu0
    %1610 = vdwg.mxu0
    %v1612 = vsel %vm1294, %v425, 0
    %v1615 = vsel %vm1294, %v1374, 0
    %1617 = vmatprep.subr.mxu0 0.0
    %1618 = vmatpush1.xpose.msra.mxu0 0.0
    %1619 = vmatprep.subr.mxu0 0.0
    %1620 = vmatpush1.xpose.msra.mxu0 0.0
    %1621 = vmatprep.subr.mxu0 0.0
    %1622 = vmatpush1.xpose.msra.mxu0 0.0
    %1623 = vmatprep.subr.mxu0 0.0
    %1624 = vmatpush1.xpose.msra.mxu0 0.0
    %1625 = vmatprep.subr.mxu0 0.0
    %1626 = vmatpush1.xpose.msra.mxu0 0.0
    %1627 = vmatprep.subr.mxu0 0.0
    %1628 = vmatpush1.xpose.msra.mxu0 0.0
    %1629 = vmatprep.subr.mxu0 0.0
    %1630 = vmatpush1.xpose.msra.mxu0 0.0
    %1631 = vmatprep.subr.mxu0 0.0
    %1632 = vmatpush1.xpose.msra.mxu0 0.0
    %1633 = vmatprep.subr.mxu0 0.0
    %1634 = vmatpush1.xpose.msra.mxu0 0.0
    %1635 = vmatprep.subr.mxu0 0.0
    %1636 = vmatpush1.xpose.msra.mxu0 0.0
    %1637 = vmatprep.subr.mxu0 0.0
    %1638 = vmatpush1.xpose.msra.mxu0 0.0
    %1639 = vmatprep.subr.mxu0 0.0
    %1640 = vmatpush1.xpose.msra.mxu0 0.0
    %1641 = vmatprep.subr.mxu0 0.0
    %1642 = vmatpush1.xpose.msra.mxu0 0.0
    %1643 = vmatprep.subr.mxu0 0.0
    %1644 = vmatpush1.xpose.msra.mxu0 0.0
    %1645 = vmatprep.subr.mxu0 0.0
    %1646 = vmatpush1.xpose.msra.mxu0 0.0
    %1647 = vmatprep.subr.mxu0 0.0
    %1648 = vmatpush1.xpose.msra.mxu0 %v1615
    %1649 = vmatprep.subr.mxu0 0.0
    %1650 = vmatpush2.xpose.msra.mxu0 0.0
    %1651 = vmatprep.subr.mxu0 0.0
    %1652 = vmatpush2.xpose.msra.mxu0 0.0
    %1653 = vmatprep.subr.mxu0 0.0
    %1654 = vmatpush2.xpose.msra.mxu0 0.0
    %1655 = vmatprep.subr.mxu0 0.0
    %1656 = vmatpush2.xpose.msra.mxu0 0.0
    %1657 = vmatprep.subr.mxu0 0.0
    %1658 = vmatpush2.xpose.msra.mxu0 0.0
    %1659 = vmatprep.subr.mxu0 0.0
    %1660 = vmatpush2.xpose.msra.mxu0 0.0
    %1661 = vmatprep.subr.mxu0 0.0
    %1662 = vmatpush2.xpose.msra.mxu0 0.0
    %1663 = vmatprep.subr.mxu0 0.0
    %1664 = vmatpush2.xpose.msra.mxu0 0.0
    %1665 = vmatprep.subr.mxu0 0.0
    %1666 = vmatpush2.xpose.msra.mxu0 0.0
    %1667 = vmatprep.subr.mxu0 0.0
    %1668 = vmatpush2.xpose.msra.mxu0 0.0
    %1669 = vmatprep.subr.mxu0 0.0
    %1670 = vmatpush2.xpose.msra.mxu0 0.0
    %1671 = vmatprep.subr.mxu0 0.0
    %1672 = vmatpush2.xpose.msra.mxu0 0.0
    %1673 = vmatprep.subr.mxu0 0.0
    %1674 = vmatpush2.xpose.msra.mxu0 0.0
    %1675 = vmatprep.subr.mxu0 0.0
    %1676 = vmatpush2.xpose.msra.mxu0 0.0
    %1677 = vmatprep.subr.mxu0 0.0
    %1678 = vmatpush2.xpose.msra.mxu0 0.0
    %1679 = vmatprep.subr.mxu0 0.0
    %1680 = vmatpush2.xpose.msra.mxu0 0.0
    %1681 = vmatprep.mubr.f32.mxu0 0.0
    %1682 = vmatmul.mubr.f32.gmra.mxu0 %v1612
    %v1683 = vpop.f32.mrf.mxu0
    %v1684 = vadd.f32 0.0, %v1683
    %v1685 = vpop.f32.mrf.mxu0
    %1686 = vdwg.mxu0
    %v1688 = vsel %vm1294, %v416, 0
    %v1691 = vsel %vm1294, %v1376, 0
    %1693 = vmatprep.subr.mxu0 0.0
    %1694 = vmatpush1.xpose.msra.mxu0 0.0
    %1695 = vmatprep.subr.mxu0 0.0
    %1696 = vmatpush1.xpose.msra.mxu0 0.0
    %1697 = vmatprep.subr.mxu0 0.0
    %1698 = vmatpush1.xpose.msra.mxu0 0.0
    %1699 = vmatprep.subr.mxu0 0.0
    %1700 = vmatpush1.xpose.msra.mxu0 0.0
    %1701 = vmatprep.subr.mxu0 0.0
    %1702 = vmatpush1.xpose.msra.mxu0 0.0
    %1703 = vmatprep.subr.mxu0 0.0
    %1704 = vmatpush1.xpose.msra.mxu0 0.0
    %1705 = vmatprep.subr.mxu0 0.0
    %1706 = vmatpush1.xpose.msra.mxu0 0.0
    %1707 = vmatprep.subr.mxu0 0.0
    %1708 = vmatpush1.xpose.msra.mxu0 0.0
    %1709 = vmatprep.subr.mxu0 0.0
    %1710 = vmatpush1.xpose.msra.mxu0 0.0
    %1711 = vmatprep.subr.mxu0 0.0
    %1712 = vmatpush1.xpose.msra.mxu0 0.0
    %1713 = vmatprep.subr.mxu0 0.0
    %1714 = vmatpush1.xpose.msra.mxu0 0.0
    %1715 = vmatprep.subr.mxu0 0.0
    %1716 = vmatpush1.xpose.msra.mxu0 0.0
    %1717 = vmatprep.subr.mxu0 0.0
    %1718 = vmatpush1.xpose.msra.mxu0 0.0
    %1719 = vmatprep.subr.mxu0 0.0
    %1720 = vmatpush1.xpose.msra.mxu0 0.0
    %1721 = vmatprep.subr.mxu0 0.0
    %1722 = vmatpush1.xpose.msra.mxu0 0.0
    %1723 = vmatprep.subr.mxu0 0.0
    %1724 = vmatpush1.xpose.msra.mxu0 %v1691
    %1725 = vmatprep.subr.mxu0 0.0
    %1726 = vmatpush2.xpose.msra.mxu0 0.0
    %1727 = vmatprep.subr.mxu0 0.0
    %1728 = vmatpush2.xpose.msra.mxu0 0.0
    %1729 = vmatprep.subr.mxu0 0.0
    %1730 = vmatpush2.xpose.msra.mxu0 0.0
    %1731 = vmatprep.subr.mxu0 0.0
    %1732 = vmatpush2.xpose.msra.mxu0 0.0
    %1733 = vmatprep.subr.mxu0 0.0
    %1734 = vmatpush2.xpose.msra.mxu0 0.0
    %1735 = vmatprep.subr.mxu0 0.0
    %1736 = vmatpush2.xpose.msra.mxu0 0.0
    %1737 = vmatprep.subr.mxu0 0.0
    %1738 = vmatpush2.xpose.msra.mxu0 0.0
    %1739 = vmatprep.subr.mxu0 0.0
    %1740 = vmatpush2.xpose.msra.mxu0 0.0
    %1741 = vmatprep.subr.mxu0 0.0
    %1742 = vmatpush2.xpose.msra.mxu0 0.0
    %1743 = vmatprep.subr.mxu0 0.0
    %1744 = vmatpush2.xpose.msra.mxu0 0.0
    %1745 = vmatprep.subr.mxu0 0.0
    %1746 = vmatpush2.xpose.msra.mxu0 0.0
    %1747 = vmatprep.subr.mxu0 0.0
    %1748 = vmatpush2.xpose.msra.mxu0 0.0
    %1749 = vmatprep.subr.mxu0 0.0
    %1750 = vmatpush2.xpose.msra.mxu0 0.0
    %1751 = vmatprep.subr.mxu0 0.0
    %1752 = vmatpush2.xpose.msra.mxu0 0.0
    %1753 = vmatprep.subr.mxu0 0.0
    %1754 = vmatpush2.xpose.msra.mxu0 0.0
    %1755 = vmatprep.subr.mxu0 0.0
    %1756 = vmatpush2.xpose.msra.mxu0 0.0
    %1757 = vmatprep.mubr.f32.mxu0 0.0
    %1758 = vmatmul.mubr.f32.gmra.mxu0 %v1688
    %v1759 = vpop.f32.mrf.mxu0
    %v1760 = vadd.f32 0.0, %v1759
    %v1761 = vpop.f32.mrf.mxu0
    %1762 = vdwg.mxu0
    %v1764 = vsel %vm1294, %v426, 0
    %v1767 = vsel %vm1294, %v1378, 0
    %1769 = vmatprep.subr.mxu0 0.0
    %1770 = vmatpush1.xpose.msra.mxu0 0.0
    %1771 = vmatprep.subr.mxu0 0.0
    %1772 = vmatpush1.xpose.msra.mxu0 0.0
    %1773 = vmatprep.subr.mxu0 0.0
    %1774 = vmatpush1.xpose.msra.mxu0 0.0
    %1775 = vmatprep.subr.mxu0 0.0
    %1776 = vmatpush1.xpose.msra.mxu0 0.0
    %1777 = vmatprep.subr.mxu0 0.0
    %1778 = vmatpush1.xpose.msra.mxu0 0.0
    %1779 = vmatprep.subr.mxu0 0.0
    %1780 = vmatpush1.xpose.msra.mxu0 0.0
    %1781 = vmatprep.subr.mxu0 0.0
    %1782 = vmatpush1.xpose.msra.mxu0 0.0
    %1783 = vmatprep.subr.mxu0 0.0
    %1784 = vmatpush1.xpose.msra.mxu0 0.0
    %1785 = vmatprep.subr.mxu0 0.0
    %1786 = vmatpush1.xpose.msra.mxu0 0.0
    %1787 = vmatprep.subr.mxu0 0.0
    %1788 = vmatpush1.xpose.msra.mxu0 0.0
    %1789 = vmatprep.subr.mxu0 0.0
    %1790 = vmatpush1.xpose.msra.mxu0 0.0
    %1791 = vmatprep.subr.mxu0 0.0
    %1792 = vmatpush1.xpose.msra.mxu0 0.0
    %1793 = vmatprep.subr.mxu0 0.0
    %1794 = vmatpush1.xpose.msra.mxu0 0.0
    %1795 = vmatprep.subr.mxu0 0.0
    %1796 = vmatpush1.xpose.msra.mxu0 0.0
    %1797 = vmatprep.subr.mxu0 0.0
    %1798 = vmatpush1.xpose.msra.mxu0 0.0
    %1799 = vmatprep.subr.mxu0 0.0
    %1800 = vmatpush1.xpose.msra.mxu0 %v1767
    %1801 = vmatprep.subr.mxu0 0.0
    %1802 = vmatpush2.xpose.msra.mxu0 0.0
    %1803 = vmatprep.subr.mxu0 0.0
    %1804 = vmatpush2.xpose.msra.mxu0 0.0
    %1805 = vmatprep.subr.mxu0 0.0
    %1806 = vmatpush2.xpose.msra.mxu0 0.0
    %1807 = vmatprep.subr.mxu0 0.0
    %1808 = vmatpush2.xpose.msra.mxu0 0.0
    %1809 = vmatprep.subr.mxu0 0.0
    %1810 = vmatpush2.xpose.msra.mxu0 0.0
    %1811 = vmatprep.subr.mxu0 0.0
    %1812 = vmatpush2.xpose.msra.mxu0 0.0
    %1813 = vmatprep.subr.mxu0 0.0
    %1814 = vmatpush2.xpose.msra.mxu0 0.0
    %1815 = vmatprep.subr.mxu0 0.0
    %1816 = vmatpush2.xpose.msra.mxu0 0.0
    %1817 = vmatprep.subr.mxu0 0.0
    %1818 = vmatpush2.xpose.msra.mxu0 0.0
    %1819 = vmatprep.subr.mxu0 0.0
    %1820 = vmatpush2.xpose.msra.mxu0 0.0
    %1821 = vmatprep.subr.mxu0 0.0
    %1822 = vmatpush2.xpose.msra.mxu0 0.0
    %1823 = vmatprep.subr.mxu0 0.0
    %1824 = vmatpush2.xpose.msra.mxu0 0.0
    %1825 = vmatprep.subr.mxu0 0.0
    %1826 = vmatpush2.xpose.msra.mxu0 0.0
    %1827 = vmatprep.subr.mxu0 0.0
    %1828 = vmatpush2.xpose.msra.mxu0 0.0
    %1829 = vmatprep.subr.mxu0 0.0
    %1830 = vmatpush2.xpose.msra.mxu0 0.0
    %1831 = vmatprep.subr.mxu0 0.0
    %1832 = vmatpush2.xpose.msra.mxu0 0.0
    %1833 = vmatprep.mubr.f32.mxu0 0.0
    %1834 = vmatmul.mubr.f32.gmra.mxu0 %v1764
    %v1835 = vpop.f32.mrf.mxu0
    %v1836 = vadd.f32 0.0, %v1835
    %v1837 = vpop.f32.mrf.mxu0
    %1838 = vdwg.mxu0
    %v1840 = vsel %vm1294, %v423, 0
    %v1843 = vsel %vm1294, %v1380, 0
    %1845 = vmatprep.subr.mxu0 0.0
    %1846 = vmatpush1.xpose.msra.mxu0 0.0
    %1847 = vmatprep.subr.mxu0 0.0
    %1848 = vmatpush1.xpose.msra.mxu0 0.0
    %1849 = vmatprep.subr.mxu0 0.0
    %1850 = vmatpush1.xpose.msra.mxu0 0.0
    %1851 = vmatprep.subr.mxu0 0.0
    %1852 = vmatpush1.xpose.msra.mxu0 0.0
    %1853 = vmatprep.subr.mxu0 0.0
    %1854 = vmatpush1.xpose.msra.mxu0 0.0
    %1855 = vmatprep.subr.mxu0 0.0
    %1856 = vmatpush1.xpose.msra.mxu0 0.0
    %1857 = vmatprep.subr.mxu0 0.0
    %1858 = vmatpush1.xpose.msra.mxu0 0.0
    %1859 = vmatprep.subr.mxu0 0.0
    %1860 = vmatpush1.xpose.msra.mxu0 0.0
    %1861 = vmatprep.subr.mxu0 0.0
    %1862 = vmatpush1.xpose.msra.mxu0 0.0
    %1863 = vmatprep.subr.mxu0 0.0
    %1864 = vmatpush1.xpose.msra.mxu0 0.0
    %1865 = vmatprep.subr.mxu0 0.0
    %1866 = vmatpush1.xpose.msra.mxu0 0.0
    %1867 = vmatprep.subr.mxu0 0.0
    %1868 = vmatpush1.xpose.msra.mxu0 0.0
    %1869 = vmatprep.subr.mxu0 0.0
    %1870 = vmatpush1.xpose.msra.mxu0 0.0
    %1871 = vmatprep.subr.mxu0 0.0
    %1872 = vmatpush1.xpose.msra.mxu0 0.0
    %1873 = vmatprep.subr.mxu0 0.0
    %1874 = vmatpush1.xpose.msra.mxu0 0.0
    %1875 = vmatprep.subr.mxu0 0.0
    %1876 = vmatpush1.xpose.msra.mxu0 %v1843
    %1877 = vmatprep.subr.mxu0 0.0
    %1878 = vmatpush2.xpose.msra.mxu0 0.0
    %1879 = vmatprep.subr.mxu0 0.0
    %1880 = vmatpush2.xpose.msra.mxu0 0.0
    %1881 = vmatprep.subr.mxu0 0.0
    %1882 = vmatpush2.xpose.msra.mxu0 0.0
    %1883 = vmatprep.subr.mxu0 0.0
    %1884 = vmatpush2.xpose.msra.mxu0 0.0
    %1885 = vmatprep.subr.mxu0 0.0
    %1886 = vmatpush2.xpose.msra.mxu0 0.0
    %1887 = vmatprep.subr.mxu0 0.0
    %1888 = vmatpush2.xpose.msra.mxu0 0.0
    %1889 = vmatprep.subr.mxu0 0.0
    %1890 = vmatpush2.xpose.msra.mxu0 0.0
    %1891 = vmatprep.subr.mxu0 0.0
    %1892 = vmatpush2.xpose.msra.mxu0 0.0
    %1893 = vmatprep.subr.mxu0 0.0
    %1894 = vmatpush2.xpose.msra.mxu0 0.0
    %1895 = vmatprep.subr.mxu0 0.0
    %1896 = vmatpush2.xpose.msra.mxu0 0.0
    %1897 = vmatprep.subr.mxu0 0.0
    %1898 = vmatpush2.xpose.msra.mxu0 0.0
    %1899 = vmatprep.subr.mxu0 0.0
    %1900 = vmatpush2.xpose.msra.mxu0 0.0
    %1901 = vmatprep.subr.mxu0 0.0
    %1902 = vmatpush2.xpose.msra.mxu0 0.0
    %1903 = vmatprep.subr.mxu0 0.0
    %1904 = vmatpush2.xpose.msra.mxu0 0.0
    %1905 = vmatprep.subr.mxu0 0.0
    %1906 = vmatpush2.xpose.msra.mxu0 0.0
    %1907 = vmatprep.subr.mxu0 0.0
    %1908 = vmatpush2.xpose.msra.mxu0 0.0
    %1909 = vmatprep.mubr.f32.mxu0 0.0
    %1910 = vmatmul.mubr.f32.gmra.mxu0 %v1840
    %v1911 = vpop.f32.mrf.mxu0
    %v1912 = vadd.f32 0.0, %v1911
    %v1913 = vpop.f32.mrf.mxu0
    %1914 = vdwg.mxu0
    %v1916 = vsel %vm1294, %v427, 0
    %v1919 = vsel %vm1294, %v1382, 0
    %1921 = vmatprep.subr.mxu0 0.0
    %1922 = vmatpush1.xpose.msra.mxu0 0.0
    %1923 = vmatprep.subr.mxu0 0.0
    %1924 = vmatpush1.xpose.msra.mxu0 0.0
    %1925 = vmatprep.subr.mxu0 0.0
    %1926 = vmatpush1.xpose.msra.mxu0 0.0
    %1927 = vmatprep.subr.mxu0 0.0
    %1928 = vmatpush1.xpose.msra.mxu0 0.0
    %1929 = vmatprep.subr.mxu0 0.0
    %1930 = vmatpush1.xpose.msra.mxu0 0.0
    %1931 = vmatprep.subr.mxu0 0.0
    %1932 = vmatpush1.xpose.msra.mxu0 0.0
    %1933 = vmatprep.subr.mxu0 0.0
    %1934 = vmatpush1.xpose.msra.mxu0 0.0
    %1935 = vmatprep.subr.mxu0 0.0
    %1936 = vmatpush1.xpose.msra.mxu0 0.0
    %1937 = vmatprep.subr.mxu0 0.0
    %1938 = vmatpush1.xpose.msra.mxu0 0.0
    %1939 = vmatprep.subr.mxu0 0.0
    %1940 = vmatpush1.xpose.msra.mxu0 0.0
    %1941 = vmatprep.subr.mxu0 0.0
    %1942 = vmatpush1.xpose.msra.mxu0 0.0
    %1943 = vmatprep.subr.mxu0 0.0
    %1944 = vmatpush1.xpose.msra.mxu0 0.0
    %1945 = vmatprep.subr.mxu0 0.0
    %1946 = vmatpush1.xpose.msra.mxu0 0.0
    %1947 = vmatprep.subr.mxu0 0.0
    %1948 = vmatpush1.xpose.msra.mxu0 0.0
    %1949 = vmatprep.subr.mxu0 0.0
    %1950 = vmatpush1.xpose.msra.mxu0 0.0
    %1951 = vmatprep.subr.mxu0 0.0
    %1952 = vmatpush1.xpose.msra.mxu0 %v1919
    %1953 = vmatprep.subr.mxu0 0.0
    %1954 = vmatpush2.xpose.msra.mxu0 0.0
    %1955 = vmatprep.subr.mxu0 0.0
    %1956 = vmatpush2.xpose.msra.mxu0 0.0
    %1957 = vmatprep.subr.mxu0 0.0
    %1958 = vmatpush2.xpose.msra.mxu0 0.0
    %1959 = vmatprep.subr.mxu0 0.0
    %1960 = vmatpush2.xpose.msra.mxu0 0.0
    %1961 = vmatprep.subr.mxu0 0.0
    %1962 = vmatpush2.xpose.msra.mxu0 0.0
    %1963 = vmatprep.subr.mxu0 0.0
    %1964 = vmatpush2.xpose.msra.mxu0 0.0
    %1965 = vmatprep.subr.mxu0 0.0
    %1966 = vmatpush2.xpose.msra.mxu0 0.0
    %1967 = vmatprep.subr.mxu0 0.0
    %1968 = vmatpush2.xpose.msra.mxu0 0.0
    %1969 = vmatprep.subr.mxu0 0.0
    %1970 = vmatpush2.xpose.msra.mxu0 0.0
    %1971 = vmatprep.subr.mxu0 0.0
    %1972 = vmatpush2.xpose.msra.mxu0 0.0
    %1973 = vmatprep.subr.mxu0 0.0
    %1974 = vmatpush2.xpose.msra.mxu0 0.0
    %1975 = vmatprep.subr.mxu0 0.0
    %1976 = vmatpush2.xpose.msra.mxu0 0.0
    %1977 = vmatprep.subr.mxu0 0.0
    %1978 = vmatpush2.xpose.msra.mxu0 0.0
    %1979 = vmatprep.subr.mxu0 0.0
    %1980 = vmatpush2.xpose.msra.mxu0 0.0
    %1981 = vmatprep.subr.mxu0 0.0
    %1982 = vmatpush2.xpose.msra.mxu0 0.0
    %1983 = vmatprep.subr.mxu0 0.0
    %1984 = vmatpush2.xpose.msra.mxu0 0.0
    %1985 = vmatprep.mubr.f32.mxu0 0.0
    %1986 = vmatmul.mubr.f32.gmra.mxu0 %v1916
    %v1987 = vpop.f32.mrf.mxu0
    %v1988 = vadd.f32 0.0, %v1987
    %v1989 = vpop.f32.mrf.mxu0
    %1990 = vdwg.mxu0
    %v1991 = vcombine.low %v1456, %v1608
    %v1993 = vunpack.c.l.s4 1983009808
    %v1994 = vunpack.c.0.s8 %v1993
    %v1995 = vlaneseq
    %v1996 = vshrl.u32 %v1995, 7
    %v1997 = vsub.s32 %v1994, %v1996
    %v1998 = vrot.slane %v1991, %v1997
    %v1999 = vcombine.low %v1532, %v1684
    %v2001 = vunpack.c.l.s4 1983009808
    %v2002 = vunpack.c.0.s8 %v2001
    %v2003 = vlaneseq
    %v2004 = vshrl.u32 %v2003, 7
    %v2005 = vsub.s32 %v2002, %v2004
    %v2006 = vrot.slane %v1999, %v2005
    %v2007 = vcombine.low %v1760, %v1912
    %v2009 = vunpack.c.l.s4 1983009808
    %v2010 = vunpack.c.0.s8 %v2009
    %v2011 = vlaneseq
    %v2012 = vshrl.u32 %v2011, 7
    %v2013 = vsub.s32 %v2010, %v2012
    %v2014 = vrot.slane %v2007, %v2013
    %v2015 = vcombine.low %v1836, %v1988
    %v2017 = vunpack.c.l.s4 1983009808
    %v2018 = vunpack.c.0.s8 %v2017
    %v2019 = vlaneseq
    %v2020 = vshrl.u32 %v2019, 7
    %v2021 = vsub.s32 %v2018, %v2020
    %v2022 = vrot.slane %v2015, %v2021
    %v2023 = vcombine.low %v1998, %v2006
    %v2024 = vcombine.high %v1998, %v2006
    %v2026 = vunpack.c.l.s4 1934713408
    %v2027 = vunpack.c.0.s8 %v2026
    %v2028 = vlaneseq
    %v2029 = vshrl.u32 %v2028, 7
    %v2030 = vsub.s32 %v2027, %v2029
    %v2031 = vrot.slane %v2023, %v2030
    %v2033 = vunpack.c.l.s4 1934713408
    %v2034 = vunpack.c.0.s8 %v2033
    %v2035 = vlaneseq
    %v2036 = vshrl.u32 %v2035, 7
    %v2037 = vsub.s32 %v2034, %v2036
    %v2038 = vrot.slane %v2024, %v2037
    %v2039 = vcombine.low %v2014, %v2022
    %v2040 = vcombine.high %v2014, %v2022
    %v2042 = vunpack.c.l.s4 1934713408
    %v2043 = vunpack.c.0.s8 %v2042
    %v2044 = vlaneseq
    %v2045 = vshrl.u32 %v2044, 7
    %v2046 = vsub.s32 %v2043, %v2045
    %v2047 = vrot.slane %v2039, %v2046
    %v2049 = vunpack.c.l.s4 1934713408
    %v2050 = vunpack.c.0.s8 %v2049
    %v2051 = vlaneseq
    %v2052 = vshrl.u32 %v2051, 7
    %v2053 = vsub.s32 %v2050, %v2052
    %v2054 = vrot.slane %v2040, %v2053
    %v2055 = vcombine.low %v2031, %v2047
    %v2056 = vcombine.high %v2031, %v2047
    %v2057 = vcombine.low %v2038, %v2054
    %v2058 = vcombine.high %v2038, %v2054
    %2060 = vrot.lane.b32.xlu0 %v2056, 8
    %v2061 = vpop.permute.xlu0 %2060
    %2064 = vrot.lane.b32.xlu0 %v2057, 16
    %v2065 = vpop.permute.xlu0 %2064
    %2068 = vrot.lane.b32.xlu0 %v2058, 24
    %v2069 = vpop.permute.xlu0 %2068
    %v2071 = vsel %vm1294, %v2055, %v2061
    %vm2072 = vcmask 130048
    %v2073 = vsel %vm2072, %v2071, %v2065
    %vm2074 = vcmask 195584
    %v2075 = vsel %vm2074, %v2073, %v2069
    %v2076 = vlaneseq
    %v2077 = vshrl.u32 %v2076, 7
    %v2078 = vsub.s32 3, %v2077
    %v2079 = vrot.slane %v87, %v2078
    %v2081 = vsel %vm88, %v2075, 0
    %2083 = vmatprep.subr.mxu0 0.0
    %2084 = vmatpush1.msra.mxu0 0.0
    %2085 = vmatprep.subr.mxu0 0.0
    %2086 = vmatpush1.msra.mxu0 0.0
    %2087 = vmatprep.subr.mxu0 0.0
    %2088 = vmatpush1.msra.mxu0 0.0
    %2089 = vmatprep.subr.mxu0 0.0
    %2090 = vmatpush1.msra.mxu0 0.0
    %2091 = vmatprep.subr.mxu0 0.0
    %2092 = vmatpush1.msra.mxu0 0.0
    %2093 = vmatprep.subr.mxu0 0.0
    %2094 = vmatpush1.msra.mxu0 0.0
    %2095 = vmatprep.subr.mxu0 0.0
    %2096 = vmatpush1.msra.mxu0 0.0
    %2097 = vmatprep.subr.mxu0 0.0
    %2098 = vmatpush1.msra.mxu0 0.0
    %2099 = vmatprep.subr.mxu0 0.0
    %2100 = vmatpush1.msra.mxu0 0.0
    %2101 = vmatprep.subr.mxu0 0.0
    %2102 = vmatpush1.msra.mxu0 0.0
    %2103 = vmatprep.subr.mxu0 0.0
    %2104 = vmatpush1.msra.mxu0 0.0
    %2105 = vmatprep.subr.mxu0 0.0
    %2106 = vmatpush1.msra.mxu0 0.0
    %2107 = vmatprep.subr.mxu0 0.0
    %2108 = vmatpush1.msra.mxu0 %v85
    %2109 = vmatprep.subr.mxu0 0.0
    %2110 = vmatpush1.msra.mxu0 %v82
    %2111 = vmatprep.subr.mxu0 0.0
    %2112 = vmatpush1.msra.mxu0 %v79
    %2113 = vmatprep.subr.mxu0 0.0
    %2114 = vmatpush1.msra.mxu0 %v76
    %2115 = vmatprep.subr.mxu0 0.0
    %2116 = vmatpush2.msra.mxu0 0.0
    %2117 = vmatprep.subr.mxu0 0.0
    %2118 = vmatpush2.msra.mxu0 0.0
    %2119 = vmatprep.subr.mxu0 0.0
    %2120 = vmatpush2.msra.mxu0 0.0
    %2121 = vmatprep.subr.mxu0 0.0
    %2122 = vmatpush2.msra.mxu0 0.0
    %2123 = vmatprep.subr.mxu0 0.0
    %2124 = vmatpush2.msra.mxu0 0.0
    %2125 = vmatprep.subr.mxu0 0.0
    %2126 = vmatpush2.msra.mxu0 0.0
    %2127 = vmatprep.subr.mxu0 0.0
    %2128 = vmatpush2.msra.mxu0 0.0
    %2129 = vmatprep.subr.mxu0 0.0
    %2130 = vmatpush2.msra.mxu0 0.0
    %2131 = vmatprep.subr.mxu0 0.0
    %2132 = vmatpush2.msra.mxu0 0.0
    %2133 = vmatprep.subr.mxu0 0.0
    %2134 = vmatpush2.msra.mxu0 0.0
    %2135 = vmatprep.subr.mxu0 0.0
    %2136 = vmatpush2.msra.mxu0 0.0
    %2137 = vmatprep.subr.mxu0 0.0
    %2138 = vmatpush2.msra.mxu0 0.0
    %2139 = vmatprep.subr.mxu0 0.0
    %2140 = vmatpush2.msra.mxu0 0.0
    %2141 = vmatprep.subr.mxu0 0.0
    %2142 = vmatpush2.msra.mxu0 0.0
    %2143 = vmatprep.subr.mxu0 0.0
    %2144 = vmatpush2.msra.mxu0 0.0
    %2145 = vmatprep.subr.mxu0 0.0
    %2146 = vmatpush2.msra.mxu0 0.0
    %2147 = vmatprep.mubr.f32.mxu0 0.0
    %2148 = vmatmul.mubr.f32.gmra.mxu0 %v2081
    %v2149 = vpop.f32.mrf.mxu0
    %v2150 = vadd.f32 %v2079, %v2149
    %v2151 = vpop.f32.mrf.mxu0
    %2152 = vdwg.mxu0
    %v2153 = vadd.f32 %v2150, %v74
    %v2154 = vsel %vm88, %v2153, 0.0
    %2155 = vadd.xlane.f32.xlu0 %v2154
    %v2156 = vpop.xlane.xlu0 %2155
    %v2157 = vmul.f32 %v2156, %v92
    %v2158 = vsub.f32 %v2153, %v2157
    %v2159 = vmul.f32 %v2158, %v2158
    %v2160 = vsel %vm88, %v2159, 0.0
    %2161 = vadd.xlane.f32.xlu0 %v2160
    %v2162 = vpop.xlane.xlu0 %2161
    %v2163 = vmul.f32 %v2162, %v92
    %v2164 = vadd.f32 %v2163, 1e-06
    %v2165 = vrsqrt.pop %v2164
    %v2166 = vmul.f32 %v2158, %v2165
    %v2167 = vlaneseq
    %v2168 = vshrl.u32 %v2167, 7
    %v2169 = vsub.s32 4, %v2168
    %v2170 = vrot.slane %v87, %v2169
    %v2171 = vmul.f32 %v2166, %v2170
    %v2172 = vlaneseq
    %v2173 = vshrl.u32 %v2172, 7
    %v2174 = vsub.s32 5, %v2173
    %v2175 = vrot.slane %v87, %v2174
    %v2176 = vadd.f32 %v2171, %v2175
    %v2177 = vlaneseq
    %v2178 = vshrl.u32 %v2177, 7
    %v2179 = vsub.s32 6, %v2178
    %v2180 = vrot.slane %v87, %v2179
    %v2182 = vsel %vm88, %v2176, 0
    %2184 = vmatprep.subr.mxu0 0.0
    %2185 = vmatpush1.msra.mxu0 0.0
    %2186 = vmatprep.subr.mxu0 0.0
    %2187 = vmatpush1.msra.mxu0 0.0
    %2188 = vmatprep.subr.mxu0 0.0
    %2189 = vmatpush1.msra.mxu0 0.0
    %2190 = vmatprep.subr.mxu0 0.0
    %2191 = vmatpush1.msra.mxu0 0.0
    %2192 = vmatprep.subr.mxu0 0.0
    %2193 = vmatpush1.msra.mxu0 0.0
    %2194 = vmatprep.subr.mxu0 0.0
    %2195 = vmatpush1.msra.mxu0 0.0
    %2196 = vmatprep.subr.mxu0 0.0
    %2197 = vmatpush1.msra.mxu0 0.0
    %2198 = vmatprep.subr.mxu0 0.0
    %2199 = vmatpush1.msra.mxu0 0.0
    %2200 = vmatprep.subr.mxu0 0.0
    %2201 = vmatpush1.msra.mxu0 0.0
    %2202 = vmatprep.subr.mxu0 0.0
    %2203 = vmatpush1.msra.mxu0 0.0
    %2204 = vmatprep.subr.mxu0 0.0
    %2205 = vmatpush1.msra.mxu0 0.0
    %2206 = vmatprep.subr.mxu0 0.0
    %2207 = vmatpush1.msra.mxu0 0.0
    %2208 = vmatprep.subr.mxu0 0.0
    %2209 = vmatpush1.msra.mxu0 %v86
    %2210 = vmatprep.subr.mxu0 0.0
    %2211 = vmatpush1.msra.mxu0 %v83
    %2212 = vmatprep.subr.mxu0 0.0
    %2213 = vmatpush1.msra.mxu0 %v80
    %2214 = vmatprep.subr.mxu0 0.0
    %2215 = vmatpush1.msra.mxu0 %v77
    %2216 = vmatprep.subr.mxu0 0.0
    %2217 = vmatpush2.msra.mxu0 0.0
    %2218 = vmatprep.subr.mxu0 0.0
    %2219 = vmatpush2.msra.mxu0 0.0
    %2220 = vmatprep.subr.mxu0 0.0
    %2221 = vmatpush2.msra.mxu0 0.0
    %2222 = vmatprep.subr.mxu0 0.0
    %2223 = vmatpush2.msra.mxu0 0.0
    %2224 = vmatprep.subr.mxu0 0.0
    %2225 = vmatpush2.msra.mxu0 0.0
    %2226 = vmatprep.subr.mxu0 0.0
    %2227 = vmatpush2.msra.mxu0 0.0
    %2228 = vmatprep.subr.mxu0 0.0
    %2229 = vmatpush2.msra.mxu0 0.0
    %2230 = vmatprep.subr.mxu0 0.0
    %2231 = vmatpush2.msra.mxu0 0.0
    %2232 = vmatprep.subr.mxu0 0.0
    %2233 = vmatpush2.msra.mxu0 0.0
    %2234 = vmatprep.subr.mxu0 0.0
    %2235 = vmatpush2.msra.mxu0 0.0
    %2236 = vmatprep.subr.mxu0 0.0
    %2237 = vmatpush2.msra.mxu0 0.0
    %2238 = vmatprep.subr.mxu0 0.0
    %2239 = vmatpush2.msra.mxu0 0.0
    %2240 = vmatprep.subr.mxu0 0.0
    %2241 = vmatpush2.msra.mxu0 0.0
    %2242 = vmatprep.subr.mxu0 0.0
    %2243 = vmatpush2.msra.mxu0 0.0
    %2244 = vmatprep.subr.mxu0 0.0
    %2245 = vmatpush2.msra.mxu0 0.0
    %2246 = vmatprep.subr.mxu0 0.0
    %2247 = vmatpush2.msra.mxu0 0.0
    %2248 = vmatprep.mubr.f32.mxu0 0.0
    %2249 = vmatmul.mubr.f32.gmra.mxu0 %v2182
    %v2250 = vpop.f32.mrf.mxu0
    %v2251 = vadd.f32 %v2180, %v2250
    %v2252 = vpop.f32.mrf.mxu0
    %2253 = vdwg.mxu0
    %v2254 = vmul.f32 %v2251, 0.5
    %v2255 = vmul.f32 %v2251, 0.70710677
    %v2256 = verf.f32.pop %v2255
    %v2257 = vadd.f32 %v2256, 1.0
    %v2258 = vmul.f32 %v2254, %v2257
    %v2259 = vld [vmem:[%s2] sm:$0xff]
    %v2260 = vld [vmem:[%s2 + $0x8] sm:$0xff]
    %v2261 = vld [vmem:[%s2 + $0x10] sm:$0xff]
    %v2262 = vld [vmem:[%s2 + $0x18] sm:$0xff]
    %v2263 = vld [vmem:[%s2 + $0x20] sm:$0xff]
    %v2264 = vld [vmem:[%s2 + $0x28] sm:$0xff]
    %v2265 = vld [vmem:[%s2 + $0x30] sm:$0xff]
    %v2266 = vld [vmem:[%s2 + $0x38] sm:$0xff]
    %v2267 = vlaneseq
    %v2268 = vshrl.u32 %v2267, 7
    %v2269 = vsub.s32 7, %v2268
    %v2270 = vrot.slane %v87, %v2269
    %vm2271 = vcmask 523264
    %v2273 = vsel %vm2271, %v2258, 0
    %2275 = vmatprep.subr.mxu0 0.0
    %2276 = vmatpush1.msra.mxu0 0.0
    %2277 = vmatprep.subr.mxu0 0.0
    %2278 = vmatpush1.msra.mxu0 0.0
    %2279 = vmatprep.subr.mxu0 0.0
    %2280 = vmatpush1.msra.mxu0 0.0
    %2281 = vmatprep.subr.mxu0 0.0
    %2282 = vmatpush1.msra.mxu0 0.0
    %2283 = vmatprep.subr.mxu0 0.0
    %2284 = vmatpush1.msra.mxu0 0.0
    %2285 = vmatprep.subr.mxu0 0.0
    %2286 = vmatpush1.msra.mxu0 0.0
    %2287 = vmatprep.subr.mxu0 0.0
    %2288 = vmatpush1.msra.mxu0 0.0
    %2289 = vmatprep.subr.mxu0 0.0
    %2290 = vmatpush1.msra.mxu0 0.0
    %2291 = vmatprep.subr.mxu0 0.0
    %2292 = vmatpush1.msra.mxu0 %v2266
    %2293 = vmatprep.subr.mxu0 0.0
    %2294 = vmatpush1.msra.mxu0 %v2265
    %2295 = vmatprep.subr.mxu0 0.0
    %2296 = vmatpush1.msra.mxu0 %v2264
    %2297 = vmatprep.subr.mxu0 0.0
    %2298 = vmatpush1.msra.mxu0 %v2263
    %2299 = vmatprep.subr.mxu0 0.0
    %2300 = vmatpush1.msra.mxu0 %v2262
    %2301 = vmatprep.subr.mxu0 0.0
    %2302 = vmatpush1.msra.mxu0 %v2261
    %2303 = vmatprep.subr.mxu0 0.0
    %2304 = vmatpush1.msra.mxu0 %v2260
    %2305 = vmatprep.subr.mxu0 0.0
    %2306 = vmatpush1.msra.mxu0 %v2259
    %2307 = vmatprep.subr.mxu0 0.0
    %2308 = vmatpush2.msra.mxu0 0.0
    %2309 = vmatprep.subr.mxu0 0.0
    %2310 = vmatpush2.msra.mxu0 0.0
    %2311 = vmatprep.subr.mxu0 0.0
    %2312 = vmatpush2.msra.mxu0 0.0
    %2313 = vmatprep.subr.mxu0 0.0
    %2314 = vmatpush2.msra.mxu0 0.0
    %2315 = vmatprep.subr.mxu0 0.0
    %2316 = vmatpush2.msra.mxu0 0.0
    %2317 = vmatprep.subr.mxu0 0.0
    %2318 = vmatpush2.msra.mxu0 0.0
    %2319 = vmatprep.subr.mxu0 0.0
    %2320 = vmatpush2.msra.mxu0 0.0
    %2321 = vmatprep.subr.mxu0 0.0
    %2322 = vmatpush2.msra.mxu0 0.0
    %2323 = vmatprep.subr.mxu0 0.0
    %2324 = vmatpush2.msra.mxu0 0.0
    %2325 = vmatprep.subr.mxu0 0.0
    %2326 = vmatpush2.msra.mxu0 0.0
    %2327 = vmatprep.subr.mxu0 0.0
    %2328 = vmatpush2.msra.mxu0 0.0
    %2329 = vmatprep.subr.mxu0 0.0
    %2330 = vmatpush2.msra.mxu0 0.0
    %2331 = vmatprep.subr.mxu0 0.0
    %2332 = vmatpush2.msra.mxu0 0.0
    %2333 = vmatprep.subr.mxu0 0.0
    %2334 = vmatpush2.msra.mxu0 0.0
    %2335 = vmatprep.subr.mxu0 0.0
    %2336 = vmatpush2.msra.mxu0 0.0
    %2337 = vmatprep.subr.mxu0 0.0
    %2338 = vmatpush2.msra.mxu0 0.0
    %2339 = vmatprep.mubr.f32.mxu0 0.0
    %2340 = vmatmul.mubr.f32.gmra.mxu0 %v2273
    %v2341 = vpop.f32.mrf.mxu0
    %v2342 = vadd.f32 %v2270, %v2341
    %v2343 = vpop.f32.mrf.mxu0
    %2344 = vdwg.mxu0
    %v2345 = vadd.f32 %v2342, %v2153
    %s2346 = scalar_lea.vmem %s1, 96
    %v2347 = vld [vmem:[%s2346] sm:$0xff]
    %v2348 = vld [vmem:[%s2346 + $0x8] sm:$0xff]
    %v2349 = vld [vmem:[%s2346 + $0x10] sm:$0xff]
    %v2350 = vld [vmem:[%s2346 + $0x18] sm:$0xff]
    %v2351 = vld [vmem:[%s2346 + $0x20] sm:$0xff]
    %v2352 = vld [vmem:[%s2346 + $0x28] sm:$0xff]
    %v2353 = vld [vmem:[%s2346 + $0x30] sm:$0xff]
    %v2354 = vld [vmem:[%s2346 + $0x38] sm:$0xff]
    %v2355 = vld [vmem:[%s2346 + $0x40] sm:$0xff]
    %v2356 = vld [vmem:[%s2346 + $0x48] sm:$0xff]
    %v2357 = vld [vmem:[%s2346 + $0x50] sm:$0xff]
    %v2358 = vld [vmem:[%s2346 + $0x58] sm:$0xff]
    %s2359 = scalar_lea.vmem [#allocation4], 8
    %v2360 = vld [vmem:[%s2359] sm:$0xff]
    %v2361 = vsel %vm88, %v2345, 0.0
    %2362 = vadd.xlane.f32.xlu0 %v2361
    %v2363 = vpop.xlane.xlu0 %2362
    %v2364 = vmul.f32 %v2363, %v92
    %v2365 = vsub.f32 %v2345, %v2364
    %v2366 = vmul.f32 %v2365, %v2365
    %v2367 = vsel %vm88, %v2366, 0.0
    %2368 = vadd.xlane.f32.xlu0 %v2367
    %v2369 = vpop.xlane.xlu0 %2368
    %v2370 = vmul.f32 %v2369, %v92
    %v2371 = vadd.f32 %v2370, 1e-06
    %v2372 = vrsqrt.pop %v2371
    %v2373 = vmul.f32 %v2365, %v2372
    %v2374 = vlaneseq
    %v2375 = vshrl.u32 %v2374, 7
    %v2376 = vsub.s32 0, %v2375
    %v2377 = vrot.slane %v2360, %v2376
    %v2378 = vmul.f32 %v2373, %v2377
    %v2379 = vlaneseq
    %v2380 = vshrl.u32 %v2379, 7
    %v2381 = vsub.s32 1, %v2380
    %v2382 = vrot.slane %v2360, %v2381
    %v2383 = vadd.f32 %v2378, %v2382
    %v2384 = vlaneseq
    %v2385 = vshrl.u32 %v2384, 7
    %v2386 = vsub.s32 2, %v2385
    %v2387 = vrot.slane %v2360, %v2386
    %v2389 = vsel %vm88, %v2383, 0
    %2391 = vmatprep.subr.mxu0 0.0
    %2392 = vmatpush1.msra.mxu0 0.0
    %2393 = vmatprep.subr.mxu0 0.0
    %2394 = vmatpush1.msra.mxu0 0.0
    %2395 = vmatprep.subr.mxu0 0.0
    %2396 = vmatpush1.msra.mxu0 0.0
    %2397 = vmatprep.subr.mxu0 0.0
    %2398 = vmatpush1.msra.mxu0 0.0
    %2399 = vmatprep.subr.mxu0 0.0
    %2400 = vmatpush1.msra.mxu0 0.0
    %2401 = vmatprep.subr.mxu0 0.0
    %2402 = vmatpush1.msra.mxu0 0.0
    %2403 = vmatprep.subr.mxu0 0.0
    %2404 = vmatpush1.msra.mxu0 0.0
    %2405 = vmatprep.subr.mxu0 0.0
    %2406 = vmatpush1.msra.mxu0 0.0
    %2407 = vmatprep.subr.mxu0 0.0
    %2408 = vmatpush1.msra.mxu0 0.0
    %2409 = vmatprep.subr.mxu0 0.0
    %2410 = vmatpush1.msra.mxu0 0.0
    %2411 = vmatprep.subr.mxu0 0.0
    %2412 = vmatpush1.msra.mxu0 0.0
    %2413 = vmatprep.subr.mxu0 0.0
    %2414 = vmatpush1.msra.mxu0 0.0
    %2415 = vmatprep.subr.mxu0 0.0
    %2416 = vmatpush1.msra.mxu0 %v2356
    %2417 = vmatprep.subr.mxu0 0.0
    %2418 = vmatpush1.msra.mxu0 %v2353
    %2419 = vmatprep.subr.mxu0 0.0
    %2420 = vmatpush1.msra.mxu0 %v2350
    %2421 = vmatprep.subr.mxu0 0.0
    %2422 = vmatpush1.msra.mxu0 %v2347
    %2423 = vmatprep.subr.mxu0 0.0
    %2424 = vmatpush2.msra.mxu0 0.0
    %2425 = vmatprep.subr.mxu0 0.0
    %2426 = vmatpush2.msra.mxu0 0.0
    %2427 = vmatprep.subr.mxu0 0.0
    %2428 = vmatpush2.msra.mxu0 0.0
    %2429 = vmatprep.subr.mxu0 0.0
    %2430 = vmatpush2.msra.mxu0 0.0
    %2431 = vmatprep.subr.mxu0 0.0
    %2432 = vmatpush2.msra.mxu0 0.0
    %2433 = vmatprep.subr.mxu0 0.0
    %2434 = vmatpush2.msra.mxu0 0.0
    %2435 = vmatprep.subr.mxu0 0.0
    %2436 = vmatpush2.msra.mxu0 0.0
    %2437 = vmatprep.subr.mxu0 0.0
    %2438 = vmatpush2.msra.mxu0 0.0
    %2439 = vmatprep.subr.mxu0 0.0
    %2440 = vmatpush2.msra.mxu0 0.0
    %2441 = vmatprep.subr.mxu0 0.0
    %2442 = vmatpush2.msra.mxu0 0.0
    %2443 = vmatprep.subr.mxu0 0.0
    %2444 = vmatpush2.msra.mxu0 0.0
    %2445 = vmatprep.subr.mxu0 0.0
    %2446 = vmatpush2.msra.mxu0 0.0
    %2447 = vmatprep.subr.mxu0 0.0
    %2448 = vmatpush2.msra.mxu0 0.0
    %2449 = vmatprep.subr.mxu0 0.0
    %2450 = vmatpush2.msra.mxu0 0.0
    %2451 = vmatprep.subr.mxu0 0.0
    %2452 = vmatpush2.msra.mxu0 0.0
    %2453 = vmatprep.subr.mxu0 0.0
    %2454 = vmatpush2.msra.mxu0 0.0
    %2455 = vmatprep.mubr.f32.mxu0 0.0
    %2456 = vmatmul.mubr.f32.gmra.mxu0 %v2389
    %v2457 = vpop.f32.mrf.mxu0
    %v2458 = vadd.f32 %v2387, %v2457
    %v2459 = vpop.f32.mrf.mxu0
    %2460 = vdwg.mxu0
    %2462 = vrot.lane.b32.xlu0 %v2458, 120
    %v2463 = vpop.permute.xlu0 %2462
    %2465 = vrot.lane.b32.xlu0 %v2458, 112
    %v2466 = vpop.permute.xlu0 %2465
    %2468 = vrot.lane.b32.xlu0 %v2458, 104
    %v2469 = vpop.permute.xlu0 %2468
    %v2471 = vcombine.low %v2458, %v2466
    %v2472 = vcombine.high %v2458, %v2466
    %v2474 = vunpack.c.l.s4 1983009808
    %v2475 = vunpack.c.0.s8 %v2474
    %v2476 = vlaneseq
    %v2477 = vshrl.u32 %v2476, 7
    %v2478 = vsub.s32 %v2475, %v2477
    %v2479 = vrot.slane %v2471, %v2478
    %v2481 = vunpack.c.l.s4 1983009808
    %v2482 = vunpack.c.0.s8 %v2481
    %v2483 = vlaneseq
    %v2484 = vshrl.u32 %v2483, 7
    %v2485 = vsub.s32 %v2482, %v2484
    %v2486 = vrot.slane %v2472, %v2485
    %v2487 = vcombine.low %v2463, %v2469
    %v2488 = vcombine.high %v2463, %v2469
    %v2490 = vunpack.c.l.s4 1983009808
    %v2491 = vunpack.c.0.s8 %v2490
    %v2492 = vlaneseq
    %v2493 = vshrl.u32 %v2492, 7
    %v2494 = vsub.s32 %v2491, %v2493
    %v2495 = vrot.slane %v2487, %v2494
    %v2497 = vunpack.c.l.s4 1983009808
    %v2498 = vunpack.c.0.s8 %v2497
    %v2499 = vlaneseq
    %v2500 = vshrl.u32 %v2499, 7
    %v2501 = vsub.s32 %v2498, %v2500
    %v2502 = vrot.slane %v2488, %v2501
    %v2503 = vcombine.low %v2479, %v2495
    %v2504 = vcombine.high %v2479, %v2495
    %v2506 = vunpack.c.l.s4 1934713408
    %v2507 = vunpack.c.0.s8 %v2506
    %v2508 = vlaneseq
    %v2509 = vshrl.u32 %v2508, 7
    %v2510 = vsub.s32 %v2507, %v2509
    %v2511 = vrot.slane %v2503, %v2510
    %v2513 = vunpack.c.l.s4 1934713408
    %v2514 = vunpack.c.0.s8 %v2513
    %v2515 = vlaneseq
    %v2516 = vshrl.u32 %v2515, 7
    %v2517 = vsub.s32 %v2514, %v2516
    %v2518 = vrot.slane %v2504, %v2517
    %v2519 = vcombine.low %v2486, %v2502
    %v2520 = vcombine.high %v2486, %v2502
    %v2522 = vunpack.c.l.s4 1934713408
    %v2523 = vunpack.c.0.s8 %v2522
    %v2524 = vlaneseq
    %v2525 = vshrl.u32 %v2524, 7
    %v2526 = vsub.s32 %v2523, %v2525
    %v2527 = vrot.slane %v2519, %v2526
    %v2529 = vunpack.c.l.s4 1934713408
    %v2530 = vunpack.c.0.s8 %v2529
    %v2531 = vlaneseq
    %v2532 = vshrl.u32 %v2531, 7
    %v2533 = vsub.s32 %v2530, %v2532
    %v2534 = vrot.slane %v2520, %v2533
    %v2535 = vcombine.high %v2511, 0.0
    %v2536 = vcombine.high %v2518, 0.0
    %v2537 = vcombine.high %v2527, 0.0
    %v2538 = vcombine.high %v2534, 0.0
    %2539 = vrot.lane.b32.xlu0 %v2458, 96
    %v2540 = vpop.permute.xlu0 %2539
    %2541 = vrot.lane.b32.xlu0 %v2463, 96
    %v2542 = vpop.permute.xlu0 %2541
    %2543 = vrot.lane.b32.xlu0 %v2466, 96
    %v2544 = vpop.permute.xlu0 %2543
    %2545 = vrot.lane.b32.xlu0 %v2469, 96
    %v2546 = vpop.permute.xlu0 %2545
    %v2551 = vcombine.low %v2540, %v2544
    %v2552 = vcombine.high %v2540, %v2544
    %v2554 = vunpack.c.l.s4 1983009808
    %v2555 = vunpack.c.0.s8 %v2554
    %v2556 = vlaneseq
    %v2557 = vshrl.u32 %v2556, 7
    %v2558 = vsub.s32 %v2555, %v2557
    %v2559 = vrot.slane %v2551, %v2558
    %v2561 = vunpack.c.l.s4 1983009808
    %v2562 = vunpack.c.0.s8 %v2561
    %v2563 = vlaneseq
    %v2564 = vshrl.u32 %v2563, 7
    %v2565 = vsub.s32 %v2562, %v2564
    %v2566 = vrot.slane %v2552, %v2565
    %v2567 = vcombine.low %v2542, %v2546
    %v2568 = vcombine.high %v2542, %v2546
    %v2570 = vunpack.c.l.s4 1983009808
    %v2571 = vunpack.c.0.s8 %v2570
    %v2572 = vlaneseq
    %v2573 = vshrl.u32 %v2572, 7
    %v2574 = vsub.s32 %v2571, %v2573
    %v2575 = vrot.slane %v2567, %v2574
    %v2577 = vunpack.c.l.s4 1983009808
    %v2578 = vunpack.c.0.s8 %v2577
    %v2579 = vlaneseq
    %v2580 = vshrl.u32 %v2579, 7
    %v2581 = vsub.s32 %v2578, %v2580
    %v2582 = vrot.slane %v2568, %v2581
    %v2583 = vcombine.low %v2559, %v2575
    %v2584 = vcombine.high %v2559, %v2575
    %v2586 = vunpack.c.l.s4 1934713408
    %v2587 = vunpack.c.0.s8 %v2586
    %v2588 = vlaneseq
    %v2589 = vshrl.u32 %v2588, 7
    %v2590 = vsub.s32 %v2587, %v2589
    %v2591 = vrot.slane %v2583, %v2590
    %v2593 = vunpack.c.l.s4 1934713408
    %v2594 = vunpack.c.0.s8 %v2593
    %v2595 = vlaneseq
    %v2596 = vshrl.u32 %v2595, 7
    %v2597 = vsub.s32 %v2594, %v2596
    %v2598 = vrot.slane %v2584, %v2597
    %v2599 = vcombine.low %v2566, %v2582
    %v2600 = vcombine.high %v2566, %v2582
    %v2602 = vunpack.c.l.s4 1934713408
    %v2603 = vunpack.c.0.s8 %v2602
    %v2604 = vlaneseq
    %v2605 = vshrl.u32 %v2604, 7
    %v2606 = vsub.s32 %v2603, %v2605
    %v2607 = vrot.slane %v2599, %v2606
    %v2609 = vunpack.c.l.s4 1934713408
    %v2610 = vunpack.c.0.s8 %v2609
    %v2611 = vlaneseq
    %v2612 = vshrl.u32 %v2611, 7
    %v2613 = vsub.s32 %v2610, %v2612
    %v2614 = vrot.slane %v2600, %v2613
    %v2615 = vcombine.high %v2591, 0.0
    %v2616 = vcombine.high %v2598, 0.0
    %v2617 = vcombine.high %v2607, 0.0
    %v2618 = vcombine.high %v2614, 0.0
    %2619 = vrot.lane.b32.xlu0 %v2458, 64
    %v2620 = vpop.permute.xlu0 %2619
    %2621 = vrot.lane.b32.xlu0 %v2463, 64
    %v2622 = vpop.permute.xlu0 %2621
    %2623 = vrot.lane.b32.xlu0 %v2466, 64
    %v2624 = vpop.permute.xlu0 %2623
    %2625 = vrot.lane.b32.xlu0 %v2469, 64
    %v2626 = vpop.permute.xlu0 %2625
    %v2631 = vcombine.low %v2620, %v2624
    %v2632 = vcombine.high %v2620, %v2624
    %v2634 = vunpack.c.l.s4 1983009808
    %v2635 = vunpack.c.0.s8 %v2634
    %v2636 = vlaneseq
    %v2637 = vshrl.u32 %v2636, 7
    %v2638 = vsub.s32 %v2635, %v2637
    %v2639 = vrot.slane %v2631, %v2638
    %v2641 = vunpack.c.l.s4 1983009808
    %v2642 = vunpack.c.0.s8 %v2641
    %v2643 = vlaneseq
    %v2644 = vshrl.u32 %v2643, 7
    %v2645 = vsub.s32 %v2642, %v2644
    %v2646 = vrot.slane %v2632, %v2645
    %v2647 = vcombine.low %v2622, %v2626
    %v2648 = vcombine.high %v2622, %v2626
    %v2650 = vunpack.c.l.s4 1983009808
    %v2651 = vunpack.c.0.s8 %v2650
    %v2652 = vlaneseq
    %v2653 = vshrl.u32 %v2652, 7
    %v2654 = vsub.s32 %v2651, %v2653
    %v2655 = vrot.slane %v2647, %v2654
    %v2657 = vunpack.c.l.s4 1983009808
    %v2658 = vunpack.c.0.s8 %v2657
    %v2659 = vlaneseq
    %v2660 = vshrl.u32 %v2659, 7
    %v2661 = vsub.s32 %v2658, %v2660
    %v2662 = vrot.slane %v2648, %v2661
    %v2663 = vcombine.low %v2639, %v2655
    %v2664 = vcombine.high %v2639, %v2655
    %v2666 = vunpack.c.l.s4 1934713408
    %v2667 = vunpack.c.0.s8 %v2666
    %v2668 = vlaneseq
    %v2669 = vshrl.u32 %v2668, 7
    %v2670 = vsub.s32 %v2667, %v2669
    %v2671 = vrot.slane %v2663, %v2670
    %v2673 = vunpack.c.l.s4 1934713408
    %v2674 = vunpack.c.0.s8 %v2673
    %v2675 = vlaneseq
    %v2676 = vshrl.u32 %v2675, 7
    %v2677 = vsub.s32 %v2674, %v2676
    %v2678 = vrot.slane %v2664, %v2677
    %v2679 = vcombine.low %v2646, %v2662
    %v2680 = vcombine.high %v2646, %v2662
    %v2682 = vunpack.c.l.s4 1934713408
    %v2683 = vunpack.c.0.s8 %v2682
    %v2684 = vlaneseq
    %v2685 = vshrl.u32 %v2684, 7
    %v2686 = vsub.s32 %v2683, %v2685
    %v2687 = vrot.slane %v2679, %v2686
    %v2689 = vunpack.c.l.s4 1934713408
    %v2690 = vunpack.c.0.s8 %v2689
    %v2691 = vlaneseq
    %v2692 = vshrl.u32 %v2691, 7
    %v2693 = vsub.s32 %v2690, %v2692
    %v2694 = vrot.slane %v2680, %v2693
    %v2695 = vcombine.high %v2671, 0.0
    %v2696 = vcombine.high %v2678, 0.0
    %v2697 = vcombine.high %v2687, 0.0
    %v2698 = vcombine.high %v2694, 0.0
    %2699 = vxpose.xlu0.b32.start [1/16] %v2511, 128
    %2700 = vxpose.xlu0.b32.cont [2/16] 0.0, 128
    %2701 = vxpose.xlu0.b32.cont [3/16] 0.0, 128
    %2702 = vxpose.xlu0.b32.cont [4/16] 0.0, 128
    %2703 = vxpose.xlu0.b32.cont [5/16] 0.0, 128
    %2704 = vxpose.xlu0.b32.cont [6/16] 0.0, 128
    %2705 = vxpose.xlu0.b32.cont [7/16] 0.0, 128
    %2706 = vxpose.xlu0.b32.cont [8/16] 0.0, 128
    %2707 = vxpose.xlu0.b32.cont [9/16] 0.0, 128
    %2708 = vxpose.xlu0.b32.cont [10/16] 0.0, 128
    %2709 = vxpose.xlu0.b32.cont [11/16] 0.0, 128
    %2710 = vxpose.xlu0.b32.cont [12/16] 0.0, 128
    %2711 = vxpose.xlu0.b32.cont [13/16] 0.0, 128
    %2712 = vxpose.xlu0.b32.cont [14/16] 0.0, 128
    %2713 = vxpose.xlu0.b32.cont [15/16] 0.0, 128
    %2714 = vxpose.xlu0.b32.end [16/16] 0.0, 128
    %v2715 = vpop.trf.xlu0
    %v2716 = vpop.trf.xlu0
    %v2717 = vpop.trf.xlu0
    %v2718 = vpop.trf.xlu0
    %v2719 = vpop.trf.xlu0
    %v2720 = vpop.trf.xlu0
    %v2721 = vpop.trf.xlu0
    %v2722 = vpop.trf.xlu0
    %v2723 = vpop.trf.xlu0
    %v2724 = vpop.trf.xlu0
    %v2725 = vpop.trf.xlu0
    %v2726 = vpop.trf.xlu0
    %v2727 = vpop.trf.xlu0
    %v2728 = vpop.trf.xlu0
    %v2729 = vpop.trf.xlu0
    %v2730 = vpop.trf.xlu0
    %v2732 = vsel %vm460, %v2715, 0
    %v2735 = vsel %vm464, %v2591, 0
    %2737 = vmatprep.subr.mxu0 0.0
    %2738 = vmatpush1.msra.mxu0 0.0
    %2739 = vmatprep.subr.mxu0 0.0
    %2740 = vmatpush1.msra.mxu0 0.0
    %2741 = vmatprep.subr.mxu0 0.0
    %2742 = vmatpush1.msra.mxu0 0.0
    %2743 = vmatprep.subr.mxu0 0.0
    %2744 = vmatpush1.msra.mxu0 0.0
    %2745 = vmatprep.subr.mxu0 0.0
    %2746 = vmatpush1.msra.mxu0 0.0
    %2747 = vmatprep.subr.mxu0 0.0
    %2748 = vmatpush1.msra.mxu0 0.0
    %2749 = vmatprep.subr.mxu0 0.0
    %2750 = vmatpush1.msra.mxu0 0.0
    %2751 = vmatprep.subr.mxu0 0.0
    %2752 = vmatpush1.msra.mxu0 0.0
    %2753 = vmatprep.subr.mxu0 0.0
    %2754 = vmatpush1.msra.mxu0 0.0
    %2755 = vmatprep.subr.mxu0 0.0
    %2756 = vmatpush1.msra.mxu0 0.0
    %2757 = vmatprep.subr.mxu0 0.0
    %2758 = vmatpush1.msra.mxu0 0.0
    %2759 = vmatprep.subr.mxu0 0.0
    %2760 = vmatpush1.msra.mxu0 0.0
    %2761 = vmatprep.subr.mxu0 0.0
    %2762 = vmatpush1.msra.mxu0 0.0
    %2763 = vmatprep.subr.mxu0 0.0
    %2764 = vmatpush1.msra.mxu0 0.0
    %2765 = vmatprep.subr.mxu0 0.0
    %2766 = vmatpush1.msra.mxu0 0.0
    %2767 = vmatprep.subr.mxu0 0.0
    %2768 = vmatpush1.msra.mxu0 %v2735
    %2769 = vmatprep.subr.mxu0 0.0
    %2770 = vmatpush2.msra.mxu0 0.0
    %2771 = vmatprep.subr.mxu0 0.0
    %2772 = vmatpush2.msra.mxu0 0.0
    %2773 = vmatprep.subr.mxu0 0.0
    %2774 = vmatpush2.msra.mxu0 0.0
    %2775 = vmatprep.subr.mxu0 0.0
    %2776 = vmatpush2.msra.mxu0 0.0
    %2777 = vmatprep.subr.mxu0 0.0
    %2778 = vmatpush2.msra.mxu0 0.0
    %2779 = vmatprep.subr.mxu0 0.0
    %2780 = vmatpush2.msra.mxu0 0.0
    %2781 = vmatprep.subr.mxu0 0.0
    %2782 = vmatpush2.msra.mxu0 0.0
    %2783 = vmatprep.subr.mxu0 0.0
    %2784 = vmatpush2.msra.mxu0 0.0
    %2785 = vmatprep.subr.mxu0 0.0
    %2786 = vmatpush2.msra.mxu0 0.0
    %2787 = vmatprep.subr.mxu0 0.0
    %2788 = vmatpush2.msra.mxu0 0.0
    %2789 = vmatprep.subr.mxu0 0.0
    %2790 = vmatpush2.msra.mxu0 0.0
    %2791 = vmatprep.subr.mxu0 0.0
    %2792 = vmatpush2.msra.mxu0 0.0
    %2793 = vmatprep.subr.mxu0 0.0
    %2794 = vmatpush2.msra.mxu0 0.0
    %2795 = vmatprep.subr.mxu0 0.0
    %2796 = vmatpush2.msra.mxu0 0.0
    %2797 = vmatprep.subr.mxu0 0.0
    %2798 = vmatpush2.msra.mxu0 0.0
    %2799 = vmatprep.subr.mxu0 0.0
    %2800 = vmatpush2.msra.mxu0 0.0
    %2801 = vmatprep.mubr.f32.mxu0 0.0
    %2802 = vmatmul.mubr.f32.gmra.mxu0 %v2732
    %v2803 = vpop.f32.mrf.mxu0
    %v2804 = vadd.f32 0.0, %v2803
    %v2805 = vpop.f32.mrf.mxu0
    %2806 = vdwg.mxu0
    %2807 = vxpose.xlu0.b32.start [1/16] %v2535, 128
    %2808 = vxpose.xlu0.b32.cont [2/16] 0.0, 128
    %2809 = vxpose.xlu0.b32.cont [3/16] 0.0, 128
    %2810 = vxpose.xlu0.b32.cont [4/16] 0.0, 128
    %2811 = vxpose.xlu0.b32.cont [5/16] 0.0, 128
    %2812 = vxpose.xlu0.b32.cont [6/16] 0.0, 128
    %2813 = vxpose.xlu0.b32.cont [7/16] 0.0, 128
    %2814 = vxpose.xlu0.b32.cont [8/16] 0.0, 128
    %2815 = vxpose.xlu0.b32.cont [9/16] 0.0, 128
    %2816 = vxpose.xlu0.b32.cont [10/16] 0.0, 128
    %2817 = vxpose.xlu0.b32.cont [11/16] 0.0, 128
    %2818 = vxpose.xlu0.b32.cont [12/16] 0.0, 128
    %2819 = vxpose.xlu0.b32.cont [13/16] 0.0, 128
    %2820 = vxpose.xlu0.b32.cont [14/16] 0.0, 128
    %2821 = vxpose.xlu0.b32.cont [15/16] 0.0, 128
    %2822 = vxpose.xlu0.b32.end [16/16] 0.0, 128
    %v2823 = vpop.trf.xlu0
    %v2824 = vpop.trf.xlu0
    %v2825 = vpop.trf.xlu0
    %v2826 = vpop.trf.xlu0
    %v2827 = vpop.trf.xlu0
    %v2828 = vpop.trf.xlu0
    %v2829 = vpop.trf.xlu0
    %v2830 = vpop.trf.xlu0
    %v2831 = vpop.trf.xlu0
    %v2832 = vpop.trf.xlu0
    %v2833 = vpop.trf.xlu0
    %v2834 = vpop.trf.xlu0
    %v2835 = vpop.trf.xlu0
    %v2836 = vpop.trf.xlu0
    %v2837 = vpop.trf.xlu0
    %v2838 = vpop.trf.xlu0
    %v2840 = vsel %vm460, %v2823, 0
    %v2843 = vsel %vm464, %v2615, 0
    %2845 = vmatprep.subr.mxu0 0.0
    %2846 = vmatpush1.msra.mxu0 0.0
    %2847 = vmatprep.subr.mxu0 0.0
    %2848 = vmatpush1.msra.mxu0 0.0
    %2849 = vmatprep.subr.mxu0 0.0
    %2850 = vmatpush1.msra.mxu0 0.0
    %2851 = vmatprep.subr.mxu0 0.0
    %2852 = vmatpush1.msra.mxu0 0.0
    %2853 = vmatprep.subr.mxu0 0.0
    %2854 = vmatpush1.msra.mxu0 0.0
    %2855 = vmatprep.subr.mxu0 0.0
    %2856 = vmatpush1.msra.mxu0 0.0
    %2857 = vmatprep.subr.mxu0 0.0
    %2858 = vmatpush1.msra.mxu0 0.0
    %2859 = vmatprep.subr.mxu0 0.0
    %2860 = vmatpush1.msra.mxu0 0.0
    %2861 = vmatprep.subr.mxu0 0.0
    %2862 = vmatpush1.msra.mxu0 0.0
    %2863 = vmatprep.subr.mxu0 0.0
    %2864 = vmatpush1.msra.mxu0 0.0
    %2865 = vmatprep.subr.mxu0 0.0
    %2866 = vmatpush1.msra.mxu0 0.0
    %2867 = vmatprep.subr.mxu0 0.0
    %2868 = vmatpush1.msra.mxu0 0.0
    %2869 = vmatprep.subr.mxu0 0.0
    %2870 = vmatpush1.msra.mxu0 0.0
    %2871 = vmatprep.subr.mxu0 0.0
    %2872 = vmatpush1.msra.mxu0 0.0
    %2873 = vmatprep.subr.mxu0 0.0
    %2874 = vmatpush1.msra.mxu0 0.0
    %2875 = vmatprep.subr.mxu0 0.0
    %2876 = vmatpush1.msra.mxu0 %v2843
    %2877 = vmatprep.subr.mxu0 0.0
    %2878 = vmatpush2.msra.mxu0 0.0
    %2879 = vmatprep.subr.mxu0 0.0
    %2880 = vmatpush2.msra.mxu0 0.0
    %2881 = vmatprep.subr.mxu0 0.0
    %2882 = vmatpush2.msra.mxu0 0.0
    %2883 = vmatprep.subr.mxu0 0.0
    %2884 = vmatpush2.msra.mxu0 0.0
    %2885 = vmatprep.subr.mxu0 0.0
    %2886 = vmatpush2.msra.mxu0 0.0
    %2887 = vmatprep.subr.mxu0 0.0
    %2888 = vmatpush2.msra.mxu0 0.0
    %2889 = vmatprep.subr.mxu0 0.0
    %2890 = vmatpush2.msra.mxu0 0.0
    %2891 = vmatprep.subr.mxu0 0.0
    %2892 = vmatpush2.msra.mxu0 0.0
    %2893 = vmatprep.subr.mxu0 0.0
    %2894 = vmatpush2.msra.mxu0 0.0
    %2895 = vmatprep.subr.mxu0 0.0
    %2896 = vmatpush2.msra.mxu0 0.0
    %2897 = vmatprep.subr.mxu0 0.0
    %2898 = vmatpush2.msra.mxu0 0.0
    %2899 = vmatprep.subr.mxu0 0.0
    %2900 = vmatpush2.msra.mxu0 0.0
    %2901 = vmatprep.subr.mxu0 0.0
    %2902 = vmatpush2.msra.mxu0 0.0
    %2903 = vmatprep.subr.mxu0 0.0
    %2904 = vmatpush2.msra.mxu0 0.0
    %2905 = vmatprep.subr.mxu0 0.0
    %2906 = vmatpush2.msra.mxu0 0.0
    %2907 = vmatprep.subr.mxu0 0.0
    %2908 = vmatpush2.msra.mxu0 0.0
    %2909 = vmatprep.mubr.f32.mxu0 0.0
    %2910 = vmatmul.mubr.f32.gmra.mxu0 %v2840
    %v2911 = vpop.f32.mrf.mxu0
    %v2912 = vadd.f32 0.0, %v2911
    %v2913 = vpop.f32.mrf.mxu0
    %2914 = vdwg.mxu0
    %2915 = vxpose.xlu0.b32.start [1/16] %v2518, 128
    %2916 = vxpose.xlu0.b32.cont [2/16] 0.0, 128
    %2917 = vxpose.xlu0.b32.cont [3/16] 0.0, 128
    %2918 = vxpose.xlu0.b32.cont [4/16] 0.0, 128
    %2919 = vxpose.xlu0.b32.cont [5/16] 0.0, 128
    %2920 = vxpose.xlu0.b32.cont [6/16] 0.0, 128
    %2921 = vxpose.xlu0.b32.cont [7/16] 0.0, 128
    %2922 = vxpose.xlu0.b32.cont [8/16] 0.0, 128
    %2923 = vxpose.xlu0.b32.cont [9/16] 0.0, 128
    %2924 = vxpose.xlu0.b32.cont [10/16] 0.0, 128
    %2925 = vxpose.xlu0.b32.cont [11/16] 0.0, 128
    %2926 = vxpose.xlu0.b32.cont [12/16] 0.0, 128
    %2927 = vxpose.xlu0.b32.cont [13/16] 0.0, 128
    %2928 = vxpose.xlu0.b32.cont [14/16] 0.0, 128
    %2929 = vxpose.xlu0.b32.cont [15/16] 0.0, 128
    %2930 = vxpose.xlu0.b32.end [16/16] 0.0, 128
    %v2931 = vpop.trf.xlu0
    %v2932 = vpop.trf.xlu0
    %v2933 = vpop.trf.xlu0
    %v2934 = vpop.trf.xlu0
    %v2935 = vpop.trf.xlu0
    %v2936 = vpop.trf.xlu0
    %v2937 = vpop.trf.xlu0
    %v2938 = vpop.trf.xlu0
    %v2939 = vpop.trf.xlu0
    %v2940 = vpop.trf.xlu0
    %v2941 = vpop.trf.xlu0
    %v2942 = vpop.trf.xlu0
    %v2943 = vpop.trf.xlu0
    %v2944 = vpop.trf.xlu0
    %v2945 = vpop.trf.xlu0
    %v2946 = vpop.trf.xlu0
    %v2948 = vsel %vm460, %v2931, 0
    %v2951 = vsel %vm464, %v2598, 0
    %2953 = vmatprep.subr.mxu0 0.0
    %2954 = vmatpush1.msra.mxu0 0.0
    %2955 = vmatprep.subr.mxu0 0.0
    %2956 = vmatpush1.msra.mxu0 0.0
    %2957 = vmatprep.subr.mxu0 0.0
    %2958 = vmatpush1.msra.mxu0 0.0
    %2959 = vmatprep.subr.mxu0 0.0
    %2960 = vmatpush1.msra.mxu0 0.0
    %2961 = vmatprep.subr.mxu0 0.0
    %2962 = vmatpush1.msra.mxu0 0.0
    %2963 = vmatprep.subr.mxu0 0.0
    %2964 = vmatpush1.msra.mxu0 0.0
    %2965 = vmatprep.subr.mxu0 0.0
    %2966 = vmatpush1.msra.mxu0 0.0
    %2967 = vmatprep.subr.mxu0 0.0
    %2968 = vmatpush1.msra.mxu0 0.0
    %2969 = vmatprep.subr.mxu0 0.0
    %2970 = vmatpush1.msra.mxu0 0.0
    %2971 = vmatprep.subr.mxu0 0.0
    %2972 = vmatpush1.msra.mxu0 0.0
    %2973 = vmatprep.subr.mxu0 0.0
    %2974 = vmatpush1.msra.mxu0 0.0
    %2975 = vmatprep.subr.mxu0 0.0
    %2976 = vmatpush1.msra.mxu0 0.0
    %2977 = vmatprep.subr.mxu0 0.0
    %2978 = vmatpush1.msra.mxu0 0.0
    %2979 = vmatprep.subr.mxu0 0.0
    %2980 = vmatpush1.msra.mxu0 0.0
    %2981 = vmatprep.subr.mxu0 0.0
    %2982 = vmatpush1.msra.mxu0 0.0
    %2983 = vmatprep.subr.mxu0 0.0
    %2984 = vmatpush1.msra.mxu0 %v2951
    %2985 = vmatprep.subr.mxu0 0.0
    %2986 = vmatpush2.msra.mxu0 0.0
    %2987 = vmatprep.subr.mxu0 0.0
    %2988 = vmatpush2.msra.mxu0 0.0
    %2989 = vmatprep.subr.mxu0 0.0
    %2990 = vmatpush2.msra.mxu0 0.0
    %2991 = vmatprep.subr.mxu0 0.0
    %2992 = vmatpush2.msra.mxu0 0.0
    %2993 = vmatprep.subr.mxu0 0.0
    %2994 = vmatpush2.msra.mxu0 0.0
    %2995 = vmatprep.subr.mxu0 0.0
    %2996 = vmatpush2.msra.mxu0 0.0
    %2997 = vmatprep.subr.mxu0 0.0
    %2998 = vmatpush2.msra.mxu0 0.0
    %2999 = vmatprep.subr.mxu0 0.0
    %3000 = vmatpush2.msra.mxu0 0.0
    %3001 = vmatprep.subr.mxu0 0.0
    %3002 = vmatpush2.msra.mxu0 0.0
    %3003 = vmatprep.subr.mxu0 0.0
    %3004 = vmatpush2.msra.mxu0 0.0
    %3005 = vmatprep.subr.mxu0 0.0
    %3006 = vmatpush2.msra.mxu0 0.0
    %3007 = vmatprep.subr.mxu0 0.0
    %3008 = vmatpush2.msra.mxu0 0.0
    %3009 = vmatprep.subr.mxu0 0.0
    %3010 = vmatpush2.msra.mxu0 0.0
    %3011 = vmatprep.subr.mxu0 0.0
    %3012 = vmatpush2.msra.mxu0 0.0
    %3013 = vmatprep.subr.mxu0 0.0
    %3014 = vmatpush2.msra.mxu0 0.0
    %3015 = vmatprep.subr.mxu0 0.0
    %3016 = vmatpush2.msra.mxu0 0.0
    %3017 = vmatprep.mubr.f32.mxu0 0.0
    %3018 = vmatmul.mubr.f32.gmra.mxu0 %v2948
    %v3019 = vpop.f32.mrf.mxu0
    %v3020 = vadd.f32 0.0, %v3019
    %v3021 = vpop.f32.mrf.mxu0
    %3022 = vdwg.mxu0
    %3023 = vxpose.xlu0.b32.start [1/16] %v2536, 128
    %3024 = vxpose.xlu0.b32.cont [2/16] 0.0, 128
    %3025 = vxpose.xlu0.b32.cont [3/16] 0.0, 128
    %3026 = vxpose.xlu0.b32.cont [4/16] 0.0, 128
    %3027 = vxpose.xlu0.b32.cont [5/16] 0.0, 128
    %3028 = vxpose.xlu0.b32.cont [6/16] 0.0, 128
    %3029 = vxpose.xlu0.b32.cont [7/16] 0.0, 128
    %3030 = vxpose.xlu0.b32.cont [8/16] 0.0, 128
    %3031 = vxpose.xlu0.b32.cont [9/16] 0.0, 128
    %3032 = vxpose.xlu0.b32.cont [10/16] 0.0, 128
    %3033 = vxpose.xlu0.b32.cont [11/16] 0.0, 128
    %3034 = vxpose.xlu0.b32.cont [12/16] 0.0, 128
    %3035 = vxpose.xlu0.b32.cont [13/16] 0.0, 128
    %3036 = vxpose.xlu0.b32.cont [14/16] 0.0, 128
    %3037 = vxpose.xlu0.b32.cont [15/16] 0.0, 128
    %3038 = vxpose.xlu0.b32.end [16/16] 0.0, 128
    %v3039 = vpop.trf.xlu0
    %v3040 = vpop.trf.xlu0
    %v3041 = vpop.trf.xlu0
    %v3042 = vpop.trf.xlu0
    %v3043 = vpop.trf.xlu0
    %v3044 = vpop.trf.xlu0
    %v3045 = vpop.trf.xlu0
    %v3046 = vpop.trf.xlu0
    %v3047 = vpop.trf.xlu0
    %v3048 = vpop.trf.xlu0
    %v3049 = vpop.trf.xlu0
    %v3050 = vpop.trf.xlu0
    %v3051 = vpop.trf.xlu0
    %v3052 = vpop.trf.xlu0
    %v3053 = vpop.trf.xlu0
    %v3054 = vpop.trf.xlu0
    %v3056 = vsel %vm460, %v3039, 0
    %v3059 = vsel %vm464, %v2616, 0
    %3061 = vmatprep.subr.mxu0 0.0
    %3062 = vmatpush1.msra.mxu0 0.0
    %3063 = vmatprep.subr.mxu0 0.0
    %3064 = vmatpush1.msra.mxu0 0.0
    %3065 = vmatprep.subr.mxu0 0.0
    %3066 = vmatpush1.msra.mxu0 0.0
    %3067 = vmatprep.subr.mxu0 0.0
    %3068 = vmatpush1.msra.mxu0 0.0
    %3069 = vmatprep.subr.mxu0 0.0
    %3070 = vmatpush1.msra.mxu0 0.0
    %3071 = vmatprep.subr.mxu0 0.0
    %3072 = vmatpush1.msra.mxu0 0.0
    %3073 = vmatprep.subr.mxu0 0.0
    %3074 = vmatpush1.msra.mxu0 0.0
    %3075 = vmatprep.subr.mxu0 0.0
    %3076 = vmatpush1.msra.mxu0 0.0
    %3077 = vmatprep.subr.mxu0 0.0
    %3078 = vmatpush1.msra.mxu0 0.0
    %3079 = vmatprep.subr.mxu0 0.0
    %3080 = vmatpush1.msra.mxu0 0.0
    %3081 = vmatprep.subr.mxu0 0.0
    %3082 = vmatpush1.msra.mxu0 0.0
    %3083 = vmatprep.subr.mxu0 0.0
    %3084 = vmatpush1.msra.mxu0 0.0
    %3085 = vmatprep.subr.mxu0 0.0
    %3086 = vmatpush1.msra.mxu0 0.0
    %3087 = vmatprep.subr.mxu0 0.0
    %3088 = vmatpush1.msra.mxu0 0.0
    %3089 = vmatprep.subr.mxu0 0.0
    %3090 = vmatpush1.msra.mxu0 0.0
    %3091 = vmatprep.subr.mxu0 0.0
    %3092 = vmatpush1.msra.mxu0 %v3059
    %3093 = vmatprep.subr.mxu0 0.0
    %3094 = vmatpush2.msra.mxu0 0.0
    %3095 = vmatprep.subr.mxu0 0.0
    %3096 = vmatpush2.msra.mxu0 0.0
    %3097 = vmatprep.subr.mxu0 0.0
    %3098 = vmatpush2.msra.mxu0 0.0
    %3099 = vmatprep.subr.mxu0 0.0
    %3100 = vmatpush2.msra.mxu0 0.0
    %3101 = vmatprep.subr.mxu0 0.0
    %3102 = vmatpush2.msra.mxu0 0.0
    %3103 = vmatprep.subr.mxu0 0.0
    %3104 = vmatpush2.msra.mxu0 0.0
    %3105 = vmatprep.subr.mxu0 0.0
    %3106 = vmatpush2.msra.mxu0 0.0
    %3107 = vmatprep.subr.mxu0 0.0
    %3108 = vmatpush2.msra.mxu0 0.0
    %3109 = vmatprep.subr.mxu0 0.0
    %3110 = vmatpush2.msra.mxu0 0.0
    %3111 = vmatprep.subr.mxu0 0.0
    %3112 = vmatpush2.msra.mxu0 0.0
    %3113 = vmatprep.subr.mxu0 0.0
    %3114 = vmatpush2.msra.mxu0 0.0
    %3115 = vmatprep.subr.mxu0 0.0
    %3116 = vmatpush2.msra.mxu0 0.0
    %3117 = vmatprep.subr.mxu0 0.0
    %3118 = vmatpush2.msra.mxu0 0.0
    %3119 = vmatprep.subr.mxu0 0.0
    %3120 = vmatpush2.msra.mxu0 0.0
    %3121 = vmatprep.subr.mxu0 0.0
    %3122 = vmatpush2.msra.mxu0 0.0
    %3123 = vmatprep.subr.mxu0 0.0
    %3124 = vmatpush2.msra.mxu0 0.0
    %3125 = vmatprep.mubr.f32.mxu0 0.0
    %3126 = vmatmul.mubr.f32.gmra.mxu0 %v3056
    %v3127 = vpop.f32.mrf.mxu0
    %v3128 = vadd.f32 0.0, %v3127
    %v3129 = vpop.f32.mrf.mxu0
    %3130 = vdwg.mxu0
    %3131 = vxpose.xlu0.b32.start [1/16] %v2527, 128
    %3132 = vxpose.xlu0.b32.cont [2/16] 0.0, 128
    %3133 = vxpose.xlu0.b32.cont [3/16] 0.0, 128
    %3134 = vxpose.xlu0.b32.cont [4/16] 0.0, 128
    %3135 = vxpose.xlu0.b32.cont [5/16] 0.0, 128
    %3136 = vxpose.xlu0.b32.cont [6/16] 0.0, 128
    %3137 = vxpose.xlu0.b32.cont [7/16] 0.0, 128
    %3138 = vxpose.xlu0.b32.cont [8/16] 0.0, 128
    %3139 = vxpose.xlu0.b32.cont [9/16] 0.0, 128
    %3140 = vxpose.xlu0.b32.cont [10/16] 0.0, 128
    %3141 = vxpose.xlu0.b32.cont [11/16] 0.0, 128
    %3142 = vxpose.xlu0.b32.cont [12/16] 0.0, 128
    %3143 = vxpose.xlu0.b32.cont [13/16] 0.0, 128
    %3144 = vxpose.xlu0.b32.cont [14/16] 0.0, 128
    %3145 = vxpose.xlu0.b32.cont [15/16] 0.0, 128
    %3146 = vxpose.xlu0.b32.end [16/16] 0.0, 128
    %v3147 = vpop.trf.xlu0
    %v3148 = vpop.trf.xlu0
    %v3149 = vpop.trf.xlu0
    %v3150 = vpop.trf.xlu0
    %v3151 = vpop.trf.xlu0
    %v3152 = vpop.trf.xlu0
    %v3153 = vpop.trf.xlu0
    %v3154 = vpop.trf.xlu0
    %v3155 = vpop.trf.xlu0
    %v3156 = vpop.trf.xlu0
    %v3157 = vpop.trf.xlu0
    %v3158 = vpop.trf.xlu0
    %v3159 = vpop.trf.xlu0
    %v3160 = vpop.trf.xlu0
    %v3161 = vpop.trf.xlu0
    %v3162 = vpop.trf.xlu0
    %v3164 = vsel %vm460, %v3147, 0
    %v3167 = vsel %vm464, %v2607, 0
    %3169 = vmatprep.subr.mxu0 0.0
    %3170 = vmatpush1.msra.mxu0 0.0
    %3171 = vmatprep.subr.mxu0 0.0
    %3172 = vmatpush1.msra.mxu0 0.0
    %3173 = vmatprep.subr.mxu0 0.0
    %3174 = vmatpush1.msra.mxu0 0.0
    %3175 = vmatprep.subr.mxu0 0.0
    %3176 = vmatpush1.msra.mxu0 0.0
    %3177 = vmatprep.subr.mxu0 0.0
    %3178 = vmatpush1.msra.mxu0 0.0
    %3179 = vmatprep.subr.mxu0 0.0
    %3180 = vmatpush1.msra.mxu0 0.0
    %3181 = vmatprep.subr.mxu0 0.0
    %3182 = vmatpush1.msra.mxu0 0.0
    %3183 = vmatprep.subr.mxu0 0.0
    %3184 = vmatpush1.msra.mxu0 0.0
    %3185 = vmatprep.subr.mxu0 0.0
    %3186 = vmatpush1.msra.mxu0 0.0
    %3187 = vmatprep.subr.mxu0 0.0
    %3188 = vmatpush1.msra.mxu0 0.0
    %3189 = vmatprep.subr.mxu0 0.0
    %3190 = vmatpush1.msra.mxu0 0.0
    %3191 = vmatprep.subr.mxu0 0.0
    %3192 = vmatpush1.msra.mxu0 0.0
    %3193 = vmatprep.subr.mxu0 0.0
    %3194 = vmatpush1.msra.mxu0 0.0
    %3195 = vmatprep.subr.mxu0 0.0
    %3196 = vmatpush1.msra.mxu0 0.0
    %3197 = vmatprep.subr.mxu0 0.0
    %3198 = vmatpush1.msra.mxu0 0.0
    %3199 = vmatprep.subr.mxu0 0.0
    %3200 = vmatpush1.msra.mxu0 %v3167
    %3201 = vmatprep.subr.mxu0 0.0
    %3202 = vmatpush2.msra.mxu0 0.0
    %3203 = vmatprep.subr.mxu0 0.0
    %3204 = vmatpush2.msra.mxu0 0.0
    %3205 = vmatprep.subr.mxu0 0.0
    %3206 = vmatpush2.msra.mxu0 0.0
    %3207 = vmatprep.subr.mxu0 0.0
    %3208 = vmatpush2.msra.mxu0 0.0
    %3209 = vmatprep.subr.mxu0 0.0
    %3210 = vmatpush2.msra.mxu0 0.0
    %3211 = vmatprep.subr.mxu0 0.0
    %3212 = vmatpush2.msra.mxu0 0.0
    %3213 = vmatprep.subr.mxu0 0.0
    %3214 = vmatpush2.msra.mxu0 0.0
    %3215 = vmatprep.subr.mxu0 0.0
    %3216 = vmatpush2.msra.mxu0 0.0
    %3217 = vmatprep.subr.mxu0 0.0
    %3218 = vmatpush2.msra.mxu0 0.0
    %3219 = vmatprep.subr.mxu0 0.0
    %3220 = vmatpush2.msra.mxu0 0.0
    %3221 = vmatprep.subr.mxu0 0.0
    %3222 = vmatpush2.msra.mxu0 0.0
    %3223 = vmatprep.subr.mxu0 0.0
    %3224 = vmatpush2.msra.mxu0 0.0
    %3225 = vmatprep.subr.mxu0 0.0
    %3226 = vmatpush2.msra.mxu0 0.0
    %3227 = vmatprep.subr.mxu0 0.0
    %3228 = vmatpush2.msra.mxu0 0.0
    %3229 = vmatprep.subr.mxu0 0.0
    %3230 = vmatpush2.msra.mxu0 0.0
    %3231 = vmatprep.subr.mxu0 0.0
    %3232 = vmatpush2.msra.mxu0 0.0
    %3233 = vmatprep.mubr.f32.mxu0 0.0
    %3234 = vmatmul.mubr.f32.gmra.mxu0 %v3164
    %v3235 = vpop.f32.mrf.mxu0
    %v3236 = vadd.f32 0.0, %v3235
    %v3237 = vpop.f32.mrf.mxu0
    %3238 = vdwg.mxu0
    %3239 = vxpose.xlu0.b32.start [1/16] %v2537, 128
    %3240 = vxpose.xlu0.b32.cont [2/16] 0.0, 128
    %3241 = vxpose.xlu0.b32.cont [3/16] 0.0, 128
    %3242 = vxpose.xlu0.b32.cont [4/16] 0.0, 128
    %3243 = vxpose.xlu0.b32.cont [5/16] 0.0, 128
    %3244 = vxpose.xlu0.b32.cont [6/16] 0.0, 128
    %3245 = vxpose.xlu0.b32.cont [7/16] 0.0, 128
    %3246 = vxpose.xlu0.b32.cont [8/16] 0.0, 128
    %3247 = vxpose.xlu0.b32.cont [9/16] 0.0, 128
    %3248 = vxpose.xlu0.b32.cont [10/16] 0.0, 128
    %3249 = vxpose.xlu0.b32.cont [11/16] 0.0, 128
    %3250 = vxpose.xlu0.b32.cont [12/16] 0.0, 128
    %3251 = vxpose.xlu0.b32.cont [13/16] 0.0, 128
    %3252 = vxpose.xlu0.b32.cont [14/16] 0.0, 128
    %3253 = vxpose.xlu0.b32.cont [15/16] 0.0, 128
    %3254 = vxpose.xlu0.b32.end [16/16] 0.0, 128
    %v3255 = vpop.trf.xlu0
    %v3256 = vpop.trf.xlu0
    %v3257 = vpop.trf.xlu0
    %v3258 = vpop.trf.xlu0
    %v3259 = vpop.trf.xlu0
    %v3260 = vpop.trf.xlu0
    %v3261 = vpop.trf.xlu0
    %v3262 = vpop.trf.xlu0
    %v3263 = vpop.trf.xlu0
    %v3264 = vpop.trf.xlu0
    %v3265 = vpop.trf.xlu0
    %v3266 = vpop.trf.xlu0
    %v3267 = vpop.trf.xlu0
    %v3268 = vpop.trf.xlu0
    %v3269 = vpop.trf.xlu0
    %v3270 = vpop.trf.xlu0
    %v3272 = vsel %vm460, %v3255, 0
    %v3275 = vsel %vm464, %v2617, 0
    %3277 = vmatprep.subr.mxu0 0.0
    %3278 = vmatpush1.msra.mxu0 0.0
    %3279 = vmatprep.subr.mxu0 0.0
    %3280 = vmatpush1.msra.mxu0 0.0
    %3281 = vmatprep.subr.mxu0 0.0
    %3282 = vmatpush1.msra.mxu0 0.0
    %3283 = vmatprep.subr.mxu0 0.0
    %3284 = vmatpush1.msra.mxu0 0.0
    %3285 = vmatprep.subr.mxu0 0.0
    %3286 = vmatpush1.msra.mxu0 0.0
    %3287 = vmatprep.subr.mxu0 0.0
    %3288 = vmatpush1.msra.mxu0 0.0
    %3289 = vmatprep.subr.mxu0 0.0
    %3290 = vmatpush1.msra.mxu0 0.0
    %3291 = vmatprep.subr.mxu0 0.0
    %3292 = vmatpush1.msra.mxu0 0.0
    %3293 = vmatprep.subr.mxu0 0.0
    %3294 = vmatpush1.msra.mxu0 0.0
    %3295 = vmatprep.subr.mxu0 0.0
    %3296 = vmatpush1.msra.mxu0 0.0
    %3297 = vmatprep.subr.mxu0 0.0
    %3298 = vmatpush1.msra.mxu0 0.0
    %3299 = vmatprep.subr.mxu0 0.0
    %3300 = vmatpush1.msra.mxu0 0.0
    %3301 = vmatprep.subr.mxu0 0.0
    %3302 = vmatpush1.msra.mxu0 0.0
    %3303 = vmatprep.subr.mxu0 0.0
    %3304 = vmatpush1.msra.mxu0 0.0
    %3305 = vmatprep.subr.mxu0 0.0
    %3306 = vmatpush1.msra.mxu0 0.0
    %3307 = vmatprep.subr.mxu0 0.0
    %3308 = vmatpush1.msra.mxu0 %v3275
    %3309 = vmatprep.subr.mxu0 0.0
    %3310 = vmatpush2.msra.mxu0 0.0
    %3311 = vmatprep.subr.mxu0 0.0
    %3312 = vmatpush2.msra.mxu0 0.0
    %3313 = vmatprep.subr.mxu0 0.0
    %3314 = vmatpush2.msra.mxu0 0.0
    %3315 = vmatprep.subr.mxu0 0.0
    %3316 = vmatpush2.msra.mxu0 0.0
    %3317 = vmatprep.subr.mxu0 0.0
    %3318 = vmatpush2.msra.mxu0 0.0
    %3319 = vmatprep.subr.mxu0 0.0
    %3320 = vmatpush2.msra.mxu0 0.0
    %3321 = vmatprep.subr.mxu0 0.0
    %3322 = vmatpush2.msra.mxu0 0.0
    %3323 = vmatprep.subr.mxu0 0.0
    %3324 = vmatpush2.msra.mxu0 0.0
    %3325 = vmatprep.subr.mxu0 0.0
    %3326 = vmatpush2.msra.mxu0 0.0
    %3327 = vmatprep.subr.mxu0 0.0
    %3328 = vmatpush2.msra.mxu0 0.0
    %3329 = vmatprep.subr.mxu0 0.0
    %3330 = vmatpush2.msra.mxu0 0.0
    %3331 = vmatprep.subr.mxu0 0.0
    %3332 = vmatpush2.msra.mxu0 0.0
    %3333 = vmatprep.subr.mxu0 0.0
    %3334 = vmatpush2.msra.mxu0 0.0
    %3335 = vmatprep.subr.mxu0 0.0
    %3336 = vmatpush2.msra.mxu0 0.0
    %3337 = vmatprep.subr.mxu0 0.0
    %3338 = vmatpush2.msra.mxu0 0.0
    %3339 = vmatprep.subr.mxu0 0.0
    %3340 = vmatpush2.msra.mxu0 0.0
    %3341 = vmatprep.mubr.f32.mxu0 0.0
    %3342 = vmatmul.mubr.f32.gmra.mxu0 %v3272
    %v3343 = vpop.f32.mrf.mxu0
    %v3344 = vadd.f32 0.0, %v3343
    %v3345 = vpop.f32.mrf.mxu0
    %3346 = vdwg.mxu0
    %3347 = vxpose.xlu0.b32.start [1/16] %v2534, 128
    %3348 = vxpose.xlu0.b32.cont [2/16] 0.0, 128
    %3349 = vxpose.xlu0.b32.cont [3/16] 0.0, 128
    %3350 = vxpose.xlu0.b32.cont [4/16] 0.0, 128
    %3351 = vxpose.xlu0.b32.cont [5/16] 0.0, 128
    %3352 = vxpose.xlu0.b32.cont [6/16] 0.0, 128
    %3353 = vxpose.xlu0.b32.cont [7/16] 0.0, 128
    %3354 = vxpose.xlu0.b32.cont [8/16] 0.0, 128
    %3355 = vxpose.xlu0.b32.cont [9/16] 0.0, 128
    %3356 = vxpose.xlu0.b32.cont [10/16] 0.0, 128
    %3357 = vxpose.xlu0.b32.cont [11/16] 0.0, 128
    %3358 = vxpose.xlu0.b32.cont [12/16] 0.0, 128
    %3359 = vxpose.xlu0.b32.cont [13/16] 0.0, 128
    %3360 = vxpose.xlu0.b32.cont [14/16] 0.0, 128
    %3361 = vxpose.xlu0.b32.cont [15/16] 0.0, 128
    %3362 = vxpose.xlu0.b32.end [16/16] 0.0, 128
    %v3363 = vpop.trf.xlu0
    %v3364 = vpop.trf.xlu0
    %v3365 = vpop.trf.xlu0
    %v3366 = vpop.trf.xlu0
    %v3367 = vpop.trf.xlu0
    %v3368 = vpop.trf.xlu0
    %v3369 = vpop.trf.xlu0
    %v3370 = vpop.trf.xlu0
    %v3371 = vpop.trf.xlu0
    %v3372 = vpop.trf.xlu0
    %v3373 = vpop.trf.xlu0
    %v3374 = vpop.trf.xlu0
    %v3375 = vpop.trf.xlu0
    %v3376 = vpop.trf.xlu0
    %v3377 = vpop.trf.xlu0
    %v3378 = vpop.trf.xlu0
    %v3380 = vsel %vm460, %v3363, 0
    %v3383 = vsel %vm464, %v2614, 0
    %3385 = vmatprep.subr.mxu0 0.0
    %3386 = vmatpush1.msra.mxu0 0.0
    %3387 = vmatprep.subr.mxu0 0.0
    %3388 = vmatpush1.msra.mxu0 0.0
    %3389 = vmatprep.subr.mxu0 0.0
    %3390 = vmatpush1.msra.mxu0 0.0
    %3391 = vmatprep.subr.mxu0 0.0
    %3392 = vmatpush1.msra.mxu0 0.0
    %3393 = vmatprep.subr.mxu0 0.0
    %3394 = vmatpush1.msra.mxu0 0.0
    %3395 = vmatprep.subr.mxu0 0.0
    %3396 = vmatpush1.msra.mxu0 0.0
    %3397 = vmatprep.subr.mxu0 0.0
    %3398 = vmatpush1.msra.mxu0 0.0
    %3399 = vmatprep.subr.mxu0 0.0
    %3400 = vmatpush1.msra.mxu0 0.0
    %3401 = vmatprep.subr.mxu0 0.0
    %3402 = vmatpush1.msra.mxu0 0.0
    %3403 = vmatprep.subr.mxu0 0.0
    %3404 = vmatpush1.msra.mxu0 0.0
    %3405 = vmatprep.subr.mxu0 0.0
    %3406 = vmatpush1.msra.mxu0 0.0
    %3407 = vmatprep.subr.mxu0 0.0
    %3408 = vmatpush1.msra.mxu0 0.0
    %3409 = vmatprep.subr.mxu0 0.0
    %3410 = vmatpush1.msra.mxu0 0.0
    %3411 = vmatprep.subr.mxu0 0.0
    %3412 = vmatpush1.msra.mxu0 0.0
    %3413 = vmatprep.subr.mxu0 0.0
    %3414 = vmatpush1.msra.mxu0 0.0
    %3415 = vmatprep.subr.mxu0 0.0
    %3416 = vmatpush1.msra.mxu0 %v3383
    %3417 = vmatprep.subr.mxu0 0.0
    %3418 = vmatpush2.msra.mxu0 0.0
    %3419 = vmatprep.subr.mxu0 0.0
    %3420 = vmatpush2.msra.mxu0 0.0
    %3421 = vmatprep.subr.mxu0 0.0
    %3422 = vmatpush2.msra.mxu0 0.0
    %3423 = vmatprep.subr.mxu0 0.0
    %3424 = vmatpush2.msra.mxu0 0.0
    %3425 = vmatprep.subr.mxu0 0.0
    %3426 = vmatpush2.msra.mxu0 0.0
    %3427 = vmatprep.subr.mxu0 0.0
    %3428 = vmatpush2.msra.mxu0 0.0
    %3429 = vmatprep.subr.mxu0 0.0
    %3430 = vmatpush2.msra.mxu0 0.0
    %3431 = vmatprep.subr.mxu0 0.0
    %3432 = vmatpush2.msra.mxu0 0.0
    %3433 = vmatprep.subr.mxu0 0.0
    %3434 = vmatpush2.msra.mxu0 0.0
    %3435 = vmatprep.subr.mxu0 0.0
    %3436 = vmatpush2.msra.mxu0 0.0
    %3437 = vmatprep.subr.mxu0 0.0
    %3438 = vmatpush2.msra.mxu0 0.0
    %3439 = vmatprep.subr.mxu0 0.0
    %3440 = vmatpush2.msra.mxu0 0.0
    %3441 = vmatprep.subr.mxu0 0.0
    %3442 = vmatpush2.msra.mxu0 0.0
    %3443 = vmatprep.subr.mxu0 0.0
    %3444 = vmatpush2.msra.mxu0 0.0
    %3445 = vmatprep.subr.mxu0 0.0
    %3446 = vmatpush2.msra.mxu0 0.0
    %3447 = vmatprep.subr.mxu0 0.0
    %3448 = vmatpush2.msra.mxu0 0.0
    %3449 = vmatprep.mubr.f32.mxu0 0.0
    %3450 = vmatmul.mubr.f32.gmra.mxu0 %v3380
    %v3451 = vpop.f32.mrf.mxu0
    %v3452 = vadd.f32 0.0, %v3451
    %v3453 = vpop.f32.mrf.mxu0
    %3454 = vdwg.mxu0
    %3455 = vxpose.xlu0.b32.start [1/16] %v2538, 128
    %3456 = vxpose.xlu0.b32.cont [2/16] 0.0, 128
    %3457 = vxpose.xlu0.b32.cont [3/16] 0.0, 128
    %3458 = vxpose.xlu0.b32.cont [4/16] 0.0, 128
    %3459 = vxpose.xlu0.b32.cont [5/16] 0.0, 128
    %3460 = vxpose.xlu0.b32.cont [6/16] 0.0, 128
    %3461 = vxpose.xlu0.b32.cont [7/16] 0.0, 128
    %3462 = vxpose.xlu0.b32.cont [8/16] 0.0, 128
    %3463 = vxpose.xlu0.b32.cont [9/16] 0.0, 128
    %3464 = vxpose.xlu0.b32.cont [10/16] 0.0, 128
    %3465 = vxpose.xlu0.b32.cont [11/16] 0.0, 128
    %3466 = vxpose.xlu0.b32.cont [12/16] 0.0, 128
    %3467 = vxpose.xlu0.b32.cont [13/16] 0.0, 128
    %3468 = vxpose.xlu0.b32.cont [14/16] 0.0, 128
    %3469 = vxpose.xlu0.b32.cont [15/16] 0.0, 128
    %3470 = vxpose.xlu0.b32.end [16/16] 0.0, 128
    %v3471 = vpop.trf.xlu0
    %v3472 = vpop.trf.xlu0
    %v3473 = vpop.trf.xlu0
    %v3474 = vpop.trf.xlu0
    %v3475 = vpop.trf.xlu0
    %v3476 = vpop.trf.xlu0
    %v3477 = vpop.trf.xlu0
    %v3478 = vpop.trf.xlu0
    %v3479 = vpop.trf.xlu0
    %v3480 = vpop.trf.xlu0
    %v3481 = vpop.trf.xlu0
    %v3482 = vpop.trf.xlu0
    %v3483 = vpop.trf.xlu0
    %v3484 = vpop.trf.xlu0
    %v3485 = vpop.trf.xlu0
    %v3486 = vpop.trf.xlu0
    %v3488 = vsel %vm460, %v3471, 0
    %v3491 = vsel %vm464, %v2618, 0
    %3493 = vmatprep.subr.mxu0 0.0
    %3494 = vmatpush1.msra.mxu0 0.0
    %3495 = vmatprep.subr.mxu0 0.0
    %3496 = vmatpush1.msra.mxu0 0.0
    %3497 = vmatprep.subr.mxu0 0.0
    %3498 = vmatpush1.msra.mxu0 0.0
    %3499 = vmatprep.subr.mxu0 0.0
    %3500 = vmatpush1.msra.mxu0 0.0
    %3501 = vmatprep.subr.mxu0 0.0
    %3502 = vmatpush1.msra.mxu0 0.0
    %3503 = vmatprep.subr.mxu0 0.0
    %3504 = vmatpush1.msra.mxu0 0.0
    %3505 = vmatprep.subr.mxu0 0.0
    %3506 = vmatpush1.msra.mxu0 0.0
    %3507 = vmatprep.subr.mxu0 0.0
    %3508 = vmatpush1.msra.mxu0 0.0
    %3509 = vmatprep.subr.mxu0 0.0
    %3510 = vmatpush1.msra.mxu0 0.0
    %3511 = vmatprep.subr.mxu0 0.0
    %3512 = vmatpush1.msra.mxu0 0.0
    %3513 = vmatprep.subr.mxu0 0.0
    %3514 = vmatpush1.msra.mxu0 0.0
    %3515 = vmatprep.subr.mxu0 0.0
    %3516 = vmatpush1.msra.mxu0 0.0
    %3517 = vmatprep.subr.mxu0 0.0
    %3518 = vmatpush1.msra.mxu0 0.0
    %3519 = vmatprep.subr.mxu0 0.0
    %3520 = vmatpush1.msra.mxu0 0.0
    %3521 = vmatprep.subr.mxu0 0.0
    %3522 = vmatpush1.msra.mxu0 0.0
    %3523 = vmatprep.subr.mxu0 0.0
    %3524 = vmatpush1.msra.mxu0 %v3491
    %3525 = vmatprep.subr.mxu0 0.0
    %3526 = vmatpush2.msra.mxu0 0.0
    %3527 = vmatprep.subr.mxu0 0.0
    %3528 = vmatpush2.msra.mxu0 0.0
    %3529 = vmatprep.subr.mxu0 0.0
    %3530 = vmatpush2.msra.mxu0 0.0
    %3531 = vmatprep.subr.mxu0 0.0
    %3532 = vmatpush2.msra.mxu0 0.0
    %3533 = vmatprep.subr.mxu0 0.0
    %3534 = vmatpush2.msra.mxu0 0.0
    %3535 = vmatprep.subr.mxu0 0.0
    %3536 = vmatpush2.msra.mxu0 0.0
    %3537 = vmatprep.subr.mxu0 0.0
    %3538 = vmatpush2.msra.mxu0 0.0
    %3539 = vmatprep.subr.mxu0 0.0
    %3540 = vmatpush2.msra.mxu0 0.0
    %3541 = vmatprep.subr.mxu0 0.0
    %3542 = vmatpush2.msra.mxu0 0.0
    %3543 = vmatprep.subr.mxu0 0.0
    %3544 = vmatpush2.msra.mxu0 0.0
    %3545 = vmatprep.subr.mxu0 0.0
    %3546 = vmatpush2.msra.mxu0 0.0
    %3547 = vmatprep.subr.mxu0 0.0
    %3548 = vmatpush2.msra.mxu0 0.0
    %3549 = vmatprep.subr.mxu0 0.0
    %3550 = vmatpush2.msra.mxu0 0.0
    %3551 = vmatprep.subr.mxu0 0.0
    %3552 = vmatpush2.msra.mxu0 0.0
    %3553 = vmatprep.subr.mxu0 0.0
    %3554 = vmatpush2.msra.mxu0 0.0
    %3555 = vmatprep.subr.mxu0 0.0
    %3556 = vmatpush2.msra.mxu0 0.0
    %3557 = vmatprep.mubr.f32.mxu0 0.0
    %3558 = vmatmul.mubr.f32.gmra.mxu0 %v3488
    %v3559 = vpop.f32.mrf.mxu0
    %v3560 = vadd.f32 0.0, %v3559
    %v3561 = vpop.f32.mrf.mxu0
    %3562 = vdwg.mxu0
    %v3563 = vsel %vm1294, %v2804, -inf
    %3564 = vmax.xlane.f32.xlu0 %v3563
    %v3565 = vpop.xlane.xlu0 %3564
    %v3566 = vsel %vm1294, %v2912, -inf
    %3567 = vmax.xlane.f32.xlu0 %v3566
    %v3568 = vpop.xlane.xlu0 %3567
    %v3569 = vsel %vm1294, %v3020, -inf
    %3570 = vmax.xlane.f32.xlu0 %v3569
    %v3571 = vpop.xlane.xlu0 %3570
    %v3572 = vsel %vm1294, %v3128, -inf
    %3573 = vmax.xlane.f32.xlu0 %v3572
    %v3574 = vpop.xlane.xlu0 %3573
    %v3575 = vsel %vm1294, %v3236, -inf
    %3576 = vmax.xlane.f32.xlu0 %v3575
    %v3577 = vpop.xlane.xlu0 %3576
    %v3578 = vsel %vm1294, %v3344, -inf
    %3579 = vmax.xlane.f32.xlu0 %v3578
    %v3580 = vpop.xlane.xlu0 %3579
    %v3581 = vsel %vm1294, %v3452, -inf
    %3582 = vmax.xlane.f32.xlu0 %v3581
    %v3583 = vpop.xlane.xlu0 %3582
    %v3584 = vsel %vm1294, %v3560, -inf
    %3585 = vmax.xlane.f32.xlu0 %v3584
    %v3586 = vpop.xlane.xlu0 %3585
    %v3587 = vsub.f32 %v2804, %v3565
    %v3588 = vsub.f32 %v2912, %v3568
    %v3589 = vsub.f32 %v3020, %v3571
    %v3590 = vsub.f32 %v3128, %v3574
    %v3591 = vsub.f32 %v3236, %v3577
    %v3592 = vsub.f32 %v3344, %v3580
    %v3593 = vsub.f32 %v3452, %v3583
    %v3594 = vsub.f32 %v3560, %v3586
    %v3595 = vmul.f32 %v3587, 1.442695
    %v3596 = vpow.pop %v3595
    %v3597 = vmul.f32 %v3588, 1.442695
    %v3598 = vpow.pop %v3597
    %v3599 = vmul.f32 %v3589, 1.442695
    %v3600 = vpow.pop %v3599
    %v3601 = vmul.f32 %v3590, 1.442695
    %v3602 = vpow.pop %v3601
    %v3603 = vmul.f32 %v3591, 1.442695
    %v3604 = vpow.pop %v3603
    %v3605 = vmul.f32 %v3592, 1.442695
    %v3606 = vpow.pop %v3605
    %v3607 = vmul.f32 %v3593, 1.442695
    %v3608 = vpow.pop %v3607
    %v3609 = vmul.f32 %v3594, 1.442695
    %v3610 = vpow.pop %v3609
    %v3611 = vsel %vm1294, %v3596, 0.0
    %3612 = vadd.xlane.f32.xlu0 %v3611
    %v3613 = vpop.xlane.xlu0 %3612
    %v3614 = vsel %vm1294, %v3598, 0.0
    %3615 = vadd.xlane.f32.xlu0 %v3614
    %v3616 = vpop.xlane.xlu0 %3615
    %v3617 = vsel %vm1294, %v3600, 0.0
    %3618 = vadd.xlane.f32.xlu0 %v3617
    %v3619 = vpop.xlane.xlu0 %3618
    %v3620 = vsel %vm1294, %v3602, 0.0
    %3621 = vadd.xlane.f32.xlu0 %v3620
    %v3622 = vpop.xlane.xlu0 %3621
    %v3623 = vsel %vm1294, %v3604, 0.0
    %3624 = vadd.xlane.f32.xlu0 %v3623
    %v3625 = vpop.xlane.xlu0 %3624
    %v3626 = vsel %vm1294, %v3606, 0.0
    %3627 = vadd.xlane.f32.xlu0 %v3626
    %v3628 = vpop.xlane.xlu0 %3627
    %v3629 = vsel %vm1294, %v3608, 0.0
    %3630 = vadd.xlane.f32.xlu0 %v3629
    %v3631 = vpop.xlane.xlu0 %3630
    %v3632 = vsel %vm1294, %v3610, 0.0
    %3633 = vadd.xlane.f32.xlu0 %v3632
    %v3634 = vpop.xlane.xlu0 %3633
    %v3635 = vrcp.pop %v3613
    %v3636 = vmul.f32 %v3596, %v3635
    %v3637 = vrcp.pop %v3616
    %v3638 = vmul.f32 %v3598, %v3637
    %v3639 = vrcp.pop %v3619
    %v3640 = vmul.f32 %v3600, %v3639
    %v3641 = vrcp.pop %v3622
    %v3642 = vmul.f32 %v3602, %v3641
    %v3643 = vrcp.pop %v3625
    %v3644 = vmul.f32 %v3604, %v3643
    %v3645 = vrcp.pop %v3628
    %v3646 = vmul.f32 %v3606, %v3645
    %v3647 = vrcp.pop %v3631
    %v3648 = vmul.f32 %v3608, %v3647
    %v3649 = vrcp.pop %v3634
    %v3650 = vmul.f32 %v3610, %v3649
    %v3652 = vsel %vm1294, %v2671, 0
    %v3655 = vsel %vm1294, %v3636, 0
    %3657 = vmatprep.subr.mxu0 0.0
    %3658 = vmatpush1.xpose.msra.mxu0 0.0
    %3659 = vmatprep.subr.mxu0 0.0
    %3660 = vmatpush1.xpose.msra.mxu0 0.0
    %3661 = vmatprep.subr.mxu0 0.0
    %3662 = vmatpush1.xpose.msra.mxu0 0.0
    %3663 = vmatprep.subr.mxu0 0.0
    %3664 = vmatpush1.xpose.msra.mxu0 0.0
    %3665 = vmatprep.subr.mxu0 0.0
    %3666 = vmatpush1.xpose.msra.mxu0 0.0
    %3667 = vmatprep.subr.mxu0 0.0
    %3668 = vmatpush1.xpose.msra.mxu0 0.0
    %3669 = vmatprep.subr.mxu0 0.0
    %3670 = vmatpush1.xpose.msra.mxu0 0.0
    %3671 = vmatprep.subr.mxu0 0.0
    %3672 = vmatpush1.xpose.msra.mxu0 0.0
    %3673 = vmatprep.subr.mxu0 0.0
    %3674 = vmatpush1.xpose.msra.mxu0 0.0
    %3675 = vmatprep.subr.mxu0 0.0
    %3676 = vmatpush1.xpose.msra.mxu0 0.0
    %3677 = vmatprep.subr.mxu0 0.0
    %3678 = vmatpush1.xpose.msra.mxu0 0.0
    %3679 = vmatprep.subr.mxu0 0.0
    %3680 = vmatpush1.xpose.msra.mxu0 0.0
    %3681 = vmatprep.subr.mxu0 0.0
    %3682 = vmatpush1.xpose.msra.mxu0 0.0
    %3683 = vmatprep.subr.mxu0 0.0
    %3684 = vmatpush1.xpose.msra.mxu0 0.0
    %3685 = vmatprep.subr.mxu0 0.0
    %3686 = vmatpush1.xpose.msra.mxu0 0.0
    %3687 = vmatprep.subr.mxu0 0.0
    %3688 = vmatpush1.xpose.msra.mxu0 %v3655
    %3689 = vmatprep.subr.mxu0 0.0
    %3690 = vmatpush2.xpose.msra.mxu0 0.0
    %3691 = vmatprep.subr.mxu0 0.0
    %3692 = vmatpush2.xpose.msra.mxu0 0.0
    %3693 = vmatprep.subr.mxu0 0.0
    %3694 = vmatpush2.xpose.msra.mxu0 0.0
    %3695 = vmatprep.subr.mxu0 0.0
    %3696 = vmatpush2.xpose.msra.mxu0 0.0
    %3697 = vmatprep.subr.mxu0 0.0
    %3698 = vmatpush2.xpose.msra.mxu0 0.0
    %3699 = vmatprep.subr.mxu0 0.0
    %3700 = vmatpush2.xpose.msra.mxu0 0.0
    %3701 = vmatprep.subr.mxu0 0.0
    %3702 = vmatpush2.xpose.msra.mxu0 0.0
    %3703 = vmatprep.subr.mxu0 0.0
    %3704 = vmatpush2.xpose.msra.mxu0 0.0
    %3705 = vmatprep.subr.mxu0 0.0
    %3706 = vmatpush2.xpose.msra.mxu0 0.0
    %3707 = vmatprep.subr.mxu0 0.0
    %3708 = vmatpush2.xpose.msra.mxu0 0.0
    %3709 = vmatprep.subr.mxu0 0.0
    %3710 = vmatpush2.xpose.msra.mxu0 0.0
    %3711 = vmatprep.subr.mxu0 0.0
    %3712 = vmatpush2.xpose.msra.mxu0 0.0
    %3713 = vmatprep.subr.mxu0 0.0
    %3714 = vmatpush2.xpose.msra.mxu0 0.0
    %3715 = vmatprep.subr.mxu0 0.0
    %3716 = vmatpush2.xpose.msra.mxu0 0.0
    %3717 = vmatprep.subr.mxu0 0.0
    %3718 = vmatpush2.xpose.msra.mxu0 0.0
    %3719 = vmatprep.subr.mxu0 0.0
    %3720 = vmatpush2.xpose.msra.mxu0 0.0
    %3721 = vmatprep.mubr.f32.mxu0 0.0
    %3722 = vmatmul.mubr.f32.gmra.mxu0 %v3652
    %v3723 = vpop.f32.mrf.mxu0
    %v3724 = vadd.f32 0.0, %v3723
    %v3725 = vpop.f32.mrf.mxu0
    %3726 = vdwg.mxu0
    %v3728 = vsel %vm1294, %v2695, 0
    %v3731 = vsel %vm1294, %v3638, 0
    %3733 = vmatprep.subr.mxu0 0.0
    %3734 = vmatpush1.xpose.msra.mxu0 0.0
    %3735 = vmatprep.subr.mxu0 0.0
    %3736 = vmatpush1.xpose.msra.mxu0 0.0
    %3737 = vmatprep.subr.mxu0 0.0
    %3738 = vmatpush1.xpose.msra.mxu0 0.0
    %3739 = vmatprep.subr.mxu0 0.0
    %3740 = vmatpush1.xpose.msra.mxu0 0.0
    %3741 = vmatprep.subr.mxu0 0.0
    %3742 = vmatpush1.xpose.msra.mxu0 0.0
    %3743 = vmatprep.subr.mxu0 0.0
    %3744 = vmatpush1.xpose.msra.mxu0 0.0
    %3745 = vmatprep.subr.mxu0 0.0
    %3746 = vmatpush1.xpose.msra.mxu0 0.0
    %3747 = vmatprep.subr.mxu0 0.0
    %3748 = vmatpush1.xpose.msra.mxu0 0.0
    %3749 = vmatprep.subr.mxu0 0.0
    %3750 = vmatpush1.xpose.msra.mxu0 0.0
    %3751 = vmatprep.subr.mxu0 0.0
    %3752 = vmatpush1.xpose.msra.mxu0 0.0
    %3753 = vmatprep.subr.mxu0 0.0
    %3754 = vmatpush1.xpose.msra.mxu0 0.0
    %3755 = vmatprep.subr.mxu0 0.0
    %3756 = vmatpush1.xpose.msra.mxu0 0.0
    %3757 = vmatprep.subr.mxu0 0.0
    %3758 = vmatpush1.xpose.msra.mxu0 0.0
    %3759 = vmatprep.subr.mxu0 0.0
    %3760 = vmatpush1.xpose.msra.mxu0 0.0
    %3761 = vmatprep.subr.mxu0 0.0
    %3762 = vmatpush1.xpose.msra.mxu0 0.0
    %3763 = vmatprep.subr.mxu0 0.0
    %3764 = vmatpush1.xpose.msra.mxu0 %v3731
    %3765 = vmatprep.subr.mxu0 0.0
    %3766 = vmatpush2.xpose.msra.mxu0 0.0
    %3767 = vmatprep.subr.mxu0 0.0
    %3768 = vmatpush2.xpose.msra.mxu0 0.0
    %3769 = vmatprep.subr.mxu0 0.0
    %3770 = vmatpush2.xpose.msra.mxu0 0.0
    %3771 = vmatprep.subr.mxu0 0.0
    %3772 = vmatpush2.xpose.msra.mxu0 0.0
    %3773 = vmatprep.subr.mxu0 0.0
    %3774 = vmatpush2.xpose.msra.mxu0 0.0
    %3775 = vmatprep.subr.mxu0 0.0
    %3776 = vmatpush2.xpose.msra.mxu0 0.0
    %3777 = vmatprep.subr.mxu0 0.0
    %3778 = vmatpush2.xpose.msra.mxu0 0.0
    %3779 = vmatprep.subr.mxu0 0.0
    %3780 = vmatpush2.xpose.msra.mxu0 0.0
    %3781 = vmatprep.subr.mxu0 0.0
    %3782 = vmatpush2.xpose.msra.mxu0 0.0
    %3783 = vmatprep.subr.mxu0 0.0
    %3784 = vmatpush2.xpose.msra.mxu0 0.0
    %3785 = vmatprep.subr.mxu0 0.0
    %3786 = vmatpush2.xpose.msra.mxu0 0.0
    %3787 = vmatprep.subr.mxu0 0.0
    %3788 = vmatpush2.xpose.msra.mxu0 0.0
    %3789 = vmatprep.subr.mxu0 0.0
    %3790 = vmatpush2.xpose.msra.mxu0 0.0
    %3791 = vmatprep.subr.mxu0 0.0
    %3792 = vmatpush2.xpose.msra.mxu0 0.0
    %3793 = vmatprep.subr.mxu0 0.0
    %3794 = vmatpush2.xpose.msra.mxu0 0.0
    %3795 = vmatprep.subr.mxu0 0.0
    %3796 = vmatpush2.xpose.msra.mxu0 0.0
    %3797 = vmatprep.mubr.f32.mxu0 0.0
    %3798 = vmatmul.mubr.f32.gmra.mxu0 %v3728
    %v3799 = vpop.f32.mrf.mxu0
    %v3800 = vadd.f32 0.0, %v3799
    %v3801 = vpop.f32.mrf.mxu0
    %3802 = vdwg.mxu0
    %v3804 = vsel %vm1294, %v2678, 0
    %v3807 = vsel %vm1294, %v3640, 0
    %3809 = vmatprep.subr.mxu0 0.0
    %3810 = vmatpush1.xpose.msra.mxu0 0.0
    %3811 = vmatprep.subr.mxu0 0.0
    %3812 = vmatpush1.xpose.msra.mxu0 0.0
    %3813 = vmatprep.subr.mxu0 0.0
    %3814 = vmatpush1.xpose.msra.mxu0 0.0
    %3815 = vmatprep.subr.mxu0 0.0
    %3816 = vmatpush1.xpose.msra.mxu0 0.0
    %3817 = vmatprep.subr.mxu0 0.0
    %3818 = vmatpush1.xpose.msra.mxu0 0.0
    %3819 = vmatprep.subr.mxu0 0.0
    %3820 = vmatpush1.xpose.msra.mxu0 0.0
    %3821 = vmatprep.subr.mxu0 0.0
    %3822 = vmatpush1.xpose.msra.mxu0 0.0
    %3823 = vmatprep.subr.mxu0 0.0
    %3824 = vmatpush1.xpose.msra.mxu0 0.0
    %3825 = vmatprep.subr.mxu0 0.0
    %3826 = vmatpush1.xpose.msra.mxu0 0.0
    %3827 = vmatprep.subr.mxu0 0.0
    %3828 = vmatpush1.xpose.msra.mxu0 0.0
    %3829 = vmatprep.subr.mxu0 0.0
    %3830 = vmatpush1.xpose.msra.mxu0 0.0
    %3831 = vmatprep.subr.mxu0 0.0
    %3832 = vmatpush1.xpose.msra.mxu0 0.0
    %3833 = vmatprep.subr.mxu0 0.0
    %3834 = vmatpush1.xpose.msra.mxu0 0.0
    %3835 = vmatprep.subr.mxu0 0.0
    %3836 = vmatpush1.xpose.msra.mxu0 0.0
    %3837 = vmatprep.subr.mxu0 0.0
    %3838 = vmatpush1.xpose.msra.mxu0 0.0
    %3839 = vmatprep.subr.mxu0 0.0
    %3840 = vmatpush1.xpose.msra.mxu0 %v3807
    %3841 = vmatprep.subr.mxu0 0.0
    %3842 = vmatpush2.xpose.msra.mxu0 0.0
    %3843 = vmatprep.subr.mxu0 0.0
    %3844 = vmatpush2.xpose.msra.mxu0 0.0
    %3845 = vmatprep.subr.mxu0 0.0
    %3846 = vmatpush2.xpose.msra.mxu0 0.0
    %3847 = vmatprep.subr.mxu0 0.0
    %3848 = vmatpush2.xpose.msra.mxu0 0.0
    %3849 = vmatprep.subr.mxu0 0.0
    %3850 = vmatpush2.xpose.msra.mxu0 0.0
    %3851 = vmatprep.subr.mxu0 0.0
    %3852 = vmatpush2.xpose.msra.mxu0 0.0
    %3853 = vmatprep.subr.mxu0 0.0
    %3854 = vmatpush2.xpose.msra.mxu0 0.0
    %3855 = vmatprep.subr.mxu0 0.0
    %3856 = vmatpush2.xpose.msra.mxu0 0.0
    %3857 = vmatprep.subr.mxu0 0.0
    %3858 = vmatpush2.xpose.msra.mxu0 0.0
    %3859 = vmatprep.subr.mxu0 0.0
    %3860 = vmatpush2.xpose.msra.mxu0 0.0
    %3861 = vmatprep.subr.mxu0 0.0
    %3862 = vmatpush2.xpose.msra.mxu0 0.0
    %3863 = vmatprep.subr.mxu0 0.0
    %3864 = vmatpush2.xpose.msra.mxu0 0.0
    %3865 = vmatprep.subr.mxu0 0.0
    %3866 = vmatpush2.xpose.msra.mxu0 0.0
    %3867 = vmatprep.subr.mxu0 0.0
    %3868 = vmatpush2.xpose.msra.mxu0 0.0
    %3869 = vmatprep.subr.mxu0 0.0
    %3870 = vmatpush2.xpose.msra.mxu0 0.0
    %3871 = vmatprep.subr.mxu0 0.0
    %3872 = vmatpush2.xpose.msra.mxu0 0.0
    %3873 = vmatprep.mubr.f32.mxu0 0.0
    %3874 = vmatmul.mubr.f32.gmra.mxu0 %v3804
    %v3875 = vpop.f32.mrf.mxu0
    %v3876 = vadd.f32 0.0, %v3875
    %v3877 = vpop.f32.mrf.mxu0
    %3878 = vdwg.mxu0
    %v3880 = vsel %vm1294, %v2696, 0
    %v3883 = vsel %vm1294, %v3642, 0
    %3885 = vmatprep.subr.mxu0 0.0
    %3886 = vmatpush1.xpose.msra.mxu0 0.0
    %3887 = vmatprep.subr.mxu0 0.0
    %3888 = vmatpush1.xpose.msra.mxu0 0.0
    %3889 = vmatprep.subr.mxu0 0.0
    %3890 = vmatpush1.xpose.msra.mxu0 0.0
    %3891 = vmatprep.subr.mxu0 0.0
    %3892 = vmatpush1.xpose.msra.mxu0 0.0
    %3893 = vmatprep.subr.mxu0 0.0
    %3894 = vmatpush1.xpose.msra.mxu0 0.0
    %3895 = vmatprep.subr.mxu0 0.0
    %3896 = vmatpush1.xpose.msra.mxu0 0.0
    %3897 = vmatprep.subr.mxu0 0.0
    %3898 = vmatpush1.xpose.msra.mxu0 0.0
    %3899 = vmatprep.subr.mxu0 0.0
    %3900 = vmatpush1.xpose.msra.mxu0 0.0
    %3901 = vmatprep.subr.mxu0 0.0
    %3902 = vmatpush1.xpose.msra.mxu0 0.0
    %3903 = vmatprep.subr.mxu0 0.0
    %3904 = vmatpush1.xpose.msra.mxu0 0.0
    %3905 = vmatprep.subr.mxu0 0.0
    %3906 = vmatpush1.xpose.msra.mxu0 0.0
    %3907 = vmatprep.subr.mxu0 0.0
    %3908 = vmatpush1.xpose.msra.mxu0 0.0
    %3909 = vmatprep.subr.mxu0 0.0
    %3910 = vmatpush1.xpose.msra.mxu0 0.0
    %3911 = vmatprep.subr.mxu0 0.0
    %3912 = vmatpush1.xpose.msra.mxu0 0.0
    %3913 = vmatprep.subr.mxu0 0.0
    %3914 = vmatpush1.xpose.msra.mxu0 0.0
    %3915 = vmatprep.subr.mxu0 0.0
    %3916 = vmatpush1.xpose.msra.mxu0 %v3883
    %3917 = vmatprep.subr.mxu0 0.0
    %3918 = vmatpush2.xpose.msra.mxu0 0.0
    %3919 = vmatprep.subr.mxu0 0.0
    %3920 = vmatpush2.xpose.msra.mxu0 0.0
    %3921 = vmatprep.subr.mxu0 0.0
    %3922 = vmatpush2.xpose.msra.mxu0 0.0
    %3923 = vmatprep.subr.mxu0 0.0
    %3924 = vmatpush2.xpose.msra.mxu0 0.0
    %3925 = vmatprep.subr.mxu0 0.0
    %3926 = vmatpush2.xpose.msra.mxu0 0.0
    %3927 = vmatprep.subr.mxu0 0.0
    %3928 = vmatpush2.xpose.msra.mxu0 0.0
    %3929 = vmatprep.subr.mxu0 0.0
    %3930 = vmatpush2.xpose.msra.mxu0 0.0
    %3931 = vmatprep.subr.mxu0 0.0
    %3932 = vmatpush2.xpose.msra.mxu0 0.0
    %3933 = vmatprep.subr.mxu0 0.0
    %3934 = vmatpush2.xpose.msra.mxu0 0.0
    %3935 = vmatprep.subr.mxu0 0.0
    %3936 = vmatpush2.xpose.msra.mxu0 0.0
    %3937 = vmatprep.subr.mxu0 0.0
    %3938 = vmatpush2.xpose.msra.mxu0 0.0
    %3939 = vmatprep.subr.mxu0 0.0
    %3940 = vmatpush2.xpose.msra.mxu0 0.0
    %3941 = vmatprep.subr.mxu0 0.0
    %3942 = vmatpush2.xpose.msra.mxu0 0.0
    %3943 = vmatprep.subr.mxu0 0.0
    %3944 = vmatpush2.xpose.msra.mxu0 0.0
    %3945 = vmatprep.subr.mxu0 0.0
    %3946 = vmatpush2.xpose.msra.mxu0 0.0
    %3947 = vmatprep.subr.mxu0 0.0
    %3948 = vmatpush2.xpose.msra.mxu0 0.0
    %3949 = vmatprep.mubr.f32.mxu0 0.0
    %3950 = vmatmul.mubr.f32.gmra.mxu0 %v3880
    %v3951 = vpop.f32.mrf.mxu0
    %v3952 = vadd.f32 0.0, %v3951
    %v3953 = vpop.f32.mrf.mxu0
    %3954 = vdwg.mxu0
    %v3956 = vsel %vm1294, %v2687, 0
    %v3959 = vsel %vm1294, %v3644, 0
    %3961 = vmatprep.subr.mxu0 0.0
    %3962 = vmatpush1.xpose.msra.mxu0 0.0
    %3963 = vmatprep.subr.mxu0 0.0
    %3964 = vmatpush1.xpose.msra.mxu0 0.0
    %3965 = vmatprep.subr.mxu0 0.0
    %3966 = vmatpush1.xpose.msra.mxu0 0.0
    %3967 = vmatprep.subr.mxu0 0.0
    %3968 = vmatpush1.xpose.msra.mxu0 0.0
    %3969 = vmatprep.subr.mxu0 0.0
    %3970 = vmatpush1.xpose.msra.mxu0 0.0
    %3971 = vmatprep.subr.mxu0 0.0
    %3972 = vmatpush1.xpose.msra.mxu0 0.0
    %3973 = vmatprep.subr.mxu0 0.0
    %3974 = vmatpush1.xpose.msra.mxu0 0.0
    %3975 = vmatprep.subr.mxu0 0.0
    %3976 = vmatpush1.xpose.msra.mxu0 0.0
    %3977 = vmatprep.subr.mxu0 0.0
    %3978 = vmatpush1.xpose.msra.mxu0 0.0
    %3979 = vmatprep.subr.mxu0 0.0
    %3980 = vmatpush1.xpose.msra.mxu0 0.0
    %3981 = vmatprep.subr.mxu0 0.0
    %3982 = vmatpush1.xpose.msra.mxu0 0.0
    %3983 = vmatprep.subr.mxu0 0.0
    %3984 = vmatpush1.xpose.msra.mxu0 0.0
    %3985 = vmatprep.subr.mxu0 0.0
    %3986 = vmatpush1.xpose.msra.mxu0 0.0
    %3987 = vmatprep.subr.mxu0 0.0
    %3988 = vmatpush1.xpose.msra.mxu0 0.0
    %3989 = vmatprep.subr.mxu0 0.0
    %3990 = vmatpush1.xpose.msra.mxu0 0.0
    %3991 = vmatprep.subr.mxu0 0.0
    %3992 = vmatpush1.xpose.msra.mxu0 %v3959
    %3993 = vmatprep.subr.mxu0 0.0
    %3994 = vmatpush2.xpose.msra.mxu0 0.0
    %3995 = vmatprep.subr.mxu0 0.0
    %3996 = vmatpush2.xpose.msra.mxu0 0.0
    %3997 = vmatprep.subr.mxu0 0.0
    %3998 = vmatpush2.xpose.msra.mxu0 0.0
    %3999 = vmatprep.subr.mxu0 0.0
    %4000 = vmatpush2.xpose.msra.mxu0 0.0
    %4001 = vmatprep.subr.mxu0 0.0
    %4002 = vmatpush2.xpose.msra.mxu0 0.0
    %4003 = vmatprep.subr.mxu0 0.0
    %4004 = vmatpush2.xpose.msra.mxu0 0.0
    %4005 = vmatprep.subr.mxu0 0.0
    %4006 = vmatpush2.xpose.msra.mxu0 0.0
    %4007 = vmatprep.subr.mxu0 0.0
    %4008 = vmatpush2.xpose.msra.mxu0 0.0
    %4009 = vmatprep.subr.mxu0 0.0
    %4010 = vmatpush2.xpose.msra.mxu0 0.0
    %4011 = vmatprep.subr.mxu0 0.0
    %4012 = vmatpush2.xpose.msra.mxu0 0.0
    %4013 = vmatprep.subr.mxu0 0.0
    %4014 = vmatpush2.xpose.msra.mxu0 0.0
    %4015 = vmatprep.subr.mxu0 0.0
    %4016 = vmatpush2.xpose.msra.mxu0 0.0
    %4017 = vmatprep.subr.mxu0 0.0
    %4018 = vmatpush2.xpose.msra.mxu0 0.0
    %4019 = vmatprep.subr.mxu0 0.0
    %4020 = vmatpush2.xpose.msra.mxu0 0.0
    %4021 = vmatprep.subr.mxu0 0.0
    %4022 = vmatpush2.xpose.msra.mxu0 0.0
    %4023 = vmatprep.subr.mxu0 0.0
    %4024 = vmatpush2.xpose.msra.mxu0 0.0
    %4025 = vmatprep.mubr.f32.mxu0 0.0
    %4026 = vmatmul.mubr.f32.gmra.mxu0 %v3956
    %v4027 = vpop.f32.mrf.mxu0
    %v4028 = vadd.f32 0.0, %v4027
    %v4029 = vpop.f32.mrf.mxu0
    %4030 = vdwg.mxu0
    %v4032 = vsel %vm1294, %v2697, 0
    %v4035 = vsel %vm1294, %v3646, 0
    %4037 = vmatprep.subr.mxu0 0.0
    %4038 = vmatpush1.xpose.msra.mxu0 0.0
    %4039 = vmatprep.subr.mxu0 0.0
    %4040 = vmatpush1.xpose.msra.mxu0 0.0
    %4041 = vmatprep.subr.mxu0 0.0
    %4042 = vmatpush1.xpose.msra.mxu0 0.0
    %4043 = vmatprep.subr.mxu0 0.0
    %4044 = vmatpush1.xpose.msra.mxu0 0.0
    %4045 = vmatprep.subr.mxu0 0.0
    %4046 = vmatpush1.xpose.msra.mxu0 0.0
    %4047 = vmatprep.subr.mxu0 0.0
    %4048 = vmatpush1.xpose.msra.mxu0 0.0
    %4049 = vmatprep.subr.mxu0 0.0
    %4050 = vmatpush1.xpose.msra.mxu0 0.0
    %4051 = vmatprep.subr.mxu0 0.0
    %4052 = vmatpush1.xpose.msra.mxu0 0.0
    %4053 = vmatprep.subr.mxu0 0.0
    %4054 = vmatpush1.xpose.msra.mxu0 0.0
    %4055 = vmatprep.subr.mxu0 0.0
    %4056 = vmatpush1.xpose.msra.mxu0 0.0
    %4057 = vmatprep.subr.mxu0 0.0
    %4058 = vmatpush1.xpose.msra.mxu0 0.0
    %4059 = vmatprep.subr.mxu0 0.0
    %4060 = vmatpush1.xpose.msra.mxu0 0.0
    %4061 = vmatprep.subr.mxu0 0.0
    %4062 = vmatpush1.xpose.msra.mxu0 0.0
    %4063 = vmatprep.subr.mxu0 0.0
    %4064 = vmatpush1.xpose.msra.mxu0 0.0
    %4065 = vmatprep.subr.mxu0 0.0
    %4066 = vmatpush1.xpose.msra.mxu0 0.0
    %4067 = vmatprep.subr.mxu0 0.0
    %4068 = vmatpush1.xpose.msra.mxu0 %v4035
    %4069 = vmatprep.subr.mxu0 0.0
    %4070 = vmatpush2.xpose.msra.mxu0 0.0
    %4071 = vmatprep.subr.mxu0 0.0
    %4072 = vmatpush2.xpose.msra.mxu0 0.0
    %4073 = vmatprep.subr.mxu0 0.0
    %4074 = vmatpush2.xpose.msra.mxu0 0.0
    %4075 = vmatprep.subr.mxu0 0.0
    %4076 = vmatpush2.xpose.msra.mxu0 0.0
    %4077 = vmatprep.subr.mxu0 0.0
    %4078 = vmatpush2.xpose.msra.mxu0 0.0
    %4079 = vmatprep.subr.mxu0 0.0
    %4080 = vmatpush2.xpose.msra.mxu0 0.0
    %4081 = vmatprep.subr.mxu0 0.0
    %4082 = vmatpush2.xpose.msra.mxu0 0.0
    %4083 = vmatprep.subr.mxu0 0.0
    %4084 = vmatpush2.xpose.msra.mxu0 0.0
    %4085 = vmatprep.subr.mxu0 0.0
    %4086 = vmatpush2.xpose.msra.mxu0 0.0
    %4087 = vmatprep.subr.mxu0 0.0
    %4088 = vmatpush2.xpose.msra.mxu0 0.0
    %4089 = vmatprep.subr.mxu0 0.0
    %4090 = vmatpush2.xpose.msra.mxu0 0.0
    %4091 = vmatprep.subr.mxu0 0.0
    %4092 = vmatpush2.xpose.msra.mxu0 0.0
    %4093 = vmatprep.subr.mxu0 0.0
    %4094 = vmatpush2.xpose.msra.mxu0 0.0
    %4095 = vmatprep.subr.mxu0 0.0
    %4096 = vmatpush2.xpose.msra.mxu0 0.0
    %4097 = vmatprep.subr.mxu0 0.0
    %4098 = vmatpush2.xpose.msra.mxu0 0.0
    %4099 = vmatprep.subr.mxu0 0.0
    %4100 = vmatpush2.xpose.msra.mxu0 0.0
    %4101 = vmatprep.mubr.f32.mxu0 0.0
    %4102 = vmatmul.mubr.f32.gmra.mxu0 %v4032
    %v4103 = vpop.f32.mrf.mxu0
    %v4104 = vadd.f32 0.0, %v4103
    %v4105 = vpop.f32.mrf.mxu0
    %4106 = vdwg.mxu0
    %v4108 = vsel %vm1294, %v2694, 0
    %v4111 = vsel %vm1294, %v3648, 0
    %4113 = vmatprep.subr.mxu0 0.0
    %4114 = vmatpush1.xpose.msra.mxu0 0.0
    %4115 = vmatprep.subr.mxu0 0.0
    %4116 = vmatpush1.xpose.msra.mxu0 0.0
    %4117 = vmatprep.subr.mxu0 0.0
    %4118 = vmatpush1.xpose.msra.mxu0 0.0
    %4119 = vmatprep.subr.mxu0 0.0
    %4120 = vmatpush1.xpose.msra.mxu0 0.0
    %4121 = vmatprep.subr.mxu0 0.0
    %4122 = vmatpush1.xpose.msra.mxu0 0.0
    %4123 = vmatprep.subr.mxu0 0.0
    %4124 = vmatpush1.xpose.msra.mxu0 0.0
    %4125 = vmatprep.subr.mxu0 0.0
    %4126 = vmatpush1.xpose.msra.mxu0 0.0
    %4127 = vmatprep.subr.mxu0 0.0
    %4128 = vmatpush1.xpose.msra.mxu0 0.0
    %4129 = vmatprep.subr.mxu0 0.0
    %4130 = vmatpush1.xpose.msra.mxu0 0.0
    %4131 = vmatprep.subr.mxu0 0.0
    %4132 = vmatpush1.xpose.msra.mxu0 0.0
    %4133 = vmatprep.subr.mxu0 0.0
    %4134 = vmatpush1.xpose.msra.mxu0 0.0
    %4135 = vmatprep.subr.mxu0 0.0
    %4136 = vmatpush1.xpose.msra.mxu0 0.0
    %4137 = vmatprep.subr.mxu0 0.0
    %4138 = vmatpush1.xpose.msra.mxu0 0.0
    %4139 = vmatprep.subr.mxu0 0.0
    %4140 = vmatpush1.xpose.msra.mxu0 0.0
    %4141 = vmatprep.subr.mxu0 0.0
    %4142 = vmatpush1.xpose.msra.mxu0 0.0
    %4143 = vmatprep.subr.mxu0 0.0
    %4144 = vmatpush1.xpose.msra.mxu0 %v4111
    %4145 = vmatprep.subr.mxu0 0.0
    %4146 = vmatpush2.xpose.msra.mxu0 0.0
    %4147 = vmatprep.subr.mxu0 0.0
    %4148 = vmatpush2.xpose.msra.mxu0 0.0
    %4149 = vmatprep.subr.mxu0 0.0
    %4150 = vmatpush2.xpose.msra.mxu0 0.0
    %4151 = vmatprep.subr.mxu0 0.0
    %4152 = vmatpush2.xpose.msra.mxu0 0.0
    %4153 = vmatprep.subr.mxu0 0.0
    %4154 = vmatpush2.xpose.msra.mxu0 0.0
    %4155 = vmatprep.subr.mxu0 0.0
    %4156 = vmatpush2.xpose.msra.mxu0 0.0
    %4157 = vmatprep.subr.mxu0 0.0
    %4158 = vmatpush2.xpose.msra.mxu0 0.0
    %4159 = vmatprep.subr.mxu0 0.0
    %4160 = vmatpush2.xpose.msra.mxu0 0.0
    %4161 = vmatprep.subr.mxu0 0.0
    %4162 = vmatpush2.xpose.msra.mxu0 0.0
    %4163 = vmatprep.subr.mxu0 0.0
    %4164 = vmatpush2.xpose.msra.mxu0 0.0
    %4165 = vmatprep.subr.mxu0 0.0
    %4166 = vmatpush2.xpose.msra.mxu0 0.0
    %4167 = vmatprep.subr.mxu0 0.0
    %4168 = vmatpush2.xpose.msra.mxu0 0.0
    %4169 = vmatprep.subr.mxu0 0.0
    %4170 = vmatpush2.xpose.msra.mxu0 0.0
    %4171 = vmatprep.subr.mxu0 0.0
    %4172 = vmatpush2.xpose.msra.mxu0 0.0
    %4173 = vmatprep.subr.mxu0 0.0
    %4174 = vmatpush2.xpose.msra.mxu0 0.0
    %4175 = vmatprep.subr.mxu0 0.0
    %4176 = vmatpush2.xpose.msra.mxu0 0.0
    %4177 = vmatprep.mubr.f32.mxu0 0.0
    %4178 = vmatmul.mubr.f32.gmra.mxu0 %v4108
    %v4179 = vpop.f32.mrf.mxu0
    %v4180 = vadd.f32 0.0, %v4179
    %v4181 = vpop.f32.mrf.mxu0
    %4182 = vdwg.mxu0
    %v4184 = vsel %vm1294, %v2698, 0
    %v4187 = vsel %vm1294, %v3650, 0
    %4189 = vmatprep.subr.mxu0 0.0
    %4190 = vmatpush1.xpose.msra.mxu0 0.0
    %4191 = vmatprep.subr.mxu0 0.0
    %4192 = vmatpush1.xpose.msra.mxu0 0.0
    %4193 = vmatprep.subr.mxu0 0.0
    %4194 = vmatpush1.xpose.msra.mxu0 0.0
    %4195 = vmatprep.subr.mxu0 0.0
    %4196 = vmatpush1.xpose.msra.mxu0 0.0
    %4197 = vmatprep.subr.mxu0 0.0
    %4198 = vmatpush1.xpose.msra.mxu0 0.0
    %4199 = vmatprep.subr.mxu0 0.0
    %4200 = vmatpush1.xpose.msra.mxu0 0.0
    %4201 = vmatprep.subr.mxu0 0.0
    %4202 = vmatpush1.xpose.msra.mxu0 0.0
    %4203 = vmatprep.subr.mxu0 0.0
    %4204 = vmatpush1.xpose.msra.mxu0 0.0
    %4205 = vmatprep.subr.mxu0 0.0
    %4206 = vmatpush1.xpose.msra.mxu0 0.0
    %4207 = vmatprep.subr.mxu0 0.0
    %4208 = vmatpush1.xpose.msra.mxu0 0.0
    %4209 = vmatprep.subr.mxu0 0.0
    %4210 = vmatpush1.xpose.msra.mxu0 0.0
    %4211 = vmatprep.subr.mxu0 0.0
    %4212 = vmatpush1.xpose.msra.mxu0 0.0
    %4213 = vmatprep.subr.mxu0 0.0
    %4214 = vmatpush1.xpose.msra.mxu0 0.0
    %4215 = vmatprep.subr.mxu0 0.0
    %4216 = vmatpush1.xpose.msra.mxu0 0.0
    %4217 = vmatprep.subr.mxu0 0.0
    %4218 = vmatpush1.xpose.msra.mxu0 0.0
    %4219 = vmatprep.subr.mxu0 0.0
    %4220 = vmatpush1.xpose.msra.mxu0 %v4187
    %4221 = vmatprep.subr.mxu0 0.0
    %4222 = vmatpush2.xpose.msra.mxu0 0.0
    %4223 = vmatprep.subr.mxu0 0.0
    %4224 = vmatpush2.xpose.msra.mxu0 0.0
    %4225 = vmatprep.subr.mxu0 0.0
    %4226 = vmatpush2.xpose.msra.mxu0 0.0
    %4227 = vmatprep.subr.mxu0 0.0
    %4228 = vmatpush2.xpose.msra.mxu0 0.0
    %4229 = vmatprep.subr.mxu0 0.0
    %4230 = vmatpush2.xpose.msra.mxu0 0.0
    %4231 = vmatprep.subr.mxu0 0.0
    %4232 = vmatpush2.xpose.msra.mxu0 0.0
    %4233 = vmatprep.subr.mxu0 0.0
    %4234 = vmatpush2.xpose.msra.mxu0 0.0
    %4235 = vmatprep.subr.mxu0 0.0
    %4236 = vmatpush2.xpose.msra.mxu0 0.0
    %4237 = vmatprep.subr.mxu0 0.0
    %4238 = vmatpush2.xpose.msra.mxu0 0.0
    %4239 = vmatprep.subr.mxu0 0.0
    %4240 = vmatpush2.xpose.msra.mxu0 0.0
    %4241 = vmatprep.subr.mxu0 0.0
    %4242 = vmatpush2.xpose.msra.mxu0 0.0
    %4243 = vmatprep.subr.mxu0 0.0
    %4244 = vmatpush2.xpose.msra.mxu0 0.0
    %4245 = vmatprep.subr.mxu0 0.0
    %4246 = vmatpush2.xpose.msra.mxu0 0.0
    %4247 = vmatprep.subr.mxu0 0.0
    %4248 = vmatpush2.xpose.msra.mxu0 0.0
    %4249 = vmatprep.subr.mxu0 0.0
    %4250 = vmatpush2.xpose.msra.mxu0 0.0
    %4251 = vmatprep.subr.mxu0 0.0
    %4252 = vmatpush2.xpose.msra.mxu0 0.0
    %4253 = vmatprep.mubr.f32.mxu0 0.0
    %4254 = vmatmul.mubr.f32.gmra.mxu0 %v4184
    %v4255 = vpop.f32.mrf.mxu0
    %v4256 = vadd.f32 0.0, %v4255
    %v4257 = vpop.f32.mrf.mxu0
    %4258 = vdwg.mxu0
    %v4259 = vcombine.low %v3724, %v3876
    %v4261 = vunpack.c.l.s4 1983009808
    %v4262 = vunpack.c.0.s8 %v4261
    %v4263 = vlaneseq
    %v4264 = vshrl.u32 %v4263, 7
    %v4265 = vsub.s32 %v4262, %v4264
    %v4266 = vrot.slane %v4259, %v4265
    %v4267 = vcombine.low %v3800, %v3952
    %v4269 = vunpack.c.l.s4 1983009808
    %v4270 = vunpack.c.0.s8 %v4269
    %v4271 = vlaneseq
    %v4272 = vshrl.u32 %v4271, 7
    %v4273 = vsub.s32 %v4270, %v4272
    %v4274 = vrot.slane %v4267, %v4273
    %v4275 = vcombine.low %v4028, %v4180
    %v4277 = vunpack.c.l.s4 1983009808
    %v4278 = vunpack.c.0.s8 %v4277
    %v4279 = vlaneseq
    %v4280 = vshrl.u32 %v4279, 7
    %v4281 = vsub.s32 %v4278, %v4280
    %v4282 = vrot.slane %v4275, %v4281
    %v4283 = vcombine.low %v4104, %v4256
    %v4285 = vunpack.c.l.s4 1983009808
    %v4286 = vunpack.c.0.s8 %v4285
    %v4287 = vlaneseq
    %v4288 = vshrl.u32 %v4287, 7
    %v4289 = vsub.s32 %v4286, %v4288
    %v4290 = vrot.slane %v4283, %v4289
    %v4291 = vcombine.low %v4266, %v4274
    %v4292 = vcombine.high %v4266, %v4274
    %v4294 = vunpack.c.l.s4 1934713408
    %v4295 = vunpack.c.0.s8 %v4294
    %v4296 = vlaneseq
    %v4297 = vshrl.u32 %v4296, 7
    %v4298 = vsub.s32 %v4295, %v4297
    %v4299 = vrot.slane %v4291, %v4298
    %v4301 = vunpack.c.l.s4 1934713408
    %v4302 = vunpack.c.0.s8 %v4301
    %v4303 = vlaneseq
    %v4304 = vshrl.u32 %v4303, 7
    %v4305 = vsub.s32 %v4302, %v4304
    %v4306 = vrot.slane %v4292, %v4305
    %v4307 = vcombine.low %v4282, %v4290
    %v4308 = vcombine.high %v4282, %v4290
    %v4310 = vunpack.c.l.s4 1934713408
    %v4311 = vunpack.c.0.s8 %v4310
    %v4312 = vlaneseq
    %v4313 = vshrl.u32 %v4312, 7
    %v4314 = vsub.s32 %v4311, %v4313
    %v4315 = vrot.slane %v4307, %v4314
    %v4317 = vunpack.c.l.s4 1934713408
    %v4318 = vunpack.c.0.s8 %v4317
    %v4319 = vlaneseq
    %v4320 = vshrl.u32 %v4319, 7
    %v4321 = vsub.s32 %v4318, %v4320
    %v4322 = vrot.slane %v4308, %v4321
    %v4323 = vcombine.low %v4299, %v4315
    %v4324 = vcombine.high %v4299, %v4315
    %v4325 = vcombine.low %v4306, %v4322
    %v4326 = vcombine.high %v4306, %v4322
    %4328 = vrot.lane.b32.xlu0 %v4324, 8
    %v4329 = vpop.permute.xlu0 %4328
    %4332 = vrot.lane.b32.xlu0 %v4325, 16
    %v4333 = vpop.permute.xlu0 %4332
    %4336 = vrot.lane.b32.xlu0 %v4326, 24
    %v4337 = vpop.permute.xlu0 %4336
    %v4339 = vsel %vm1294, %v4323, %v4329
    %v4340 = vsel %vm2072, %v4339, %v4333
    %v4341 = vsel %vm2074, %v4340, %v4337
    %v4342 = vlaneseq
    %v4343 = vshrl.u32 %v4342, 7
    %v4344 = vsub.s32 3, %v4343
    %v4345 = vrot.slane %v2360, %v4344
    %v4347 = vsel %vm88, %v4341, 0
    %4349 = vmatprep.subr.mxu0 0.0
    %4350 = vmatpush1.msra.mxu0 0.0
    %4351 = vmatprep.subr.mxu0 0.0
    %4352 = vmatpush1.msra.mxu0 0.0
    %4353 = vmatprep.subr.mxu0 0.0
    %4354 = vmatpush1.msra.mxu0 0.0
    %4355 = vmatprep.subr.mxu0 0.0
    %4356 = vmatpush1.msra.mxu0 0.0
    %4357 = vmatprep.subr.mxu0 0.0
    %4358 = vmatpush1.msra.mxu0 0.0
    %4359 = vmatprep.subr.mxu0 0.0
    %4360 = vmatpush1.msra.mxu0 0.0
    %4361 = vmatprep.subr.mxu0 0.0
    %4362 = vmatpush1.msra.mxu0 0.0
    %4363 = vmatprep.subr.mxu0 0.0
    %4364 = vmatpush1.msra.mxu0 0.0
    %4365 = vmatprep.subr.mxu0 0.0
    %4366 = vmatpush1.msra.mxu0 0.0
    %4367 = vmatprep.subr.mxu0 0.0
    %4368 = vmatpush1.msra.mxu0 0.0
    %4369 = vmatprep.subr.mxu0 0.0
    %4370 = vmatpush1.msra.mxu0 0.0
    %4371 = vmatprep.subr.mxu0 0.0
    %4372 = vmatpush1.msra.mxu0 0.0
    %4373 = vmatprep.subr.mxu0 0.0
    %4374 = vmatpush1.msra.mxu0 %v2357
    %4375 = vmatprep.subr.mxu0 0.0
    %4376 = vmatpush1.msra.mxu0 %v2354
    %4377 = vmatprep.subr.mxu0 0.0
    %4378 = vmatpush1.msra.mxu0 %v2351
    %4379 = vmatprep.subr.mxu0 0.0
    %4380 = vmatpush1.msra.mxu0 %v2348
    %4381 = vmatprep.subr.mxu0 0.0
    %4382 = vmatpush2.msra.mxu0 0.0
    %4383 = vmatprep.subr.mxu0 0.0
    %4384 = vmatpush2.msra.mxu0 0.0
    %4385 = vmatprep.subr.mxu0 0.0
    %4386 = vmatpush2.msra.mxu0 0.0
    %4387 = vmatprep.subr.mxu0 0.0
    %4388 = vmatpush2.msra.mxu0 0.0
    %4389 = vmatprep.subr.mxu0 0.0
    %4390 = vmatpush2.msra.mxu0 0.0
    %4391 = vmatprep.subr.mxu0 0.0
    %4392 = vmatpush2.msra.mxu0 0.0
    %4393 = vmatprep.subr.mxu0 0.0
    %4394 = vmatpush2.msra.mxu0 0.0
    %4395 = vmatprep.subr.mxu0 0.0
    %4396 = vmatpush2.msra.mxu0 0.0
    %4397 = vmatprep.subr.mxu0 0.0
    %4398 = vmatpush2.msra.mxu0 0.0
    %4399 = vmatprep.subr.mxu0 0.0
    %4400 = vmatpush2.msra.mxu0 0.0
    %4401 = vmatprep.subr.mxu0 0.0
    %4402 = vmatpush2.msra.mxu0 0.0
    %4403 = vmatprep.subr.mxu0 0.0
    %4404 = vmatpush2.msra.mxu0 0.0
    %4405 = vmatprep.subr.mxu0 0.0
    %4406 = vmatpush2.msra.mxu0 0.0
    %4407 = vmatprep.subr.mxu0 0.0
    %4408 = vmatpush2.msra.mxu0 0.0
    %4409 = vmatprep.subr.mxu0 0.0
    %4410 = vmatpush2.msra.mxu0 0.0
    %4411 = vmatprep.subr.mxu0 0.0
    %4412 = vmatpush2.msra.mxu0 0.0
    %4413 = vmatprep.mubr.f32.mxu0 0.0
    %4414 = vmatmul.mubr.f32.gmra.mxu0 %v4347
    %v4415 = vpop.f32.mrf.mxu0
    %v4416 = vadd.f32 %v4345, %v4415
    %v4417 = vpop.f32.mrf.mxu0
    %4418 = vdwg.mxu0
    %v4419 = vadd.f32 %v4416, %v2345
    %v4420 = vsel %vm88, %v4419, 0.0
    %4421 = vadd.xlane.f32.xlu0 %v4420
    %v4422 = vpop.xlane.xlu0 %4421
    %v4423 = vmul.f32 %v4422, %v92
    %v4424 = vsub.f32 %v4419, %v4423
    %v4425 = vmul.f32 %v4424, %v4424
    %v4426 = vsel %vm88, %v4425, 0.0
    %4427 = vadd.xlane.f32.xlu0 %v4426
    %v4428 = vpop.xlane.xlu0 %4427
    %v4429 = vmul.f32 %v4428, %v92
    %v4430 = vadd.f32 %v4429, 1e-06
    %v4431 = vrsqrt.pop %v4430
    %v4432 = vmul.f32 %v4424, %v4431
    %v4433 = vlaneseq
    %v4434 = vshrl.u32 %v4433, 7
    %v4435 = vsub.s32 4, %v4434
    %v4436 = vrot.slane %v2360, %v4435
    %v4437 = vmul.f32 %v4432, %v4436
    %v4438 = vlaneseq
    %v4439 = vshrl.u32 %v4438, 7
    %v4440 = vsub.s32 5, %v4439
    %v4441 = vrot.slane %v2360, %v4440
    %v4442 = vadd.f32 %v4437, %v4441
    %v4443 = vlaneseq
    %v4444 = vshrl.u32 %v4443, 7
    %v4445 = vsub.s32 6, %v4444
    %v4446 = vrot.slane %v2360, %v4445
    %v4448 = vsel %vm88, %v4442, 0
    %4450 = vmatprep.subr.mxu0 0.0
    %4451 = vmatpush1.msra.mxu0 0.0
    %4452 = vmatprep.subr.mxu0 0.0
    %4453 = vmatpush1.msra.mxu0 0.0
    %4454 = vmatprep.subr.mxu0 0.0
    %4455 = vmatpush1.msra.mxu0 0.0
    %4456 = vmatprep.subr.mxu0 0.0
    %4457 = vmatpush1.msra.mxu0 0.0
    %4458 = vmatprep.subr.mxu0 0.0
    %4459 = vmatpush1.msra.mxu0 0.0
    %4460 = vmatprep.subr.mxu0 0.0
    %4461 = vmatpush1.msra.mxu0 0.0
    %4462 = vmatprep.subr.mxu0 0.0
    %4463 = vmatpush1.msra.mxu0 0.0
    %4464 = vmatprep.subr.mxu0 0.0
    %4465 = vmatpush1.msra.mxu0 0.0
    %4466 = vmatprep.subr.mxu0 0.0
    %4467 = vmatpush1.msra.mxu0 0.0
    %4468 = vmatprep.subr.mxu0 0.0
    %4469 = vmatpush1.msra.mxu0 0.0
    %4470 = vmatprep.subr.mxu0 0.0
    %4471 = vmatpush1.msra.mxu0 0.0
    %4472 = vmatprep.subr.mxu0 0.0
    %4473 = vmatpush1.msra.mxu0 0.0
    %4474 = vmatprep.subr.mxu0 0.0
    %4475 = vmatpush1.msra.mxu0 %v2358
    %4476 = vmatprep.subr.mxu0 0.0
    %4477 = vmatpush1.msra.mxu0 %v2355
    %4478 = vmatprep.subr.mxu0 0.0
    %4479 = vmatpush1.msra.mxu0 %v2352
    %4480 = vmatprep.subr.mxu0 0.0
    %4481 = vmatpush1.msra.mxu0 %v2349
    %4482 = vmatprep.subr.mxu0 0.0
    %4483 = vmatpush2.msra.mxu0 0.0
    %4484 = vmatprep.subr.mxu0 0.0
    %4485 = vmatpush2.msra.mxu0 0.0
    %4486 = vmatprep.subr.mxu0 0.0
    %4487 = vmatpush2.msra.mxu0 0.0
    %4488 = vmatprep.subr.mxu0 0.0
    %4489 = vmatpush2.msra.mxu0 0.0
    %4490 = vmatprep.subr.mxu0 0.0
    %4491 = vmatpush2.msra.mxu0 0.0
    %4492 = vmatprep.subr.mxu0 0.0
    %4493 = vmatpush2.msra.mxu0 0.0
    %4494 = vmatprep.subr.mxu0 0.0
    %4495 = vmatpush2.msra.mxu0 0.0
    %4496 = vmatprep.subr.mxu0 0.0
    %4497 = vmatpush2.msra.mxu0 0.0
    %4498 = vmatprep.subr.mxu0 0.0
    %4499 = vmatpush2.msra.mxu0 0.0
    %4500 = vmatprep.subr.mxu0 0.0
    %4501 = vmatpush2.msra.mxu0 0.0
    %4502 = vmatprep.subr.mxu0 0.0
    %4503 = vmatpush2.msra.mxu0 0.0
    %4504 = vmatprep.subr.mxu0 0.0
    %4505 = vmatpush2.msra.mxu0 0.0
    %4506 = vmatprep.subr.mxu0 0.0
    %4507 = vmatpush2.msra.mxu0 0.0
    %4508 = vmatprep.subr.mxu0 0.0
    %4509 = vmatpush2.msra.mxu0 0.0
    %4510 = vmatprep.subr.mxu0 0.0
    %4511 = vmatpush2.msra.mxu0 0.0
    %4512 = vmatprep.subr.mxu0 0.0
    %4513 = vmatpush2.msra.mxu0 0.0
    %4514 = vmatprep.mubr.f32.mxu0 0.0
    %4515 = vmatmul.mubr.f32.gmra.mxu0 %v4448
    %v4516 = vpop.f32.mrf.mxu0
    %v4517 = vadd.f32 %v4446, %v4516
    %v4518 = vpop.f32.mrf.mxu0
    %4519 = vdwg.mxu0
    %v4520 = vmul.f32 %v4517, 0.5
    %v4521 = vmul.f32 %v4517, 0.70710677
    %v4522 = verf.f32.pop %v4521
    %v4523 = vadd.f32 %v4522, 1.0
    %v4524 = vmul.f32 %v4520, %v4523
    %s4525 = scalar_lea.vmem %s2, 64
    %v4526 = vld [vmem:[%s4525] sm:$0xff]
    %v4527 = vld [vmem:[%s4525 + $0x8] sm:$0xff]
    %v4528 = vld [vmem:[%s4525 + $0x10] sm:$0xff]
    %v4529 = vld [vmem:[%s4525 + $0x18] sm:$0xff]
    %v4530 = vld [vmem:[%s4525 + $0x20] sm:$0xff]
    %v4531 = vld [vmem:[%s4525 + $0x28] sm:$0xff]
    %v4532 = vld [vmem:[%s4525 + $0x30] sm:$0xff]
    %v4533 = vld [vmem:[%s4525 + $0x38] sm:$0xff]
    %v4534 = vlaneseq
    %v4535 = vshrl.u32 %v4534, 7
    %v4536 = vsub.s32 7, %v4535
    %v4537 = vrot.slane %v2360, %v4536
    %v4539 = vsel %vm2271, %v4524, 0
    %4541 = vmatprep.subr.mxu0 0.0
    %4542 = vmatpush1.msra.mxu0 0.0
    %4543 = vmatprep.subr.mxu0 0.0
    %4544 = vmatpush1.msra.mxu0 0.0
    %4545 = vmatprep.subr.mxu0 0.0
    %4546 = vmatpush1.msra.mxu0 0.0
    %4547 = vmatprep.subr.mxu0 0.0
    %4548 = vmatpush1.msra.mxu0 0.0
    %4549 = vmatprep.subr.mxu0 0.0
    %4550 = vmatpush1.msra.mxu0 0.0
    %4551 = vmatprep.subr.mxu0 0.0
    %4552 = vmatpush1.msra.mxu0 0.0
    %4553 = vmatprep.subr.mxu0 0.0
    %4554 = vmatpush1.msra.mxu0 0.0
    %4555 = vmatprep.subr.mxu0 0.0
    %4556 = vmatpush1.msra.mxu0 0.0
    %4557 = vmatprep.subr.mxu0 0.0
    %4558 = vmatpush1.msra.mxu0 %v4533
    %4559 = vmatprep.subr.mxu0 0.0
    %4560 = vmatpush1.msra.mxu0 %v4532
    %4561 = vmatprep.subr.mxu0 0.0
    %4562 = vmatpush1.msra.mxu0 %v4531
    %4563 = vmatprep.subr.mxu0 0.0
    %4564 = vmatpush1.msra.mxu0 %v4530
    %4565 = vmatprep.subr.mxu0 0.0
    %4566 = vmatpush1.msra.mxu0 %v4529
    %4567 = vmatprep.subr.mxu0 0.0
    %4568 = vmatpush1.msra.mxu0 %v4528
    %4569 = vmatprep.subr.mxu0 0.0
    %4570 = vmatpush1.msra.mxu0 %v4527
    %4571 = vmatprep.subr.mxu0 0.0
    %4572 = vmatpush1.msra.mxu0 %v4526
    %4573 = vmatprep.subr.mxu0 0.0
    %4574 = vmatpush2.msra.mxu0 0.0
    %4575 = vmatprep.subr.mxu0 0.0
    %4576 = vmatpush2.msra.mxu0 0.0
    %4577 = vmatprep.subr.mxu0 0.0
    %4578 = vmatpush2.msra.mxu0 0.0
    %4579 = vmatprep.subr.mxu0 0.0
    %4580 = vmatpush2.msra.mxu0 0.0
    %4581 = vmatprep.subr.mxu0 0.0
    %4582 = vmatpush2.msra.mxu0 0.0
    %4583 = vmatprep.subr.mxu0 0.0
    %4584 = vmatpush2.msra.mxu0 0.0
    %4585 = vmatprep.subr.mxu0 0.0
    %4586 = vmatpush2.msra.mxu0 0.0
    %4587 = vmatprep.subr.mxu0 0.0
    %4588 = vmatpush2.msra.mxu0 0.0
    %4589 = vmatprep.subr.mxu0 0.0
    %4590 = vmatpush2.msra.mxu0 0.0
    %4591 = vmatprep.subr.mxu0 0.0
    %4592 = vmatpush2.msra.mxu0 0.0
    %4593 = vmatprep.subr.mxu0 0.0
    %4594 = vmatpush2.msra.mxu0 0.0
    %4595 = vmatprep.subr.mxu0 0.0
    %4596 = vmatpush2.msra.mxu0 0.0
    %4597 = vmatprep.subr.mxu0 0.0
    %4598 = vmatpush2.msra.mxu0 0.0
    %4599 = vmatprep.subr.mxu0 0.0
    %4600 = vmatpush2.msra.mxu0 0.0
    %4601 = vmatprep.subr.mxu0 0.0
    %4602 = vmatpush2.msra.mxu0 0.0
    %4603 = vmatprep.subr.mxu0 0.0
    %4604 = vmatpush2.msra.mxu0 0.0
    %4605 = vmatprep.mubr.f32.mxu0 0.0
    %4606 = vmatmul.mubr.f32.gmra.mxu0 %v4539
    %v4607 = vpop.f32.mrf.mxu0
    %v4608 = vadd.f32 %v4537, %v4607
    %v4609 = vpop.f32.mrf.mxu0
    %4610 = vdwg.mxu0
    %v4611 = vadd.f32 %v4608, %v4419
    %v4612 = vld [vmem:[#allocation7] sm:$0x1]
    %v4613 = vld [vmem:[#allocation7 + $0x1] sm:$0x1]
    %v4614 = vld [vmem:[#allocation7 + $0x2] sm:$0x1]
    %v4615 = vsel %vm88, %v4611, 0.0
    %4616 = vadd.xlane.f32.xlu0 %v4615
    %v4617 = vpop.xlane.xlu0 %4616
    %v4618 = vmul.f32 %v4617, %v92
    %v4619 = vsub.f32 %v4611, %v4618
    %v4620 = vmul.f32 %v4619, %v4619
    %v4621 = vsel %vm88, %v4620, 0.0
    %4622 = vadd.xlane.f32.xlu0 %v4621
    %v4623 = vpop.xlane.xlu0 %4622
    %v4624 = vmul.f32 %v4623, %v92
    %v4625 = vadd.f32 %v4624, 1e-06
    %v4626 = vrsqrt.pop %v4625
    %v4627 = vmul.f32 %v4619, %v4626
    %v4628 = vlaneseq
    %v4629 = vshrl.u32 %v4628, 7
    %v4630 = vsub.s32 0, %v4629
    %v4631 = vrot.slane %v4612, %v4630
    %v4632 = vmul.f32 %v4627, %v4631
    %v4633 = vlaneseq
    %v4634 = vshrl.u32 %v4633, 7
    %v4635 = vsub.s32 0, %v4634
    %v4636 = vrot.slane %v4613, %v4635
    %v4637 = vadd.f32 %v4632, %v4636
    %v4638 = vld [vmem:[#allocation6] sm:$0xff]
    %v4639 = vld [vmem:[#allocation6 + $0x8] sm:$0xff]
    %v4640 = vld [vmem:[#allocation6 + $0x10] sm:$0xff]
    %v4641 = vld [vmem:[#allocation6 + $0x18] sm:$0xff]
    %v4642 = vlaneseq
    %v4643 = vshrl.u32 %v4642, 7
    %v4644 = vsub.s32 0, %v4643
    %v4645 = vrot.slane %v4614, %v4644
    %v4647 = vsel %vm88, %v4637, 0
    %4649 = vmatprep.subr.mxu0 0.0
    %4650 = vmatpush1.msra.mxu0 0.0
    %4651 = vmatprep.subr.mxu0 0.0
    %4652 = vmatpush1.msra.mxu0 0.0
    %4653 = vmatprep.subr.mxu0 0.0
    %4654 = vmatpush1.msra.mxu0 0.0
    %4655 = vmatprep.subr.mxu0 0.0
    %4656 = vmatpush1.msra.mxu0 0.0
    %4657 = vmatprep.subr.mxu0 0.0
    %4658 = vmatpush1.msra.mxu0 0.0
    %4659 = vmatprep.subr.mxu0 0.0
    %4660 = vmatpush1.msra.mxu0 0.0
    %4661 = vmatprep.subr.mxu0 0.0
    %4662 = vmatpush1.msra.mxu0 0.0
    %4663 = vmatprep.subr.mxu0 0.0
    %4664 = vmatpush1.msra.mxu0 0.0
    %4665 = vmatprep.subr.mxu0 0.0
    %4666 = vmatpush1.msra.mxu0 0.0
    %4667 = vmatprep.subr.mxu0 0.0
    %4668 = vmatpush1.msra.mxu0 0.0
    %4669 = vmatprep.subr.mxu0 0.0
    %4670 = vmatpush1.msra.mxu0 0.0
    %4671 = vmatprep.subr.mxu0 0.0
    %4672 = vmatpush1.msra.mxu0 0.0
    %4673 = vmatprep.subr.mxu0 0.0
    %4674 = vmatpush1.msra.mxu0 %v4641
    %4675 = vmatprep.subr.mxu0 0.0
    %4676 = vmatpush1.msra.mxu0 %v4640
    %4677 = vmatprep.subr.mxu0 0.0
    %4678 = vmatpush1.msra.mxu0 %v4639
    %4679 = vmatprep.subr.mxu0 0.0
    %4680 = vmatpush1.msra.mxu0 %v4638
    %4681 = vmatprep.subr.mxu0 0.0
    %4682 = vmatpush2.msra.mxu0 0.0
    %4683 = vmatprep.subr.mxu0 0.0
    %4684 = vmatpush2.msra.mxu0 0.0
    %4685 = vmatprep.subr.mxu0 0.0
    %4686 = vmatpush2.msra.mxu0 0.0
    %4687 = vmatprep.subr.mxu0 0.0
    %4688 = vmatpush2.msra.mxu0 0.0
    %4689 = vmatprep.subr.mxu0 0.0
    %4690 = vmatpush2.msra.mxu0 0.0
    %4691 = vmatprep.subr.mxu0 0.0
    %4692 = vmatpush2.msra.mxu0 0.0
    %4693 = vmatprep.subr.mxu0 0.0
    %4694 = vmatpush2.msra.mxu0 0.0
    %4695 = vmatprep.subr.mxu0 0.0
    %4696 = vmatpush2.msra.mxu0 0.0
    %4697 = vmatprep.subr.mxu0 0.0
    %4698 = vmatpush2.msra.mxu0 0.0
    %4699 = vmatprep.subr.mxu0 0.0
    %4700 = vmatpush2.msra.mxu0 0.0
    %4701 = vmatprep.subr.mxu0 0.0
    %4702 = vmatpush2.msra.mxu0 0.0
    %4703 = vmatprep.subr.mxu0 0.0
    %4704 = vmatpush2.msra.mxu0 0.0
    %4705 = vmatprep.subr.mxu0 0.0
    %4706 = vmatpush2.msra.mxu0 0.0
    %4707 = vmatprep.subr.mxu0 0.0
    %4708 = vmatpush2.msra.mxu0 0.0
    %4709 = vmatprep.subr.mxu0 0.0
    %4710 = vmatpush2.msra.mxu0 0.0
    %4711 = vmatprep.subr.mxu0 0.0
    %4712 = vmatpush2.msra.mxu0 0.0
    %4713 = vmatprep.mubr.f32.mxu0 0.0
    %4714 = vmatmul.mubr.f32.gmra.mxu0 %v4647
    %v4715 = vpop.f32.mrf.mxu0
    %v4716 = vadd.f32 %v4645, %v4715
    %v4717 = vpop.f32.mrf.mxu0
    %4718 = vdwg.mxu0
    %4720 = vrot.lane.b32.xlu0 %v4716, 32
    %v4721 = vpop.permute.xlu0 %4720
    %v4723 = vsel %vm88, %v4637, %v4721
    %4724 = vst.msk [vmem:[%s6] sm:$0xff] %vm2271, %v4723
    // Predicated region
    $region42: #{transformer_encoder.1} parent=1 // pred_check
      _
    $region43: #{transformer_encoder.1} parent=1 // pred_check_branch
      %4726 = sbr.rel (0) target = $region45
    $region44: #{transformer_encoder.1} parent=1 // pred_region
      _
    $region45: #{transformer_encoder.1} parent=1 // pred_fallthru
      _
    // Predicated region
    $region46: #{transformer_encoder.1} parent=1 // pred_check
      _
    $region47: #{transformer_encoder.1} parent=1 // pred_check_branch
      %4728 = sbr.rel (0) target = $region49
    $region48: #{transformer_encoder.1} parent=1 // pred_region
      _
    $region49: #{transformer_encoder.1} parent=1 // pred_fallthru
      _
    %4729 = vsyncpa [#allocation3], 1
    %4730 = vsyncpa [#allocation5], 1
    %4731 = vsyncpa [#allocation8], 1

</llo_original>
